<compile_context>
chip_gen: v6e
topology: v6e:2x2x1
jax: 0.10.0
libtpu: 0.0.40
codegen_flags: <defaults>
</compile_context>

<pallas_src>
import functools

import jax
import jax.numpy as jnp
import numpy as np
from jax import lax
from jax.experimental import pallas as pl
from jax.experimental.pallas import tpu as pltpu

NUM_CLASSES = 2
NUM_LAYERS = 2


# ----------------------------------------------------------------------------
# Fused Pallas kernel: 2 GRU layers + FC head, time loop inside the kernel.
# ----------------------------------------------------------------------------
def gru2_fc_kernel(gi1_ref,            # (S, B, 3H)  precomputed x@Wx1 + b_i1
                   h0_ref,             # (2, B, H)
                   wh1_ref, bh1_ref,   # (H, 3H), (1, 3H)   layer-1 hidden
                   wx2_ref, bi2_ref,   # (H, 3H), (1, 3H)   layer-2 input
                   wh2_ref, bh2_ref,   # (H, 3H), (1, 3H)   layer-2 hidden
                   wfc_ref, bfc_ref,   # (H, Cpad), (1, Cpad) lane-padded FC
                   logits_ref,         # (S, B, Cpad) out
                   hn_ref):            # (2, B, H)    out
    S = gi1_ref.shape[0]
    H = h0_ref.shape[-1]

    # Constant weights/biases loaded once; resident for the whole recurrence.
    wh1 = wh1_ref[...]
    bh1 = bh1_ref[...]
    wx2 = wx2_ref[...]
    bi2 = bi2_ref[...]
    wh2 = wh2_ref[...]
    bh2 = bh2_ref[...]
    wfc = wfc_ref[...]
    bfc = bfc_ref[...]

    def cell(gi, h, wh, bh):
        # PyTorch GRU cell, gate order (r, z, n); gi already holds the input
        # projection + input bias.  Single fused (B,H)@(H,3H) hidden matmul.
        gh = jnp.dot(h, wh, preferred_element_type=jnp.float32) + bh
        r = jax.nn.sigmoid(gi[:, 0:H] + gh[:, 0:H])
        z = jax.nn.sigmoid(gi[:, H:2 * H] + gh[:, H:2 * H])
        n = jnp.tanh(gi[:, 2 * H:3 * H] + r * gh[:, 2 * H:3 * H])
        return (1.0 - z) * n + z * h

    def step(t, carry):
        h1, h2 = carry
        h1 = cell(gi1_ref[t], h1, wh1, bh1)                       # layer 1
        gi2 = jnp.dot(h1, wx2, preferred_element_type=jnp.float32) + bi2
        h2 = cell(gi2, h2, wh2, bh2)                              # layer 2
        # FC epilogue, lane-padded (dense stores); real classes sliced outside.
        logits_ref[t] = jnp.dot(h2, wfc,
                                preferred_element_type=jnp.float32) + bfc
        return (h1, h2)

    h1, h2 = lax.fori_loop(0, S, step, (h0_ref[0], h0_ref[1]), unroll=True)
    hn_ref[0] = h1
    hn_ref[1] = h2


# ----------------------------------------------------------------------------
# Parameter preparation (done ONCE, outside the forward pass)
# ----------------------------------------------------------------------------
def prepare_params(params):
    """Transpose/concatenate weights into kernel-friendly layout once."""
    H = params["layers"][0]["w_hh"].shape[-1]
    C = params["fc_w"].shape[0]
    cpad = 128 * ((C + 127) // 128)            # lane-dense FC output width

    layers = []
    for lp in params["layers"]:
        layers.append({
            "wx": jnp.asarray(lp["w_ih"].T),                 # (in, 3H), gates r|z|n
            "wh": jnp.asarray(lp["w_hh"].T),                 # (H, 3H)
            "b_i": jnp.asarray(lp["b_ih"]).reshape(1, 3 * H),
            "b_h": jnp.asarray(lp["b_hh"]).reshape(1, 3 * H),
        })

    wfc = jnp.zeros((H, cpad), jnp.float32).at[:, :C].set(params["fc_w"].T)
    bfc = jnp.zeros((1, cpad), jnp.float32).at[:, :C].set(params["fc_b"])
    return {"layers": layers, "wfc": wfc, "bfc": bfc}


def init_params(key, input_size, hidden_size, num_layers, num_classes):
    """PyTorch-style uniform(-1/sqrt(H), 1/sqrt(H)) init, deterministic."""
    params = {"layers": []}
    bound = 1.0 / np.sqrt(hidden_size)
    for l in range(num_layers):
        in_sz = input_size if l == 0 else hidden_size
        key, k1, k2, k3, k4 = jax.random.split(key, 5)
        params["layers"].append({
            "w_ih": jax.random.uniform(k1, (3 * hidden_size, in_sz),
                                       jnp.float32, -bound, bound),
            "w_hh": jax.random.uniform(k2, (3 * hidden_size, hidden_size),
                                       jnp.float32, -bound, bound),
            "b_ih": jax.random.uniform(k3, (3 * hidden_size,),
                                       jnp.float32, -bound, bound),
            "b_hh": jax.random.uniform(k4, (3 * hidden_size,),
                                       jnp.float32, -bound, bound),
        })
    key, k5, k6 = jax.random.split(key, 3)
    fc_bound = 1.0 / np.sqrt(hidden_size)
    params["fc_w"] = jax.random.uniform(k5, (num_classes, hidden_size),
                                        jnp.float32, -fc_bound, fc_bound)
    params["fc_b"] = jax.random.uniform(k6, (num_classes,),
                                        jnp.float32, -fc_bound, fc_bound)
    return params


# ----------------------------------------------------------------------------
# Forward pass
# ----------------------------------------------------------------------------
@functools.partial(jax.jit, static_argnames=("num_classes",))
def gru_model_forward(x, prep, num_classes, h0=None):
    """Forward of GRUModel: returns (out, hn).

    x: (seq, batch, input_size); out: (seq, batch, num_classes);
    hn: (num_layers, batch, hidden).
    """
    S, B, I = x.shape
    assert len(prep["layers"]) == NUM_LAYERS == 2
    l0, l1 = prep["layers"]
    H = l0["wh"].shape[0]
    cpad = prep["wfc"].shape[-1]

    if h0 is None:
        h0 = jnp.zeros((NUM_LAYERS, B, H), jnp.float32)

    # Hoisted layer-1 input projection: one (S*B, I) @ (I, 3H) matmul outside
    # the serial recurrence (plain XLA inside the same jit).
    gi1 = (x.reshape(S * B, I) @ l0["wx"] + l0["b_i"]).reshape(S, B, 3 * H)

    full2 = lambda shape: pl.BlockSpec(shape, lambda i: (0, 0))
    full3 = lambda shape: pl.BlockSpec(shape, lambda i: (0, 0, 0))

    logits_pad, hn = pl.pallas_call(
        gru2_fc_kernel,
        out_shape=(jax.ShapeDtypeStruct((S, B, cpad), jnp.float32),
                   jax.ShapeDtypeStruct((NUM_LAYERS, B, H), jnp.float32)),
        grid_spec=pltpu.PrefetchScalarGridSpec(
            num_scalar_prefetch=0,
            grid=(1,),
            in_specs=[
                full3((S, B, 3 * H)),            # gi1
                full3((NUM_LAYERS, B, H)),       # h0
                full2((H, 3 * H)), full2((1, 3 * H)),   # wh1, bh1
                full2((H, 3 * H)), full2((1, 3 * H)),   # wx2, bi2
                full2((H, 3 * H)), full2((1, 3 * H)),   # wh2, bh2
                full2((H, cpad)), full2((1, cpad)),     # wfc, bfc (lane-padded)
            ],
            out_specs=[
                full3((S, B, cpad)),
                full3((NUM_LAYERS, B, H)),
            ],
        ),
        compiler_params=pltpu.CompilerParams(
            dimension_semantics=("arbitrary",)),
    )(gi1, h0,
      l0["wh"], l0["b_h"],
      l1["wx"], l1["b_i"],
      l1["wh"], l1["b_h"],
      prep["wfc"], prep["bfc"])

    return logits_pad[..., :num_classes], hn


# ----------------------------------------------------------------------------
# Pure-JAX reference (for a sanity check)
# ----------------------------------------------------------------------------
def gru_model_reference(x, params, h0=None):
    S, B, _ = x.shape
    H = params["layers"][0]["w_hh"].shape[-1]
    if h0 is None:
        h0 = jnp.zeros((len(params["layers"]), B, H), jnp.float32)

    layer_in = x
    hn = []
    for l, lp in enumerate(params["layers"]):
        w_ih, w_hh, b_ih, b_hh = lp["w_ih"], lp["w_hh"], lp["b_ih"], lp["b_hh"]
        h = h0[l]
        outs = []
        for t in range(S):
            xt = layer_in[t]
            gi = xt @ w_ih.T + b_ih
            gh = h @ w_hh.T + b_hh
            r = jax.nn.sigmoid(gi[:, 0:H] + gh[:, 0:H])
            z = jax.nn.sigmoid(gi[:, H:2 * H] + gh[:, H:2 * H])
            n = jnp.tanh(gi[:, 2 * H:] + r * gh[:, 2 * H:])
            h = (1 - z) * n + z * h
            outs.append(h)
        layer_in = jnp.stack(outs)
        hn.append(h)
    logits = layer_in @ params["fc_w"].T + params["fc_b"]
    return logits, jnp.stack(hn)


if __name__ == "__main__":
    input_size = 16
    hidden_size = 32
    seq_len = 8
    batch = 2

    key = jax.random.PRNGKey(0)
    key, kx = jax.random.split(key)
    x = jax.random.normal(kx, (seq_len, batch, input_size), jnp.float32)

    params = init_params(key, input_size, hidden_size, NUM_LAYERS, NUM_CLASSES)
    prep = prepare_params(params)

    out, hn = gru_model_forward(x, prep, num_classes=NUM_CLASSES)
    out, hn = jax.block_until_ready((out, hn))

    ref_out, ref_hn = gru_model_reference(x, params)
    np.testing.assert_allclose(np.asarray(out), np.asarray(ref_out),
                               rtol=1e-5, atol=1e-5)
    np.testing.assert_allclose(np.asarray(hn), np.asarray(ref_hn),
                               rtol=1e-5, atol=1e-5)

    assert out.shape == (seq_len, batch, NUM_CLASSES)
    assert hn.shape == (NUM_LAYERS, batch, hidden_size)
    print("KERNEL_OK")
</pallas_src>

<mosaic_0001>
module attributes {stable_mosaic.version = 11 : i64} {
  func.func @gru2_fc_kernel(%arg0: i32, %arg1: memref<8x2x96xf32, #tpu.memory_space<vmem>>, %arg2: memref<2x2x32xf32, #tpu.memory_space<vmem>>, %arg3: memref<32x96xf32, #tpu.memory_space<vmem>>, %arg4: memref<1x96xf32, #tpu.memory_space<vmem>>, %arg5: memref<32x96xf32, #tpu.memory_space<vmem>>, %arg6: memref<1x96xf32, #tpu.memory_space<vmem>>, %arg7: memref<32x96xf32, #tpu.memory_space<vmem>>, %arg8: memref<1x96xf32, #tpu.memory_space<vmem>>, %arg9: memref<32x128xf32, #tpu.memory_space<vmem>>, %arg10: memref<1x128xf32, #tpu.memory_space<vmem>>, %arg11: memref<8x2x128xf32, #tpu.memory_space<vmem>>, %arg12: memref<2x2x32xf32, #tpu.memory_space<vmem>>) attributes {dimension_semantics = [#tpu.dimension_semantics<arbitrary>], iteration_bounds = array<i64: 1>, scalar_prefetch = 0 : i64, scratch_operands = 0 : i64, tpu.core_type = #tpu.core_type<tc>, window_params = [{pipeline_mode = #tpu.pipeline_mode<synchronous>, transform_indices = @transform_0, window_bounds = array<i64: 8, 2, 96>}, {pipeline_mode = #tpu.pipeline_mode<synchronous>, transform_indices = @transform_1, window_bounds = array<i64: 2, 2, 32>}, {pipeline_mode = #tpu.pipeline_mode<synchronous>, transform_indices = @transform_2, window_bounds = array<i64: 32, 96>}, {pipeline_mode = #tpu.pipeline_mode<synchronous>, transform_indices = @transform_3, window_bounds = array<i64: 1, 96>}, {pipeline_mode = #tpu.pipeline_mode<synchronous>, transform_indices = @transform_4, window_bounds = array<i64: 32, 96>}, {pipeline_mode = #tpu.pipeline_mode<synchronous>, transform_indices = @transform_5, window_bounds = array<i64: 1, 96>}, {pipeline_mode = #tpu.pipeline_mode<synchronous>, transform_indices = @transform_6, window_bounds = array<i64: 32, 96>}, {pipeline_mode = #tpu.pipeline_mode<synchronous>, transform_indices = @transform_7, window_bounds = array<i64: 1, 96>}, {pipeline_mode = #tpu.pipeline_mode<synchronous>, transform_indices = @transform_8, window_bounds = array<i64: 32, 128>}, {pipeline_mode = #tpu.pipeline_mode<synchronous>, transform_indices = @transform_9, window_bounds = array<i64: 1, 128>}, {pipeline_mode = #tpu.pipeline_mode<synchronous>, transform_indices = @transform_10, window_bounds = array<i64: 8, 2, 128>}, {pipeline_mode = #tpu.pipeline_mode<synchronous>, transform_indices = @transform_11, window_bounds = array<i64: 2, 2, 32>}]} {
    %c0 = arith.constant 0 : index
    %c0_0 = arith.constant 0 : index
    %0 = vector.load %arg3[%c0, %c0_0] : memref<32x96xf32, #tpu.memory_space<vmem>>, vector<32x96xf32>
    %c0_1 = arith.constant 0 : index
    %c0_2 = arith.constant 0 : index
    %1 = vector.load %arg4[%c0_1, %c0_2] : memref<1x96xf32, #tpu.memory_space<vmem>>, vector<1x96xf32>
    %c0_3 = arith.constant 0 : index
    %c0_4 = arith.constant 0 : index
    %2 = vector.load %arg5[%c0_3, %c0_4] : memref<32x96xf32, #tpu.memory_space<vmem>>, vector<32x96xf32>
    %c0_5 = arith.constant 0 : index
    %c0_6 = arith.constant 0 : index
    %3 = vector.load %arg6[%c0_5, %c0_6] : memref<1x96xf32, #tpu.memory_space<vmem>>, vector<1x96xf32>
    %c0_7 = arith.constant 0 : index
    %c0_8 = arith.constant 0 : index
    %4 = vector.load %arg7[%c0_7, %c0_8] : memref<32x96xf32, #tpu.memory_space<vmem>>, vector<32x96xf32>
    %c0_9 = arith.constant 0 : index
    %c0_10 = arith.constant 0 : index
    %5 = vector.load %arg8[%c0_9, %c0_10] : memref<1x96xf32, #tpu.memory_space<vmem>>, vector<1x96xf32>
    %c0_11 = arith.constant 0 : index
    %c0_12 = arith.constant 0 : index
    %6 = vector.load %arg9[%c0_11, %c0_12] : memref<32x128xf32, #tpu.memory_space<vmem>>, vector<32x128xf32>
    %c0_13 = arith.constant 0 : index
    %c0_14 = arith.constant 0 : index
    %7 = vector.load %arg10[%c0_13, %c0_14] : memref<1x128xf32, #tpu.memory_space<vmem>>, vector<1x128xf32>
    %c0_15 = arith.constant 0 : index
    %c0_16 = arith.constant 0 : index
    %c0_17 = arith.constant 0 : index
    %8 = vector.load %arg2[%c0_15, %c0_16, %c0_17] : memref<2x2x32xf32, #tpu.memory_space<vmem>>, vector<1x2x32xf32>
    %9 = vector.shape_cast %8 : vector<1x2x32xf32> to vector<2x32xf32>
    %c1 = arith.constant 1 : index
    %c0_18 = arith.constant 0 : index
    %c0_19 = arith.constant 0 : index
    %10 = vector.load %arg2[%c1, %c0_18, %c0_19] : memref<2x2x32xf32, #tpu.memory_space<vmem>>, vector<1x2x32xf32>
    %11 = vector.shape_cast %10 : vector<1x2x32xf32> to vector<2x32xf32>
    %c0_i32 = arith.constant 0 : i32
    %12 = arith.index_cast %c0_i32 : i32 to index
    %c0_20 = arith.constant 0 : index
    %c0_21 = arith.constant 0 : index
    %13 = vector.load %arg1[%12, %c0_20, %c0_21] : memref<8x2x96xf32, #tpu.memory_space<vmem>>, vector<1x2x96xf32>
    %14 = vector.shape_cast %13 : vector<1x2x96xf32> to vector<2x96xf32>
    %cst = arith.constant dense<0.000000e+00> : vector<2x96xf32>
    %15 = tpu.matmul %9, %0, %cst {dimension_numbers = #tpu.dot_dimension_numbers<[1], [0], [0], [1], [0, 0, 1, 1], [], []>} : vector<2x32xf32>, vector<32x96xf32>, vector<2x96xf32> -> vector<2x96xf32>
    %16 = vector.broadcast %1 : vector<1x96xf32> to vector<2x96xf32>
    %17 = arith.addf %15, %16 : vector<2x96xf32>
    %18 = vector.extract_strided_slice %14 {offsets = [0, 0], sizes = [2, 32], strides = [1, 1]} : vector<2x96xf32> to vector<2x32xf32>
    %19 = vector.extract_strided_slice %17 {offsets = [0, 0], sizes = [2, 32], strides = [1, 1]} : vector<2x96xf32> to vector<2x32xf32>
    %20 = arith.addf %18, %19 : vector<2x32xf32>
    %21 = arith.negf %20 : vector<2x32xf32>
    %22 = math.exp %21 : vector<2x32xf32>
    %cst_22 = arith.constant 1.000000e+00 : f32
    %23 = vector.broadcast %cst_22 : f32 to vector<2x32xf32>
    %24 = arith.addf %23, %22 : vector<2x32xf32>
    %25 = arith.divf %23, %24 : vector<2x32xf32>
    %26 = vector.extract_strided_slice %14 {offsets = [0, 32], sizes = [2, 32], strides = [1, 1]} : vector<2x96xf32> to vector<2x32xf32>
    %27 = vector.extract_strided_slice %17 {offsets = [0, 32], sizes = [2, 32], strides = [1, 1]} : vector<2x96xf32> to vector<2x32xf32>
    %28 = arith.addf %26, %27 : vector<2x32xf32>
    %29 = arith.negf %28 : vector<2x32xf32>
    %30 = math.exp %29 : vector<2x32xf32>
    %cst_23 = arith.constant 1.000000e+00 : f32
    %31 = vector.broadcast %cst_23 : f32 to vector<2x32xf32>
    %32 = arith.addf %31, %30 : vector<2x32xf32>
    %33 = arith.divf %31, %32 : vector<2x32xf32>
    %34 = vector.extract_strided_slice %14 {offsets = [0, 64], sizes = [2, 32], strides = [1, 1]} : vector<2x96xf32> to vector<2x32xf32>
    %35 = vector.extract_strided_slice %17 {offsets = [0, 64], sizes = [2, 32], strides = [1, 1]} : vector<2x96xf32> to vector<2x32xf32>
    %36 = arith.mulf %25, %35 : vector<2x32xf32>
    %37 = arith.addf %34, %36 : vector<2x32xf32>
    %38 = math.tanh %37 : vector<2x32xf32>
    %cst_24 = arith.constant 1.000000e+00 : f32
    %39 = vector.broadcast %cst_24 : f32 to vector<2x32xf32>
    %40 = arith.subf %39, %33 : vector<2x32xf32>
    %41 = arith.mulf %40, %38 : vector<2x32xf32>
    %42 = arith.mulf %33, %9 : vector<2x32xf32>
    %43 = arith.addf %41, %42 : vector<2x32xf32>
    %cst_25 = arith.constant dense<0.000000e+00> : vector<2x96xf32>
    %44 = tpu.matmul %43, %2, %cst_25 {dimension_numbers = #tpu.dot_dimension_numbers<[1], [0], [0], [1], [0, 0, 1, 1], [], []>} : vector<2x32xf32>, vector<32x96xf32>, vector<2x96xf32> -> vector<2x96xf32>
    %45 = vector.broadcast %3 : vector<1x96xf32> to vector<2x96xf32>
    %46 = arith.addf %44, %45 : vector<2x96xf32>
    %cst_26 = arith.constant dense<0.000000e+00> : vector<2x96xf32>
    %47 = tpu.matmul %11, %4, %cst_26 {dimension_numbers = #tpu.dot_dimension_numbers<[1], [0], [0], [1], [0, 0, 1, 1], [], []>} : vector<2x32xf32>, vector<32x96xf32>, vector<2x96xf32> -> vector<2x96xf32>
    %48 = vector.broadcast %5 : vector<1x96xf32> to vector<2x96xf32>
    %49 = arith.addf %47, %48 : vector<2x96xf32>
    %50 = vector.extract_strided_slice %46 {offsets = [0, 0], sizes = [2, 32], strides = [1, 1]} : vector<2x96xf32> to vector<2x32xf32>
    %51 = vector.extract_strided_slice %49 {offsets = [0, 0], sizes = [2, 32], strides = [1, 1]} : vector<2x96xf32> to vector<2x32xf32>
    %52 = arith.addf %50, %51 : vector<2x32xf32>
    %53 = arith.negf %52 : vector<2x32xf32>
    %54 = math.exp %53 : vector<2x32xf32>
    %cst_27 = arith.constant 1.000000e+00 : f32
    %55 = vector.broadcast %cst_27 : f32 to vector<2x32xf32>
    %56 = arith.addf %55, %54 : vector<2x32xf32>
    %57 = arith.divf %55, %56 : vector<2x32xf32>
    %58 = vector.extract_strided_slice %46 {offsets = [0, 32], sizes = [2, 32], strides = [1, 1]} : vector<2x96xf32> to vector<2x32xf32>
    %59 = vector.extract_strided_slice %49 {offsets = [0, 32], sizes = [2, 32], strides = [1, 1]} : vector<2x96xf32> to vector<2x32xf32>
    %60 = arith.addf %58, %59 : vector<2x32xf32>
    %61 = arith.negf %60 : vector<2x32xf32>
    %62 = math.exp %61 : vector<2x32xf32>
    %cst_28 = arith.constant 1.000000e+00 : f32
    %63 = vector.broadcast %cst_28 : f32 to vector<2x32xf32>
    %64 = arith.addf %63, %62 : vector<2x32xf32>
    %65 = arith.divf %63, %64 : vector<2x32xf32>
    %66 = vector.extract_strided_slice %46 {offsets = [0, 64], sizes = [2, 32], strides = [1, 1]} : vector<2x96xf32> to vector<2x32xf32>
    %67 = vector.extract_strided_slice %49 {offsets = [0, 64], sizes = [2, 32], strides = [1, 1]} : vector<2x96xf32> to vector<2x32xf32>
    %68 = arith.mulf %57, %67 : vector<2x32xf32>
    %69 = arith.addf %66, %68 : vector<2x32xf32>
    %70 = math.tanh %69 : vector<2x32xf32>
    %cst_29 = arith.constant 1.000000e+00 : f32
    %71 = vector.broadcast %cst_29 : f32 to vector<2x32xf32>
    %72 = arith.subf %71, %65 : vector<2x32xf32>
    %73 = arith.mulf %72, %70 : vector<2x32xf32>
    %74 = arith.mulf %65, %11 : vector<2x32xf32>
    %75 = arith.addf %73, %74 : vector<2x32xf32>
    %cst_30 = arith.constant dense<0.000000e+00> : vector<2x128xf32>
    %76 = tpu.matmul %75, %6, %cst_30 {dimension_numbers = #tpu.dot_dimension_numbers<[1], [0], [0], [1], [0, 0, 1, 1], [], []>} : vector<2x32xf32>, vector<32x128xf32>, vector<2x128xf32> -> vector<2x128xf32>
    %77 = vector.broadcast %7 : vector<1x128xf32> to vector<2x128xf32>
    %78 = arith.addf %76, %77 : vector<2x128xf32>
    %79 = arith.index_cast %c0_i32 : i32 to index
    %c0_31 = arith.constant 0 : index
    %c0_32 = arith.constant 0 : index
    %80 = vector.load %arg11[%79, %c0_31, %c0_32] : memref<8x2x128xf32, #tpu.memory_space<vmem>>, vector<1x2x128xf32>
    %81 = vector.shape_cast %80 : vector<1x2x128xf32> to vector<2x128xf32>
    %82 = vector.shape_cast %78 : vector<2x128xf32> to vector<1x2x128xf32>
    tpu.vector_store %arg11[%79, %c0_31, %c0_32], %82 {strides = array<i32>} : memref<8x2x128xf32, #tpu.memory_space<vmem>>, vector<1x2x128xf32>,
    %c1_i32 = arith.constant 1 : i32
    %83 = arith.index_cast %c1_i32 : i32 to index
    %c0_33 = arith.constant 0 : index
    %c0_34 = arith.constant 0 : index
    %84 = vector.load %arg1[%83, %c0_33, %c0_34] : memref<8x2x96xf32, #tpu.memory_space<vmem>>, vector<1x2x96xf32>
    %85 = vector.shape_cast %84 : vector<1x2x96xf32> to vector<2x96xf32>
    %cst_35 = arith.constant dense<0.000000e+00> : vector<2x96xf32>
    %86 = tpu.matmul %43, %0, %cst_35 {dimension_numbers = #tpu.dot_dimension_numbers<[1], [0], [0], [1], [0, 0, 1, 1], [], []>} : vector<2x32xf32>, vector<32x96xf32>, vector<2x96xf32> -> vector<2x96xf32>
    %87 = vector.broadcast %1 : vector<1x96xf32> to vector<2x96xf32>
    %88 = arith.addf %86, %87 : vector<2x96xf32>
    %89 = vector.extract_strided_slice %85 {offsets = [0, 0], sizes = [2, 32], strides = [1, 1]} : vector<2x96xf32> to vector<2x32xf32>
    %90 = vector.extract_strided_slice %88 {offsets = [0, 0], sizes = [2, 32], strides = [1, 1]} : vector<2x96xf32> to vector<2x32xf32>
    %91 = arith.addf %89, %90 : vector<2x32xf32>
    %92 = arith.negf %91 : vector<2x32xf32>
    %93 = math.exp %92 : vector<2x32xf32>
    %cst_36 = arith.constant 1.000000e+00 : f32
    %94 = vector.broadcast %cst_36 : f32 to vector<2x32xf32>
    %95 = arith.addf %94, %93 : vector<2x32xf32>
    %96 = arith.divf %94, %95 : vector<2x32xf32>
    %97 = vector.extract_strided_slice %85 {offsets = [0, 32], sizes = [2, 32], strides = [1, 1]} : vector<2x96xf32> to vector<2x32xf32>
    %98 = vector.extract_strided_slice %88 {offsets = [0, 32], sizes = [2, 32], strides = [1, 1]} : vector<2x96xf32> to vector<2x32xf32>
    %99 = arith.addf %97, %98 : vector<2x32xf32>
    %100 = arith.negf %99 : vector<2x32xf32>
    %101 = math.exp %100 : vector<2x32xf32>
    %cst_37 = arith.constant 1.000000e+00 : f32
    %102 = vector.broadcast %cst_37 : f32 to vector<2x32xf32>
    %103 = arith.addf %102, %101 : vector<2x32xf32>
    %104 = arith.divf %102, %103 : vector<2x32xf32>
    %105 = vector.extract_strided_slice %85 {offsets = [0, 64], sizes = [2, 32], strides = [1, 1]} : vector<2x96xf32> to vector<2x32xf32>
    %106 = vector.extract_strided_slice %88 {offsets = [0, 64], sizes = [2, 32], strides = [1, 1]} : vector<2x96xf32> to vector<2x32xf32>
    %107 = arith.mulf %96, %106 : vector<2x32xf32>
    %108 = arith.addf %105, %107 : vector<2x32xf32>
    %109 = math.tanh %108 : vector<2x32xf32>
    %cst_38 = arith.constant 1.000000e+00 : f32
    %110 = vector.broadcast %cst_38 : f32 to vector<2x32xf32>
    %111 = arith.subf %110, %104 : vector<2x32xf32>
    %112 = arith.mulf %111, %109 : vector<2x32xf32>
    %113 = arith.mulf %104, %43 : vector<2x32xf32>
    %114 = arith.addf %112, %113 : vector<2x32xf32>
    %cst_39 = arith.constant dense<0.000000e+00> : vector<2x96xf32>
    %115 = tpu.matmul %114, %2, %cst_39 {dimension_numbers = #tpu.dot_dimension_numbers<[1], [0], [0], [1], [0, 0, 1, 1], [], []>} : vector<2x32xf32>, vector<32x96xf32>, vector<2x96xf32> -> vector<2x96xf32>
    %116 = vector.broadcast %3 : vector<1x96xf32> to vector<2x96xf32>
    %117 = arith.addf %115, %116 : vector<2x96xf32>
    %cst_40 = arith.constant dense<0.000000e+00> : vector<2x96xf32>
    %118 = tpu.matmul %75, %4, %cst_40 {dimension_numbers = #tpu.dot_dimension_numbers<[1], [0], [0], [1], [0, 0, 1, 1], [], []>} : vector<2x32xf32>, vector<32x96xf32>, vector<2x96xf32> -> vector<2x96xf32>
    %119 = vector.broadcast %5 : vector<1x96xf32> to vector<2x96xf32>
    %120 = arith.addf %118, %119 : vector<2x96xf32>
    %121 = vector.extract_strided_slice %117 {offsets = [0, 0], sizes = [2, 32], strides = [1, 1]} : vector<2x96xf32> to vector<2x32xf32>
    %122 = vector.extract_strided_slice %120 {offsets = [0, 0], sizes = [2, 32], strides = [1, 1]} : vector<2x96xf32> to vector<2x32xf32>
    %123 = arith.addf %121, %122 : vector<2x32xf32>
    %124 = arith.negf %123 : vector<2x32xf32>
    %125 = math.exp %124 : vector<2x32xf32>
    %cst_41 = arith.constant 1.000000e+00 : f32
    %126 = vector.broadcast %cst_41 : f32 to vector<2x32xf32>
    %127 = arith.addf %126, %125 : vector<2x32xf32>
    %128 = arith.divf %126, %127 : vector<2x32xf32>
    %129 = vector.extract_strided_slice %117 {offsets = [0, 32], sizes = [2, 32], strides = [1, 1]} : vector<2x96xf32> to vector<2x32xf32>
    %130 = vector.extract_strided_slice %120 {offsets = [0, 32], sizes = [2, 32], strides = [1, 1]} : vector<2x96xf32> to vector<2x32xf32>
    %131 = arith.addf %129, %130 : vector<2x32xf32>
    %132 = arith.negf %131 : vector<2x32xf32>
    %133 = math.exp %132 : vector<2x32xf32>
    %cst_42 = arith.constant 1.000000e+00 : f32
    %134 = vector.broadcast %cst_42 : f32 to vector<2x32xf32>
    %135 = arith.addf %134, %133 : vector<2x32xf32>
    %136 = arith.divf %134, %135 : vector<2x32xf32>
    %137 = vector.extract_strided_slice %117 {offsets = [0, 64], sizes = [2, 32], strides = [1, 1]} : vector<2x96xf32> to vector<2x32xf32>
    %138 = vector.extract_strided_slice %120 {offsets = [0, 64], sizes = [2, 32], strides = [1, 1]} : vector<2x96xf32> to vector<2x32xf32>
    %139 = arith.mulf %128, %138 : vector<2x32xf32>
    %140 = arith.addf %137, %139 : vector<2x32xf32>
    %141 = math.tanh %140 : vector<2x32xf32>
    %cst_43 = arith.constant 1.000000e+00 : f32
    %142 = vector.broadcast %cst_43 : f32 to vector<2x32xf32>
    %143 = arith.subf %142, %136 : vector<2x32xf32>
    %144 = arith.mulf %143, %141 : vector<2x32xf32>
    %145 = arith.mulf %136, %75 : vector<2x32xf32>
    %146 = arith.addf %144, %145 : vector<2x32xf32>
    %cst_44 = arith.constant dense<0.000000e+00> : vector<2x128xf32>
    %147 = tpu.matmul %146, %6, %cst_44 {dimension_numbers = #tpu.dot_dimension_numbers<[1], [0], [0], [1], [0, 0, 1, 1], [], []>} : vector<2x32xf32>, vector<32x128xf32>, vector<2x128xf32> -> vector<2x128xf32>
    %148 = vector.broadcast %7 : vector<1x128xf32> to vector<2x128xf32>
    %149 = arith.addf %147, %148 : vector<2x128xf32>
    %150 = arith.index_cast %c1_i32 : i32 to index
    %c0_45 = arith.constant 0 : index
    %c0_46 = arith.constant 0 : index
    %151 = vector.load %arg11[%150, %c0_45, %c0_46] : memref<8x2x128xf32, #tpu.memory_space<vmem>>, vector<1x2x128xf32>
    %152 = vector.shape_cast %151 : vector<1x2x128xf32> to vector<2x128xf32>
    %153 = vector.shape_cast %149 : vector<2x128xf32> to vector<1x2x128xf32>
    tpu.vector_store %arg11[%150, %c0_45, %c0_46], %153 {strides = array<i32>} : memref<8x2x128xf32, #tpu.memory_space<vmem>>, vector<1x2x128xf32>,
    %c2_i32 = arith.constant 2 : i32
    %154 = arith.index_cast %c2_i32 : i32 to index
    %c0_47 = arith.constant 0 : index
    %c0_48 = arith.constant 0 : index
    %155 = vector.load %arg1[%154, %c0_47, %c0_48] : memref<8x2x96xf32, #tpu.memory_space<vmem>>, vector<1x2x96xf32>
    %156 = vector.shape_cast %155 : vector<1x2x96xf32> to vector<2x96xf32>
    %cst_49 = arith.constant dense<0.000000e+00> : vector<2x96xf32>
    %157 = tpu.matmul %114, %0, %cst_49 {dimension_numbers = #tpu.dot_dimension_numbers<[1], [0], [0], [1], [0, 0, 1, 1], [], []>} : vector<2x32xf32>, vector<32x96xf32>, vector<2x96xf32> -> vector<2x96xf32>
    %158 = vector.broadcast %1 : vector<1x96xf32> to vector<2x96xf32>
    %159 = arith.addf %157, %158 : vector<2x96xf32>
    %160 = vector.extract_strided_slice %156 {offsets = [0, 0], sizes = [2, 32], strides = [1, 1]} : vector<2x96xf32> to vector<2x32xf32>
    %161 = vector.extract_strided_slice %159 {offsets = [0, 0], sizes = [2, 32], strides = [1, 1]} : vector<2x96xf32> to vector<2x32xf32>
    %162 = arith.addf %160, %161 : vector<2x32xf32>
    %163 = arith.negf %162 : vector<2x32xf32>
    %164 = math.exp %163 : vector<2x32xf32>
    %cst_50 = arith.constant 1.000000e+00 : f32
    %165 = vector.broadcast %cst_50 : f32 to vector<2x32xf32>
    %166 = arith.addf %165, %164 : vector<2x32xf32>
    %167 = arith.divf %165, %166 : vector<2x32xf32>
    %168 = vector.extract_strided_slice %156 {offsets = [0, 32], sizes = [2, 32], strides = [1, 1]} : vector<2x96xf32> to vector<2x32xf32>
    %169 = vector.extract_strided_slice %159 {offsets = [0, 32], sizes = [2, 32], strides = [1, 1]} : vector<2x96xf32> to vector<2x32xf32>
    %170 = arith.addf %168, %169 : vector<2x32xf32>
    %171 = arith.negf %170 : vector<2x32xf32>
    %172 = math.exp %171 : vector<2x32xf32>
    %cst_51 = arith.constant 1.000000e+00 : f32
    %173 = vector.broadcast %cst_51 : f32 to vector<2x32xf32>
    %174 = arith.addf %173, %172 : vector<2x32xf32>
    %175 = arith.divf %173, %174 : vector<2x32xf32>
    %176 = vector.extract_strided_slice %156 {offsets = [0, 64], sizes = [2, 32], strides = [1, 1]} : vector<2x96xf32> to vector<2x32xf32>
    %177 = vector.extract_strided_slice %159 {offsets = [0, 64], sizes = [2, 32], strides = [1, 1]} : vector<2x96xf32> to vector<2x32xf32>
    %178 = arith.mulf %167, %177 : vector<2x32xf32>
    %179 = arith.addf %176, %178 : vector<2x32xf32>
    %180 = math.tanh %179 : vector<2x32xf32>
    %cst_52 = arith.constant 1.000000e+00 : f32
    %181 = vector.broadcast %cst_52 : f32 to vector<2x32xf32>
    %182 = arith.subf %181, %175 : vector<2x32xf32>
    %183 = arith.mulf %182, %180 : vector<2x32xf32>
    %184 = arith.mulf %175, %114 : vector<2x32xf32>
    %185 = arith.addf %183, %184 : vector<2x32xf32>
    %cst_53 = arith.constant dense<0.000000e+00> : vector<2x96xf32>
    %186 = tpu.matmul %185, %2, %cst_53 {dimension_numbers = #tpu.dot_dimension_numbers<[1], [0], [0], [1], [0, 0, 1, 1], [], []>} : vector<2x32xf32>, vector<32x96xf32>, vector<2x96xf32> -> vector<2x96xf32>
    %187 = vector.broadcast %3 : vector<1x96xf32> to vector<2x96xf32>
    %188 = arith.addf %186, %187 : vector<2x96xf32>
    %cst_54 = arith.constant dense<0.000000e+00> : vector<2x96xf32>
    %189 = tpu.matmul %146, %4, %cst_54 {dimension_numbers = #tpu.dot_dimension_numbers<[1], [0], [0], [1], [0, 0, 1, 1], [], []>} : vector<2x32xf32>, vector<32x96xf32>, vector<2x96xf32> -> vector<2x96xf32>
    %190 = vector.broadcast %5 : vector<1x96xf32> to vector<2x96xf32>
    %191 = arith.addf %189, %190 : vector<2x96xf32>
    %192 = vector.extract_strided_slice %188 {offsets = [0, 0], sizes = [2, 32], strides = [1, 1]} : vector<2x96xf32> to vector<2x32xf32>
    %193 = vector.extract_strided_slice %191 {offsets = [0, 0], sizes = [2, 32], strides = [1, 1]} : vector<2x96xf32> to vector<2x32xf32>
    %194 = arith.addf %192, %193 : vector<2x32xf32>
    %195 = arith.negf %194 : vector<2x32xf32>
    %196 = math.exp %195 : vector<2x32xf32>
    %cst_55 = arith.constant 1.000000e+00 : f32
    %197 = vector.broadcast %cst_55 : f32 to vector<2x32xf32>
    %198 = arith.addf %197, %196 : vector<2x32xf32>
    %199 = arith.divf %197, %198 : vector<2x32xf32>
    %200 = vector.extract_strided_slice %188 {offsets = [0, 32], sizes = [2, 32], strides = [1, 1]} : vector<2x96xf32> to vector<2x32xf32>
    %201 = vector.extract_strided_slice %191 {offsets = [0, 32], sizes = [2, 32], strides = [1, 1]} : vector<2x96xf32> to vector<2x32xf32>
    %202 = arith.addf %200, %201 : vector<2x32xf32>
    %203 = arith.negf %202 : vector<2x32xf32>
    %204 = math.exp %203 : vector<2x32xf32>
    %cst_56 = arith.constant 1.000000e+00 : f32
    %205 = vector.broadcast %cst_56 : f32 to vector<2x32xf32>
    %206 = arith.addf %205, %204 : vector<2x32xf32>
    %207 = arith.divf %205, %206 : vector<2x32xf32>
    %208 = vector.extract_strided_slice %188 {offsets = [0, 64], sizes = [2, 32], strides = [1, 1]} : vector<2x96xf32> to vector<2x32xf32>
    %209 = vector.extract_strided_slice %191 {offsets = [0, 64], sizes = [2, 32], strides = [1, 1]} : vector<2x96xf32> to vector<2x32xf32>
    %210 = arith.mulf %199, %209 : vector<2x32xf32>
    %211 = arith.addf %208, %210 : vector<2x32xf32>
    %212 = math.tanh %211 : vector<2x32xf32>
    %cst_57 = arith.constant 1.000000e+00 : f32
    %213 = vector.broadcast %cst_57 : f32 to vector<2x32xf32>
    %214 = arith.subf %213, %207 : vector<2x32xf32>
    %215 = arith.mulf %214, %212 : vector<2x32xf32>
    %216 = arith.mulf %207, %146 : vector<2x32xf32>
    %217 = arith.addf %215, %216 : vector<2x32xf32>
    %cst_58 = arith.constant dense<0.000000e+00> : vector<2x128xf32>
    %218 = tpu.matmul %217, %6, %cst_58 {dimension_numbers = #tpu.dot_dimension_numbers<[1], [0], [0], [1], [0, 0, 1, 1], [], []>} : vector<2x32xf32>, vector<32x128xf32>, vector<2x128xf32> -> vector<2x128xf32>
    %219 = vector.broadcast %7 : vector<1x128xf32> to vector<2x128xf32>
    %220 = arith.addf %218, %219 : vector<2x128xf32>
    %221 = arith.index_cast %c2_i32 : i32 to index
    %c0_59 = arith.constant 0 : index
    %c0_60 = arith.constant 0 : index
    %222 = vector.load %arg11[%221, %c0_59, %c0_60] : memref<8x2x128xf32, #tpu.memory_space<vmem>>, vector<1x2x128xf32>
    %223 = vector.shape_cast %222 : vector<1x2x128xf32> to vector<2x128xf32>
    %224 = vector.shape_cast %220 : vector<2x128xf32> to vector<1x2x128xf32>
    tpu.vector_store %arg11[%221, %c0_59, %c0_60], %224 {strides = array<i32>} : memref<8x2x128xf32, #tpu.memory_space<vmem>>, vector<1x2x128xf32>,
    %c3_i32 = arith.constant 3 : i32
    %225 = arith.index_cast %c3_i32 : i32 to index
    %c0_61 = arith.constant 0 : index
    %c0_62 = arith.constant 0 : index
    %226 = vector.load %arg1[%225, %c0_61, %c0_62] : memref<8x2x96xf32, #tpu.memory_space<vmem>>, vector<1x2x96xf32>
    %227 = vector.shape_cast %226 : vector<1x2x96xf32> to vector<2x96xf32>
    %cst_63 = arith.constant dense<0.000000e+00> : vector<2x96xf32>
    %228 = tpu.matmul %185, %0, %cst_63 {dimension_numbers = #tpu.dot_dimension_numbers<[1], [0], [0], [1], [0, 0, 1, 1], [], []>} : vector<2x32xf32>, vector<32x96xf32>, vector<2x96xf32> -> vector<2x96xf32>
    %229 = vector.broadcast %1 : vector<1x96xf32> to vector<2x96xf32>
    %230 = arith.addf %228, %229 : vector<2x96xf32>
    %231 = vector.extract_strided_slice %227 {offsets = [0, 0], sizes = [2, 32], strides = [1, 1]} : vector<2x96xf32> to vector<2x32xf32>
    %232 = vector.extract_strided_slice %230 {offsets = [0, 0], sizes = [2, 32], strides = [1, 1]} : vector<2x96xf32> to vector<2x32xf32>
    %233 = arith.addf %231, %232 : vector<2x32xf32>
    %234 = arith.negf %233 : vector<2x32xf32>
    %235 = math.exp %234 : vector<2x32xf32>
    %cst_64 = arith.constant 1.000000e+00 : f32
    %236 = vector.broadcast %cst_64 : f32 to vector<2x32xf32>
    %237 = arith.addf %236, %235 : vector<2x32xf32>
    %238 = arith.divf %236, %237 : vector<2x32xf32>
    %239 = vector.extract_strided_slice %227 {offsets = [0, 32], sizes = [2, 32], strides = [1, 1]} : vector<2x96xf32> to vector<2x32xf32>
    %240 = vector.extract_strided_slice %230 {offsets = [0, 32], sizes = [2, 32], strides = [1, 1]} : vector<2x96xf32> to vector<2x32xf32>
    %241 = arith.addf %239, %240 : vector<2x32xf32>
    %242 = arith.negf %241 : vector<2x32xf32>
    %243 = math.exp %242 : vector<2x32xf32>
    %cst_65 = arith.constant 1.000000e+00 : f32
    %244 = vector.broadcast %cst_65 : f32 to vector<2x32xf32>
    %245 = arith.addf %244, %243 : vector<2x32xf32>
    %246 = arith.divf %244, %245 : vector<2x32xf32>
    %247 = vector.extract_strided_slice %227 {offsets = [0, 64], sizes = [2, 32], strides = [1, 1]} : vector<2x96xf32> to vector<2x32xf32>
    %248 = vector.extract_strided_slice %230 {offsets = [0, 64], sizes = [2, 32], strides = [1, 1]} : vector<2x96xf32> to vector<2x32xf32>
    %249 = arith.mulf %238, %248 : vector<2x32xf32>
    %250 = arith.addf %247, %249 : vector<2x32xf32>
    %251 = math.tanh %250 : vector<2x32xf32>
    %cst_66 = arith.constant 1.000000e+00 : f32
    %252 = vector.broadcast %cst_66 : f32 to vector<2x32xf32>
    %253 = arith.subf %252, %246 : vector<2x32xf32>
    %254 = arith.mulf %253, %251 : vector<2x32xf32>
    %255 = arith.mulf %246, %185 : vector<2x32xf32>
    %256 = arith.addf %254, %255 : vector<2x32xf32>
    %cst_67 = arith.constant dense<0.000000e+00> : vector<2x96xf32>
    %257 = tpu.matmul %256, %2, %cst_67 {dimension_numbers = #tpu.dot_dimension_numbers<[1], [0], [0], [1], [0, 0, 1, 1], [], []>} : vector<2x32xf32>, vector<32x96xf32>, vector<2x96xf32> -> vector<2x96xf32>
    %258 = vector.broadcast %3 : vector<1x96xf32> to vector<2x96xf32>
    %259 = arith.addf %257, %258 : vector<2x96xf32>
    %cst_68 = arith.constant dense<0.000000e+00> : vector<2x96xf32>
    %260 = tpu.matmul %217, %4, %cst_68 {dimension_numbers = #tpu.dot_dimension_numbers<[1], [0], [0], [1], [0, 0, 1, 1], [], []>} : vector<2x32xf32>, vector<32x96xf32>, vector<2x96xf32> -> vector<2x96xf32>
    %261 = vector.broadcast %5 : vector<1x96xf32> to vector<2x96xf32>
    %262 = arith.addf %260, %261 : vector<2x96xf32>
    %263 = vector.extract_strided_slice %259 {offsets = [0, 0], sizes = [2, 32], strides = [1, 1]} : vector<2x96xf32> to vector<2x32xf32>
    %264 = vector.extract_strided_slice %262 {offsets = [0, 0], sizes = [2, 32], strides = [1, 1]} : vector<2x96xf32> to vector<2x32xf32>
    %265 = arith.addf %263, %264 : vector<2x32xf32>
    %266 = arith.negf %265 : vector<2x32xf32>
    %267 = math.exp %266 : vector<2x32xf32>
    %cst_69 = arith.constant 1.000000e+00 : f32
    %268 = vector.broadcast %cst_69 : f32 to vector<2x32xf32>
    %269 = arith.addf %268, %267 : vector<2x32xf32>
    %270 = arith.divf %268, %269 : vector<2x32xf32>
    %271 = vector.extract_strided_slice %259 {offsets = [0, 32], sizes = [2, 32], strides = [1, 1]} : vector<2x96xf32> to vector<2x32xf32>
    %272 = vector.extract_strided_slice %262 {offsets = [0, 32], sizes = [2, 32], strides = [1, 1]} : vector<2x96xf32> to vector<2x32xf32>
    %273 = arith.addf %271, %272 : vector<2x32xf32>
    %274 = arith.negf %273 : vector<2x32xf32>
    %275 = math.exp %274 : vector<2x32xf32>
    %cst_70 = arith.constant 1.000000e+00 : f32
    %276 = vector.broadcast %cst_70 : f32 to vector<2x32xf32>
    %277 = arith.addf %276, %275 : vector<2x32xf32>
    %278 = arith.divf %276, %277 : vector<2x32xf32>
    %279 = vector.extract_strided_slice %259 {offsets = [0, 64], sizes = [2, 32], strides = [1, 1]} : vector<2x96xf32> to vector<2x32xf32>
    %280 = vector.extract_strided_slice %262 {offsets = [0, 64], sizes = [2, 32], strides = [1, 1]} : vector<2x96xf32> to vector<2x32xf32>
    %281 = arith.mulf %270, %280 : vector<2x32xf32>
    %282 = arith.addf %279, %281 : vector<2x32xf32>
    %283 = math.tanh %282 : vector<2x32xf32>
    %cst_71 = arith.constant 1.000000e+00 : f32
    %284 = vector.broadcast %cst_71 : f32 to vector<2x32xf32>
    %285 = arith.subf %284, %278 : vector<2x32xf32>
    %286 = arith.mulf %285, %283 : vector<2x32xf32>
    %287 = arith.mulf %278, %217 : vector<2x32xf32>
    %288 = arith.addf %286, %287 : vector<2x32xf32>
    %cst_72 = arith.constant dense<0.000000e+00> : vector<2x128xf32>
    %289 = tpu.matmul %288, %6, %cst_72 {dimension_numbers = #tpu.dot_dimension_numbers<[1], [0], [0], [1], [0, 0, 1, 1], [], []>} : vector<2x32xf32>, vector<32x128xf32>, vector<2x128xf32> -> vector<2x128xf32>
    %290 = vector.broadcast %7 : vector<1x128xf32> to vector<2x128xf32>
    %291 = arith.addf %289, %290 : vector<2x128xf32>
    %292 = arith.index_cast %c3_i32 : i32 to index
    %c0_73 = arith.constant 0 : index
    %c0_74 = arith.constant 0 : index
    %293 = vector.load %arg11[%292, %c0_73, %c0_74] : memref<8x2x128xf32, #tpu.memory_space<vmem>>, vector<1x2x128xf32>
    %294 = vector.shape_cast %293 : vector<1x2x128xf32> to vector<2x128xf32>
    %295 = vector.shape_cast %291 : vector<2x128xf32> to vector<1x2x128xf32>
    tpu.vector_store %arg11[%292, %c0_73, %c0_74], %295 {strides = array<i32>} : memref<8x2x128xf32, #tpu.memory_space<vmem>>, vector<1x2x128xf32>,
    %c4_i32 = arith.constant 4 : i32
    %296 = arith.index_cast %c4_i32 : i32 to index
    %c0_75 = arith.constant 0 : index
    %c0_76 = arith.constant 0 : index
    %297 = vector.load %arg1[%296, %c0_75, %c0_76] : memref<8x2x96xf32, #tpu.memory_space<vmem>>, vector<1x2x96xf32>
    %298 = vector.shape_cast %297 : vector<1x2x96xf32> to vector<2x96xf32>
    %cst_77 = arith.constant dense<0.000000e+00> : vector<2x96xf32>
    %299 = tpu.matmul %256, %0, %cst_77 {dimension_numbers = #tpu.dot_dimension_numbers<[1], [0], [0], [1], [0, 0, 1, 1], [], []>} : vector<2x32xf32>, vector<32x96xf32>, vector<2x96xf32> -> vector<2x96xf32>
    %300 = vector.broadcast %1 : vector<1x96xf32> to vector<2x96xf32>
    %301 = arith.addf %299, %300 : vector<2x96xf32>
    %302 = vector.extract_strided_slice %298 {offsets = [0, 0], sizes = [2, 32], strides = [1, 1]} : vector<2x96xf32> to vector<2x32xf32>
    %303 = vector.extract_strided_slice %301 {offsets = [0, 0], sizes = [2, 32], strides = [1, 1]} : vector<2x96xf32> to vector<2x32xf32>
    %304 = arith.addf %302, %303 : vector<2x32xf32>
    %305 = arith.negf %304 : vector<2x32xf32>
    %306 = math.exp %305 : vector<2x32xf32>
    %cst_78 = arith.constant 1.000000e+00 : f32
    %307 = vector.broadcast %cst_78 : f32 to vector<2x32xf32>
    %308 = arith.addf %307, %306 : vector<2x32xf32>
    %309 = arith.divf %307, %308 : vector<2x32xf32>
    %310 = vector.extract_strided_slice %298 {offsets = [0, 32], sizes = [2, 32], strides = [1, 1]} : vector<2x96xf32> to vector<2x32xf32>
    %311 = vector.extract_strided_slice %301 {offsets = [0, 32], sizes = [2, 32], strides = [1, 1]} : vector<2x96xf32> to vector<2x32xf32>
    %312 = arith.addf %310, %311 : vector<2x32xf32>
    %313 = arith.negf %312 : vector<2x32xf32>
    %314 = math.exp %313 : vector<2x32xf32>
    %cst_79 = arith.constant 1.000000e+00 : f32
    %315 = vector.broadcast %cst_79 : f32 to vector<2x32xf32>
    %316 = arith.addf %315, %314 : vector<2x32xf32>
    %317 = arith.divf %315, %316 : vector<2x32xf32>
    %318 = vector.extract_strided_slice %298 {offsets = [0, 64], sizes = [2, 32], strides = [1, 1]} : vector<2x96xf32> to vector<2x32xf32>
    %319 = vector.extract_strided_slice %301 {offsets = [0, 64], sizes = [2, 32], strides = [1, 1]} : vector<2x96xf32> to vector<2x32xf32>
    %320 = arith.mulf %309, %319 : vector<2x32xf32>
    %321 = arith.addf %318, %320 : vector<2x32xf32>
    %322 = math.tanh %321 : vector<2x32xf32>
    %cst_80 = arith.constant 1.000000e+00 : f32
    %323 = vector.broadcast %cst_80 : f32 to vector<2x32xf32>
    %324 = arith.subf %323, %317 : vector<2x32xf32>
    %325 = arith.mulf %324, %322 : vector<2x32xf32>
    %326 = arith.mulf %317, %256 : vector<2x32xf32>
    %327 = arith.addf %325, %326 : vector<2x32xf32>
    %cst_81 = arith.constant dense<0.000000e+00> : vector<2x96xf32>
    %328 = tpu.matmul %327, %2, %cst_81 {dimension_numbers = #tpu.dot_dimension_numbers<[1], [0], [0], [1], [0, 0, 1, 1], [], []>} : vector<2x32xf32>, vector<32x96xf32>, vector<2x96xf32> -> vector<2x96xf32>
    %329 = vector.broadcast %3 : vector<1x96xf32> to vector<2x96xf32>
    %330 = arith.addf %328, %329 : vector<2x96xf32>
    %cst_82 = arith.constant dense<0.000000e+00> : vector<2x96xf32>
    %331 = tpu.matmul %288, %4, %cst_82 {dimension_numbers = #tpu.dot_dimension_numbers<[1], [0], [0], [1], [0, 0, 1, 1], [], []>} : vector<2x32xf32>, vector<32x96xf32>, vector<2x96xf32> -> vector<2x96xf32>
    %332 = vector.broadcast %5 : vector<1x96xf32> to vector<2x96xf32>
    %333 = arith.addf %331, %332 : vector<2x96xf32>
    %334 = vector.extract_strided_slice %330 {offsets = [0, 0], sizes = [2, 32], strides = [1, 1]} : vector<2x96xf32> to vector<2x32xf32>
    %335 = vector.extract_strided_slice %333 {offsets = [0, 0], sizes = [2, 32], strides = [1, 1]} : vector<2x96xf32> to vector<2x32xf32>
    %336 = arith.addf %334, %335 : vector<2x32xf32>
    %337 = arith.negf %336 : vector<2x32xf32>
    %338 = math.exp %337 : vector<2x32xf32>
    %cst_83 = arith.constant 1.000000e+00 : f32
    %339 = vector.broadcast %cst_83 : f32 to vector<2x32xf32>
    %340 = arith.addf %339, %338 : vector<2x32xf32>
    %341 = arith.divf %339, %340 : vector<2x32xf32>
    %342 = vector.extract_strided_slice %330 {offsets = [0, 32], sizes = [2, 32], strides = [1, 1]} : vector<2x96xf32> to vector<2x32xf32>
    %343 = vector.extract_strided_slice %333 {offsets = [0, 32], sizes = [2, 32], strides = [1, 1]} : vector<2x96xf32> to vector<2x32xf32>
    %344 = arith.addf %342, %343 : vector<2x32xf32>
    %345 = arith.negf %344 : vector<2x32xf32>
    %346 = math.exp %345 : vector<2x32xf32>
    %cst_84 = arith.constant 1.000000e+00 : f32
    %347 = vector.broadcast %cst_84 : f32 to vector<2x32xf32>
    %348 = arith.addf %347, %346 : vector<2x32xf32>
    %349 = arith.divf %347, %348 : vector<2x32xf32>
    %350 = vector.extract_strided_slice %330 {offsets = [0, 64], sizes = [2, 32], strides = [1, 1]} : vector<2x96xf32> to vector<2x32xf32>
    %351 = vector.extract_strided_slice %333 {offsets = [0, 64], sizes = [2, 32], strides = [1, 1]} : vector<2x96xf32> to vector<2x32xf32>
    %352 = arith.mulf %341, %351 : vector<2x32xf32>
    %353 = arith.addf %350, %352 : vector<2x32xf32>
    %354 = math.tanh %353 : vector<2x32xf32>
    %cst_85 = arith.constant 1.000000e+00 : f32
    %355 = vector.broadcast %cst_85 : f32 to vector<2x32xf32>
    %356 = arith.subf %355, %349 : vector<2x32xf32>
    %357 = arith.mulf %356, %354 : vector<2x32xf32>
    %358 = arith.mulf %349, %288 : vector<2x32xf32>
    %359 = arith.addf %357, %358 : vector<2x32xf32>
    %cst_86 = arith.constant dense<0.000000e+00> : vector<2x128xf32>
    %360 = tpu.matmul %359, %6, %cst_86 {dimension_numbers = #tpu.dot_dimension_numbers<[1], [0], [0], [1], [0, 0, 1, 1], [], []>} : vector<2x32xf32>, vector<32x128xf32>, vector<2x128xf32> -> vector<2x128xf32>
    %361 = vector.broadcast %7 : vector<1x128xf32> to vector<2x128xf32>
    %362 = arith.addf %360, %361 : vector<2x128xf32>
    %363 = arith.index_cast %c4_i32 : i32 to index
    %c0_87 = arith.constant 0 : index
    %c0_88 = arith.constant 0 : index
    %364 = vector.load %arg11[%363, %c0_87, %c0_88] : memref<8x2x128xf32, #tpu.memory_space<vmem>>, vector<1x2x128xf32>
    %365 = vector.shape_cast %364 : vector<1x2x128xf32> to vector<2x128xf32>
    %366 = vector.shape_cast %362 : vector<2x128xf32> to vector<1x2x128xf32>
    tpu.vector_store %arg11[%363, %c0_87, %c0_88], %366 {strides = array<i32>} : memref<8x2x128xf32, #tpu.memory_space<vmem>>, vector<1x2x128xf32>,
    %c5_i32 = arith.constant 5 : i32
    %367 = arith.index_cast %c5_i32 : i32 to index
    %c0_89 = arith.constant 0 : index
    %c0_90 = arith.constant 0 : index
    %368 = vector.load %arg1[%367, %c0_89, %c0_90] : memref<8x2x96xf32, #tpu.memory_space<vmem>>, vector<1x2x96xf32>
    %369 = vector.shape_cast %368 : vector<1x2x96xf32> to vector<2x96xf32>
    %cst_91 = arith.constant dense<0.000000e+00> : vector<2x96xf32>
    %370 = tpu.matmul %327, %0, %cst_91 {dimension_numbers = #tpu.dot_dimension_numbers<[1], [0], [0], [1], [0, 0, 1, 1], [], []>} : vector<2x32xf32>, vector<32x96xf32>, vector<2x96xf32> -> vector<2x96xf32>
    %371 = vector.broadcast %1 : vector<1x96xf32> to vector<2x96xf32>
    %372 = arith.addf %370, %371 : vector<2x96xf32>
    %373 = vector.extract_strided_slice %369 {offsets = [0, 0], sizes = [2, 32], strides = [1, 1]} : vector<2x96xf32> to vector<2x32xf32>
    %374 = vector.extract_strided_slice %372 {offsets = [0, 0], sizes = [2, 32], strides = [1, 1]} : vector<2x96xf32> to vector<2x32xf32>
    %375 = arith.addf %373, %374 : vector<2x32xf32>
    %376 = arith.negf %375 : vector<2x32xf32>
    %377 = math.exp %376 : vector<2x32xf32>
    %cst_92 = arith.constant 1.000000e+00 : f32
    %378 = vector.broadcast %cst_92 : f32 to vector<2x32xf32>
    %379 = arith.addf %378, %377 : vector<2x32xf32>
    %380 = arith.divf %378, %379 : vector<2x32xf32>
    %381 = vector.extract_strided_slice %369 {offsets = [0, 32], sizes = [2, 32], strides = [1, 1]} : vector<2x96xf32> to vector<2x32xf32>
    %382 = vector.extract_strided_slice %372 {offsets = [0, 32], sizes = [2, 32], strides = [1, 1]} : vector<2x96xf32> to vector<2x32xf32>
    %383 = arith.addf %381, %382 : vector<2x32xf32>
    %384 = arith.negf %383 : vector<2x32xf32>
    %385 = math.exp %384 : vector<2x32xf32>
    %cst_93 = arith.constant 1.000000e+00 : f32
    %386 = vector.broadcast %cst_93 : f32 to vector<2x32xf32>
    %387 = arith.addf %386, %385 : vector<2x32xf32>
    %388 = arith.divf %386, %387 : vector<2x32xf32>
    %389 = vector.extract_strided_slice %369 {offsets = [0, 64], sizes = [2, 32], strides = [1, 1]} : vector<2x96xf32> to vector<2x32xf32>
    %390 = vector.extract_strided_slice %372 {offsets = [0, 64], sizes = [2, 32], strides = [1, 1]} : vector<2x96xf32> to vector<2x32xf32>
    %391 = arith.mulf %380, %390 : vector<2x32xf32>
    %392 = arith.addf %389, %391 : vector<2x32xf32>
    %393 = math.tanh %392 : vector<2x32xf32>
    %cst_94 = arith.constant 1.000000e+00 : f32
    %394 = vector.broadcast %cst_94 : f32 to vector<2x32xf32>
    %395 = arith.subf %394, %388 : vector<2x32xf32>
    %396 = arith.mulf %395, %393 : vector<2x32xf32>
    %397 = arith.mulf %388, %327 : vector<2x32xf32>
    %398 = arith.addf %396, %397 : vector<2x32xf32>
    %cst_95 = arith.constant dense<0.000000e+00> : vector<2x96xf32>
    %399 = tpu.matmul %398, %2, %cst_95 {dimension_numbers = #tpu.dot_dimension_numbers<[1], [0], [0], [1], [0, 0, 1, 1], [], []>} : vector<2x32xf32>, vector<32x96xf32>, vector<2x96xf32> -> vector<2x96xf32>
    %400 = vector.broadcast %3 : vector<1x96xf32> to vector<2x96xf32>
    %401 = arith.addf %399, %400 : vector<2x96xf32>
    %cst_96 = arith.constant dense<0.000000e+00> : vector<2x96xf32>
    %402 = tpu.matmul %359, %4, %cst_96 {dimension_numbers = #tpu.dot_dimension_numbers<[1], [0], [0], [1], [0, 0, 1, 1], [], []>} : vector<2x32xf32>, vector<32x96xf32>, vector<2x96xf32> -> vector<2x96xf32>
    %403 = vector.broadcast %5 : vector<1x96xf32> to vector<2x96xf32>
    %404 = arith.addf %402, %403 : vector<2x96xf32>
    %405 = vector.extract_strided_slice %401 {offsets = [0, 0], sizes = [2, 32], strides = [1, 1]} : vector<2x96xf32> to vector<2x32xf32>
    %406 = vector.extract_strided_slice %404 {offsets = [0, 0], sizes = [2, 32], strides = [1, 1]} : vector<2x96xf32> to vector<2x32xf32>
    %407 = arith.addf %405, %406 : vector<2x32xf32>
    %408 = arith.negf %407 : vector<2x32xf32>
    %409 = math.exp %408 : vector<2x32xf32>
    %cst_97 = arith.constant 1.000000e+00 : f32
    %410 = vector.broadcast %cst_97 : f32 to vector<2x32xf32>
    %411 = arith.addf %410, %409 : vector<2x32xf32>
    %412 = arith.divf %410, %411 : vector<2x32xf32>
    %413 = vector.extract_strided_slice %401 {offsets = [0, 32], sizes = [2, 32], strides = [1, 1]} : vector<2x96xf32> to vector<2x32xf32>
    %414 = vector.extract_strided_slice %404 {offsets = [0, 32], sizes = [2, 32], strides = [1, 1]} : vector<2x96xf32> to vector<2x32xf32>
    %415 = arith.addf %413, %414 : vector<2x32xf32>
    %416 = arith.negf %415 : vector<2x32xf32>
    %417 = math.exp %416 : vector<2x32xf32>
    %cst_98 = arith.constant 1.000000e+00 : f32
    %418 = vector.broadcast %cst_98 : f32 to vector<2x32xf32>
    %419 = arith.addf %418, %417 : vector<2x32xf32>
    %420 = arith.divf %418, %419 : vector<2x32xf32>
    %421 = vector.extract_strided_slice %401 {offsets = [0, 64], sizes = [2, 32], strides = [1, 1]} : vector<2x96xf32> to vector<2x32xf32>
    %422 = vector.extract_strided_slice %404 {offsets = [0, 64], sizes = [2, 32], strides = [1, 1]} : vector<2x96xf32> to vector<2x32xf32>
    %423 = arith.mulf %412, %422 : vector<2x32xf32>
    %424 = arith.addf %421, %423 : vector<2x32xf32>
    %425 = math.tanh %424 : vector<2x32xf32>
    %cst_99 = arith.constant 1.000000e+00 : f32
    %426 = vector.broadcast %cst_99 : f32 to vector<2x32xf32>
    %427 = arith.subf %426, %420 : vector<2x32xf32>
    %428 = arith.mulf %427, %425 : vector<2x32xf32>
    %429 = arith.mulf %420, %359 : vector<2x32xf32>
    %430 = arith.addf %428, %429 : vector<2x32xf32>
    %cst_100 = arith.constant dense<0.000000e+00> : vector<2x128xf32>
    %431 = tpu.matmul %430, %6, %cst_100 {dimension_numbers = #tpu.dot_dimension_numbers<[1], [0], [0], [1], [0, 0, 1, 1], [], []>} : vector<2x32xf32>, vector<32x128xf32>, vector<2x128xf32> -> vector<2x128xf32>
    %432 = vector.broadcast %7 : vector<1x128xf32> to vector<2x128xf32>
    %433 = arith.addf %431, %432 : vector<2x128xf32>
    %434 = arith.index_cast %c5_i32 : i32 to index
    %c0_101 = arith.constant 0 : index
    %c0_102 = arith.constant 0 : index
    %435 = vector.load %arg11[%434, %c0_101, %c0_102] : memref<8x2x128xf32, #tpu.memory_space<vmem>>, vector<1x2x128xf32>
    %436 = vector.shape_cast %435 : vector<1x2x128xf32> to vector<2x128xf32>
    %437 = vector.shape_cast %433 : vector<2x128xf32> to vector<1x2x128xf32>
    tpu.vector_store %arg11[%434, %c0_101, %c0_102], %437 {strides = array<i32>} : memref<8x2x128xf32, #tpu.memory_space<vmem>>, vector<1x2x128xf32>,
    %c6_i32 = arith.constant 6 : i32
    %438 = arith.index_cast %c6_i32 : i32 to index
    %c0_103 = arith.constant 0 : index
    %c0_104 = arith.constant 0 : index
    %439 = vector.load %arg1[%438, %c0_103, %c0_104] : memref<8x2x96xf32, #tpu.memory_space<vmem>>, vector<1x2x96xf32>
    %440 = vector.shape_cast %439 : vector<1x2x96xf32> to vector<2x96xf32>
    %cst_105 = arith.constant dense<0.000000e+00> : vector<2x96xf32>
    %441 = tpu.matmul %398, %0, %cst_105 {dimension_numbers = #tpu.dot_dimension_numbers<[1], [0], [0], [1], [0, 0, 1, 1], [], []>} : vector<2x32xf32>, vector<32x96xf32>, vector<2x96xf32> -> vector<2x96xf32>
    %442 = vector.broadcast %1 : vector<1x96xf32> to vector<2x96xf32>
    %443 = arith.addf %441, %442 : vector<2x96xf32>
    %444 = vector.extract_strided_slice %440 {offsets = [0, 0], sizes = [2, 32], strides = [1, 1]} : vector<2x96xf32> to vector<2x32xf32>
    %445 = vector.extract_strided_slice %443 {offsets = [0, 0], sizes = [2, 32], strides = [1, 1]} : vector<2x96xf32> to vector<2x32xf32>
    %446 = arith.addf %444, %445 : vector<2x32xf32>
    %447 = arith.negf %446 : vector<2x32xf32>
    %448 = math.exp %447 : vector<2x32xf32>
    %cst_106 = arith.constant 1.000000e+00 : f32
    %449 = vector.broadcast %cst_106 : f32 to vector<2x32xf32>
    %450 = arith.addf %449, %448 : vector<2x32xf32>
    %451 = arith.divf %449, %450 : vector<2x32xf32>
    %452 = vector.extract_strided_slice %440 {offsets = [0, 32], sizes = [2, 32], strides = [1, 1]} : vector<2x96xf32> to vector<2x32xf32>
    %453 = vector.extract_strided_slice %443 {offsets = [0, 32], sizes = [2, 32], strides = [1, 1]} : vector<2x96xf32> to vector<2x32xf32>
    %454 = arith.addf %452, %453 : vector<2x32xf32>
    %455 = arith.negf %454 : vector<2x32xf32>
    %456 = math.exp %455 : vector<2x32xf32>
    %cst_107 = arith.constant 1.000000e+00 : f32
    %457 = vector.broadcast %cst_107 : f32 to vector<2x32xf32>
    %458 = arith.addf %457, %456 : vector<2x32xf32>
    %459 = arith.divf %457, %458 : vector<2x32xf32>
    %460 = vector.extract_strided_slice %440 {offsets = [0, 64], sizes = [2, 32], strides = [1, 1]} : vector<2x96xf32> to vector<2x32xf32>
    %461 = vector.extract_strided_slice %443 {offsets = [0, 64], sizes = [2, 32], strides = [1, 1]} : vector<2x96xf32> to vector<2x32xf32>
    %462 = arith.mulf %451, %461 : vector<2x32xf32>
    %463 = arith.addf %460, %462 : vector<2x32xf32>
    %464 = math.tanh %463 : vector<2x32xf32>
    %cst_108 = arith.constant 1.000000e+00 : f32
    %465 = vector.broadcast %cst_108 : f32 to vector<2x32xf32>
    %466 = arith.subf %465, %459 : vector<2x32xf32>
    %467 = arith.mulf %466, %464 : vector<2x32xf32>
    %468 = arith.mulf %459, %398 : vector<2x32xf32>
    %469 = arith.addf %467, %468 : vector<2x32xf32>
    %cst_109 = arith.constant dense<0.000000e+00> : vector<2x96xf32>
    %470 = tpu.matmul %469, %2, %cst_109 {dimension_numbers = #tpu.dot_dimension_numbers<[1], [0], [0], [1], [0, 0, 1, 1], [], []>} : vector<2x32xf32>, vector<32x96xf32>, vector<2x96xf32> -> vector<2x96xf32>
    %471 = vector.broadcast %3 : vector<1x96xf32> to vector<2x96xf32>
    %472 = arith.addf %470, %471 : vector<2x96xf32>
    %cst_110 = arith.constant dense<0.000000e+00> : vector<2x96xf32>
    %473 = tpu.matmul %430, %4, %cst_110 {dimension_numbers = #tpu.dot_dimension_numbers<[1], [0], [0], [1], [0, 0, 1, 1], [], []>} : vector<2x32xf32>, vector<32x96xf32>, vector<2x96xf32> -> vector<2x96xf32>
    %474 = vector.broadcast %5 : vector<1x96xf32> to vector<2x96xf32>
    %475 = arith.addf %473, %474 : vector<2x96xf32>
    %476 = vector.extract_strided_slice %472 {offsets = [0, 0], sizes = [2, 32], strides = [1, 1]} : vector<2x96xf32> to vector<2x32xf32>
    %477 = vector.extract_strided_slice %475 {offsets = [0, 0], sizes = [2, 32], strides = [1, 1]} : vector<2x96xf32> to vector<2x32xf32>
    %478 = arith.addf %476, %477 : vector<2x32xf32>
    %479 = arith.negf %478 : vector<2x32xf32>
    %480 = math.exp %479 : vector<2x32xf32>
    %cst_111 = arith.constant 1.000000e+00 : f32
    %481 = vector.broadcast %cst_111 : f32 to vector<2x32xf32>
    %482 = arith.addf %481, %480 : vector<2x32xf32>
    %483 = arith.divf %481, %482 : vector<2x32xf32>
    %484 = vector.extract_strided_slice %472 {offsets = [0, 32], sizes = [2, 32], strides = [1, 1]} : vector<2x96xf32> to vector<2x32xf32>
    %485 = vector.extract_strided_slice %475 {offsets = [0, 32], sizes = [2, 32], strides = [1, 1]} : vector<2x96xf32> to vector<2x32xf32>
    %486 = arith.addf %484, %485 : vector<2x32xf32>
    %487 = arith.negf %486 : vector<2x32xf32>
    %488 = math.exp %487 : vector<2x32xf32>
    %cst_112 = arith.constant 1.000000e+00 : f32
    %489 = vector.broadcast %cst_112 : f32 to vector<2x32xf32>
    %490 = arith.addf %489, %488 : vector<2x32xf32>
    %491 = arith.divf %489, %490 : vector<2x32xf32>
    %492 = vector.extract_strided_slice %472 {offsets = [0, 64], sizes = [2, 32], strides = [1, 1]} : vector<2x96xf32> to vector<2x32xf32>
    %493 = vector.extract_strided_slice %475 {offsets = [0, 64], sizes = [2, 32], strides = [1, 1]} : vector<2x96xf32> to vector<2x32xf32>
    %494 = arith.mulf %483, %493 : vector<2x32xf32>
    %495 = arith.addf %492, %494 : vector<2x32xf32>
    %496 = math.tanh %495 : vector<2x32xf32>
    %cst_113 = arith.constant 1.000000e+00 : f32
    %497 = vector.broadcast %cst_113 : f32 to vector<2x32xf32>
    %498 = arith.subf %497, %491 : vector<2x32xf32>
    %499 = arith.mulf %498, %496 : vector<2x32xf32>
    %500 = arith.mulf %491, %430 : vector<2x32xf32>
    %501 = arith.addf %499, %500 : vector<2x32xf32>
    %cst_114 = arith.constant dense<0.000000e+00> : vector<2x128xf32>
    %502 = tpu.matmul %501, %6, %cst_114 {dimension_numbers = #tpu.dot_dimension_numbers<[1], [0], [0], [1], [0, 0, 1, 1], [], []>} : vector<2x32xf32>, vector<32x128xf32>, vector<2x128xf32> -> vector<2x128xf32>
    %503 = vector.broadcast %7 : vector<1x128xf32> to vector<2x128xf32>
    %504 = arith.addf %502, %503 : vector<2x128xf32>
    %505 = arith.index_cast %c6_i32 : i32 to index
    %c0_115 = arith.constant 0 : index
    %c0_116 = arith.constant 0 : index
    %506 = vector.load %arg11[%505, %c0_115, %c0_116] : memref<8x2x128xf32, #tpu.memory_space<vmem>>, vector<1x2x128xf32>
    %507 = vector.shape_cast %506 : vector<1x2x128xf32> to vector<2x128xf32>
    %508 = vector.shape_cast %504 : vector<2x128xf32> to vector<1x2x128xf32>
    tpu.vector_store %arg11[%505, %c0_115, %c0_116], %508 {strides = array<i32>} : memref<8x2x128xf32, #tpu.memory_space<vmem>>, vector<1x2x128xf32>,
    %c7_i32 = arith.constant 7 : i32
    %509 = arith.index_cast %c7_i32 : i32 to index
    %c0_117 = arith.constant 0 : index
    %c0_118 = arith.constant 0 : index
    %510 = vector.load %arg1[%509, %c0_117, %c0_118] : memref<8x2x96xf32, #tpu.memory_space<vmem>>, vector<1x2x96xf32>
    %511 = vector.shape_cast %510 : vector<1x2x96xf32> to vector<2x96xf32>
    %cst_119 = arith.constant dense<0.000000e+00> : vector<2x96xf32>
    %512 = tpu.matmul %469, %0, %cst_119 {dimension_numbers = #tpu.dot_dimension_numbers<[1], [0], [0], [1], [0, 0, 1, 1], [], []>} : vector<2x32xf32>, vector<32x96xf32>, vector<2x96xf32> -> vector<2x96xf32>
    %513 = vector.broadcast %1 : vector<1x96xf32> to vector<2x96xf32>
    %514 = arith.addf %512, %513 : vector<2x96xf32>
    %515 = vector.extract_strided_slice %511 {offsets = [0, 0], sizes = [2, 32], strides = [1, 1]} : vector<2x96xf32> to vector<2x32xf32>
    %516 = vector.extract_strided_slice %514 {offsets = [0, 0], sizes = [2, 32], strides = [1, 1]} : vector<2x96xf32> to vector<2x32xf32>
    %517 = arith.addf %515, %516 : vector<2x32xf32>
    %518 = arith.negf %517 : vector<2x32xf32>
    %519 = math.exp %518 : vector<2x32xf32>
    %cst_120 = arith.constant 1.000000e+00 : f32
    %520 = vector.broadcast %cst_120 : f32 to vector<2x32xf32>
    %521 = arith.addf %520, %519 : vector<2x32xf32>
    %522 = arith.divf %520, %521 : vector<2x32xf32>
    %523 = vector.extract_strided_slice %511 {offsets = [0, 32], sizes = [2, 32], strides = [1, 1]} : vector<2x96xf32> to vector<2x32xf32>
    %524 = vector.extract_strided_slice %514 {offsets = [0, 32], sizes = [2, 32], strides = [1, 1]} : vector<2x96xf32> to vector<2x32xf32>
    %525 = arith.addf %523, %524 : vector<2x32xf32>
    %526 = arith.negf %525 : vector<2x32xf32>
    %527 = math.exp %526 : vector<2x32xf32>
    %cst_121 = arith.constant 1.000000e+00 : f32
    %528 = vector.broadcast %cst_121 : f32 to vector<2x32xf32>
    %529 = arith.addf %528, %527 : vector<2x32xf32>
    %530 = arith.divf %528, %529 : vector<2x32xf32>
    %531 = vector.extract_strided_slice %511 {offsets = [0, 64], sizes = [2, 32], strides = [1, 1]} : vector<2x96xf32> to vector<2x32xf32>
    %532 = vector.extract_strided_slice %514 {offsets = [0, 64], sizes = [2, 32], strides = [1, 1]} : vector<2x96xf32> to vector<2x32xf32>
    %533 = arith.mulf %522, %532 : vector<2x32xf32>
    %534 = arith.addf %531, %533 : vector<2x32xf32>
    %535 = math.tanh %534 : vector<2x32xf32>
    %cst_122 = arith.constant 1.000000e+00 : f32
    %536 = vector.broadcast %cst_122 : f32 to vector<2x32xf32>
    %537 = arith.subf %536, %530 : vector<2x32xf32>
    %538 = arith.mulf %537, %535 : vector<2x32xf32>
    %539 = arith.mulf %530, %469 : vector<2x32xf32>
    %540 = arith.addf %538, %539 : vector<2x32xf32>
    %cst_123 = arith.constant dense<0.000000e+00> : vector<2x96xf32>
    %541 = tpu.matmul %540, %2, %cst_123 {dimension_numbers = #tpu.dot_dimension_numbers<[1], [0], [0], [1], [0, 0, 1, 1], [], []>} : vector<2x32xf32>, vector<32x96xf32>, vector<2x96xf32> -> vector<2x96xf32>
    %542 = vector.broadcast %3 : vector<1x96xf32> to vector<2x96xf32>
    %543 = arith.addf %541, %542 : vector<2x96xf32>
    %cst_124 = arith.constant dense<0.000000e+00> : vector<2x96xf32>
    %544 = tpu.matmul %501, %4, %cst_124 {dimension_numbers = #tpu.dot_dimension_numbers<[1], [0], [0], [1], [0, 0, 1, 1], [], []>} : vector<2x32xf32>, vector<32x96xf32>, vector<2x96xf32> -> vector<2x96xf32>
    %545 = vector.broadcast %5 : vector<1x96xf32> to vector<2x96xf32>
    %546 = arith.addf %544, %545 : vector<2x96xf32>
    %547 = vector.extract_strided_slice %543 {offsets = [0, 0], sizes = [2, 32], strides = [1, 1]} : vector<2x96xf32> to vector<2x32xf32>
    %548 = vector.extract_strided_slice %546 {offsets = [0, 0], sizes = [2, 32], strides = [1, 1]} : vector<2x96xf32> to vector<2x32xf32>
    %549 = arith.addf %547, %548 : vector<2x32xf32>
    %550 = arith.negf %549 : vector<2x32xf32>
    %551 = math.exp %550 : vector<2x32xf32>
    %cst_125 = arith.constant 1.000000e+00 : f32
    %552 = vector.broadcast %cst_125 : f32 to vector<2x32xf32>
    %553 = arith.addf %552, %551 : vector<2x32xf32>
    %554 = arith.divf %552, %553 : vector<2x32xf32>
    %555 = vector.extract_strided_slice %543 {offsets = [0, 32], sizes = [2, 32], strides = [1, 1]} : vector<2x96xf32> to vector<2x32xf32>
    %556 = vector.extract_strided_slice %546 {offsets = [0, 32], sizes = [2, 32], strides = [1, 1]} : vector<2x96xf32> to vector<2x32xf32>
    %557 = arith.addf %555, %556 : vector<2x32xf32>
    %558 = arith.negf %557 : vector<2x32xf32>
    %559 = math.exp %558 : vector<2x32xf32>
    %cst_126 = arith.constant 1.000000e+00 : f32
    %560 = vector.broadcast %cst_126 : f32 to vector<2x32xf32>
    %561 = arith.addf %560, %559 : vector<2x32xf32>
    %562 = arith.divf %560, %561 : vector<2x32xf32>
    %563 = vector.extract_strided_slice %543 {offsets = [0, 64], sizes = [2, 32], strides = [1, 1]} : vector<2x96xf32> to vector<2x32xf32>
    %564 = vector.extract_strided_slice %546 {offsets = [0, 64], sizes = [2, 32], strides = [1, 1]} : vector<2x96xf32> to vector<2x32xf32>
    %565 = arith.mulf %554, %564 : vector<2x32xf32>
    %566 = arith.addf %563, %565 : vector<2x32xf32>
    %567 = math.tanh %566 : vector<2x32xf32>
    %cst_127 = arith.constant 1.000000e+00 : f32
    %568 = vector.broadcast %cst_127 : f32 to vector<2x32xf32>
    %569 = arith.subf %568, %562 : vector<2x32xf32>
    %570 = arith.mulf %569, %567 : vector<2x32xf32>
    %571 = arith.mulf %562, %501 : vector<2x32xf32>
    %572 = arith.addf %570, %571 : vector<2x32xf32>
    %cst_128 = arith.constant dense<0.000000e+00> : vector<2x128xf32>
    %573 = tpu.matmul %572, %6, %cst_128 {dimension_numbers = #tpu.dot_dimension_numbers<[1], [0], [0], [1], [0, 0, 1, 1], [], []>} : vector<2x32xf32>, vector<32x128xf32>, vector<2x128xf32> -> vector<2x128xf32>
    %574 = vector.broadcast %7 : vector<1x128xf32> to vector<2x128xf32>
    %575 = arith.addf %573, %574 : vector<2x128xf32>
    %576 = arith.index_cast %c7_i32 : i32 to index
    %c0_129 = arith.constant 0 : index
    %c0_130 = arith.constant 0 : index
    %577 = vector.load %arg11[%576, %c0_129, %c0_130] : memref<8x2x128xf32, #tpu.memory_space<vmem>>, vector<1x2x128xf32>
    %578 = vector.shape_cast %577 : vector<1x2x128xf32> to vector<2x128xf32>
    %579 = vector.shape_cast %575 : vector<2x128xf32> to vector<1x2x128xf32>
    tpu.vector_store %arg11[%576, %c0_129, %c0_130], %579 {strides = array<i32>} : memref<8x2x128xf32, #tpu.memory_space<vmem>>, vector<1x2x128xf32>,
    %c8_i32 = arith.constant 8 : i32
    %c0_131 = arith.constant 0 : index
    %c0_132 = arith.constant 0 : index
    %c0_133 = arith.constant 0 : index
    %580 = vector.load %arg12[%c0_131, %c0_132, %c0_133] : memref<2x2x32xf32, #tpu.memory_space<vmem>>, vector<1x2x32xf32>
    %581 = vector.shape_cast %580 : vector<1x2x32xf32> to vector<2x32xf32>
    %582 = vector.shape_cast %540 : vector<2x32xf32> to vector<1x2x32xf32>
    tpu.vector_store %arg12[%c0_131, %c0_132, %c0_133], %582 {strides = array<i32>} : memref<2x2x32xf32, #tpu.memory_space<vmem>>, vector<1x2x32xf32>,
    %c1_134 = arith.constant 1 : index
    %c0_135 = arith.constant 0 : index
    %c0_136 = arith.constant 0 : index
    %583 = vector.load %arg12[%c1_134, %c0_135, %c0_136] : memref<2x2x32xf32, #tpu.memory_space<vmem>>, vector<1x2x32xf32>
    %584 = vector.shape_cast %583 : vector<1x2x32xf32> to vector<2x32xf32>
    %585 = vector.shape_cast %572 : vector<2x32xf32> to vector<1x2x32xf32>
    tpu.vector_store %arg12[%c1_134, %c0_135, %c0_136], %585 {strides = array<i32>} : memref<2x2x32xf32, #tpu.memory_space<vmem>>, vector<1x2x32xf32>,
    return
  }
  func.func @transform_0(%arg0: i32) -> (i32, i32, i32) {
    %c0_i32 = arith.constant 0 : i32
    %c0_i32_0 = arith.constant 0 : i32
    %c0_i32_1 = arith.constant 0 : i32
    %c0_i32_2 = arith.constant 0 : i32
    return %c0_i32, %c0_i32_0, %c0_i32_1 : i32, i32, i32
  }
  func.func @transform_1(%arg0: i32) -> (i32, i32, i32) {
    %c0_i32 = arith.constant 0 : i32
    %c0_i32_0 = arith.constant 0 : i32
    %c0_i32_1 = arith.constant 0 : i32
    %c0_i32_2 = arith.constant 0 : i32
    return %c0_i32, %c0_i32_0, %c0_i32_1 : i32, i32, i32
  }
  func.func @transform_2(%arg0: i32) -> (i32, i32) {
    %c0_i32 = arith.constant 0 : i32
    %c0_i32_0 = arith.constant 0 : i32
    %c0_i32_1 = arith.constant 0 : i32
    return %c0_i32, %c0_i32_0 : i32, i32
  }
  func.func @transform_3(%arg0: i32) -> (i32, i32) {
    %c0_i32 = arith.constant 0 : i32
    %c0_i32_0 = arith.constant 0 : i32
    %c0_i32_1 = arith.constant 0 : i32
    return %c0_i32, %c0_i32_0 : i32, i32
  }
  func.func @transform_4(%arg0: i32) -> (i32, i32) {
    %c0_i32 = arith.constant 0 : i32
    %c0_i32_0 = arith.constant 0 : i32
    %c0_i32_1 = arith.constant 0 : i32
    return %c0_i32, %c0_i32_0 : i32, i32
  }
  func.func @transform_5(%arg0: i32) -> (i32, i32) {
    %c0_i32 = arith.constant 0 : i32
    %c0_i32_0 = arith.constant 0 : i32
    %c0_i32_1 = arith.constant 0 : i32
    return %c0_i32, %c0_i32_0 : i32, i32
  }
  func.func @transform_6(%arg0: i32) -> (i32, i32) {
    %c0_i32 = arith.constant 0 : i32
    %c0_i32_0 = arith.constant 0 : i32
    %c0_i32_1 = arith.constant 0 : i32
    return %c0_i32, %c0_i32_0 : i32, i32
  }
  func.func @transform_7(%arg0: i32) -> (i32, i32) {
    %c0_i32 = arith.constant 0 : i32
    %c0_i32_0 = arith.constant 0 : i32
    %c0_i32_1 = arith.constant 0 : i32
    return %c0_i32, %c0_i32_0 : i32, i32
  }
  func.func @transform_8(%arg0: i32) -> (i32, i32) {
    %c0_i32 = arith.constant 0 : i32
    %c0_i32_0 = arith.constant 0 : i32
    %c0_i32_1 = arith.constant 0 : i32
    return %c0_i32, %c0_i32_0 : i32, i32
  }
  func.func @transform_9(%arg0: i32) -> (i32, i32) {
    %c0_i32 = arith.constant 0 : i32
    %c0_i32_0 = arith.constant 0 : i32
    %c0_i32_1 = arith.constant 0 : i32
    return %c0_i32, %c0_i32_0 : i32, i32
  }
  func.func @transform_10(%arg0: i32) -> (i32, i32, i32) {
    %c0_i32 = arith.constant 0 : i32
    %c0_i32_0 = arith.constant 0 : i32
    %c0_i32_1 = arith.constant 0 : i32
    %c0_i32_2 = arith.constant 0 : i32
    return %c0_i32, %c0_i32_0, %c0_i32_1 : i32, i32, i32
  }
  func.func @transform_11(%arg0: i32) -> (i32, i32, i32) {
    %c0_i32 = arith.constant 0 : i32
    %c0_i32_0 = arith.constant 0 : i32
    %c0_i32_1 = arith.constant 0 : i32
    %c0_i32_2 = arith.constant 0 : i32
    return %c0_i32, %c0_i32_0, %c0_i32_1 : i32, i32, i32
  }
}

</mosaic_0001>

<llo_original>
// kernel: gru_model_forward.1
$region0: #{gru_model_forward.1}
  #allocation0 [shape = 'u32[]', space=smem, size = 0x4, offset = 0x4, fixed_abs, tag = 'smem constant byte address 0x4 - core index']
  #allocation1 [shape = 'u32[144,128]{1,0:T(1,128)}', space=vmem, size = 0x12000, scoped, tag = 'internal scratch']
  %s0 = inlined_call_operand.vmem [shape: f32[8,2,96], index: 0, kind: input, shape index: {}]
  %s1 = inlined_call_operand.vmem [shape: f32[2,2,32], index: 1, kind: input, shape index: {}]
  %s2 = inlined_call_operand.vmem [shape: f32[32,96], index: 2, kind: input, shape index: {}]
  %s3 = inlined_call_operand.hbm [shape: f32[1,96], index: 3, kind: input, shape index: {}]
  %s4 = inlined_call_operand.vmem [shape: f32[32,96], index: 4, kind: input, shape index: {}]
  %s5 = inlined_call_operand.vmem [shape: f32[1,96], index: 5, kind: input, shape index: {}]
  %s6 = inlined_call_operand.hbm [shape: f32[32,96], index: 6, kind: input, shape index: {}]
  %s7 = inlined_call_operand.vmem [shape: f32[1,96], index: 7, kind: input, shape index: {}]
  %s8 = inlined_call_operand.hbm [shape: f32[32,128], index: 8, kind: input, shape index: {}]
  %s9 = inlined_call_operand.hbm [shape: f32[1,128], index: 9, kind: input, shape index: {}]
  %s10 = inlined_call_operand.vmem [shape: f32[8,2,128], index: 10, kind: output, shape index: {0}]
  %s11 = inlined_call_operand.hbm [shape: f32[2,2,32], index: 11, kind: output, shape index: {1}]
  %12 = xla_tuple %s10, %s11
  %s13 = sld [smem:[#allocation0]]
  $region74: #{gru_model_forward.1} parent=0
    _
  %s15 = ssub.s32 1, %s13
  %s16 = scalar_select 0, %s15, %s13
  $region1: #{gru_model_forward.1} parent=0
    #allocation2 [shape = 'u8[512]{0}', space=vmem, size = 0x400, scoped, tag = 'input window, operand 3, single buffered']
    #allocation3 [shape = 's32[1]{0}', space=sflag, size = 0x4, scoped, tag = 'scoped memory for gru_model_forward.1']
    #allocation4 [shape = 's32[1]{0}', space=sflag, size = 0x4, scoped, tag = 'scoped memory for gru_model_forward.1']
    #allocation5 [shape = 'u8[16384]{0}', space=vmem, size = 0x4000, scoped, tag = 'input window, operand 6, single buffered']
    #allocation6 [shape = 's32[1]{0}', space=sflag, size = 0x4, scoped, tag = 'scoped memory for gru_model_forward.1']
    #allocation7 [shape = 'u8[16384]{0}', space=vmem, size = 0x4000, scoped, tag = 'input window, operand 8, single buffered']
    #allocation8 [shape = 'u8[512]{0}', space=vmem, size = 0x400, scoped, tag = 'input window, operand 9, single buffered']
    #allocation9 [shape = 's32[1]{0}', space=sflag, size = 0x4, scoped, tag = 'scoped memory for gru_model_forward.1']
    #allocation10 [shape = 'u8[2048]{0}', space=vmem, size = 0x800, scoped, tag = 'output window, operand 1, single buffered']
    %17 = vsyncpa [#allocation3], 0
    %18 = vsyncpa [#allocation6], 0
    %19 = vsyncpa [#allocation9], 0
    %20 = vsyncpa [#allocation4], 0
    // Predicated region
    $region2: #{gru_model_forward.1} parent=1 // pred_check
      _
    $region3: #{gru_model_forward.1} parent=1 // pred_check_branch
      %22 = sbr.rel (0) target = $region5
    $region4: #{gru_model_forward.1} parent=1 // pred_region
      _
    $region5: #{gru_model_forward.1} parent=1 // pred_fallthru
      _
    // Predicated region
    $region6: #{gru_model_forward.1} parent=1 // pred_check
      _
    $region7: #{gru_model_forward.1} parent=1 // pred_check_branch
      %24 = sbr.rel (0) target = $region9
    $region8: #{gru_model_forward.1} parent=1 // pred_region
      _
    $region9: #{gru_model_forward.1} parent=1 // pred_fallthru
      _
    // Predicated region
    $region10: #{gru_model_forward.1} parent=1 // pred_check
      _
    $region11: #{gru_model_forward.1} parent=1 // pred_check_branch
      %26 = sbr.rel (0) target = $region13
    $region12: #{gru_model_forward.1} parent=1 // pred_region
      _
    $region13: #{gru_model_forward.1} parent=1 // pred_fallthru
      _
    // Predicated region
    $region14: #{gru_model_forward.1} parent=1 // pred_check
      _
    $region15: #{gru_model_forward.1} parent=1 // pred_check_branch
      %28 = sbr.rel (0) target = $region17
    $region16: #{gru_model_forward.1} parent=1 // pred_region
      %s30 = ssub.s32 16, 16
      %31 = vsyncadd [#allocation3], %s30
      %s33 = sshll.u32 [#allocation2], 4
      %s34 = int_to_ptr.vmem [resolvable:$true] %s33
      %36 = dma.hbm_to_vmem [thread:$0]  %s3, 16, %s34, [#allocation3]
    $region17: #{gru_model_forward.1} parent=1 // pred_fallthru
      _
    // Predicated region
    $region18: #{gru_model_forward.1} parent=1 // pred_check
      _
    $region19: #{gru_model_forward.1} parent=1 // pred_check_branch
      %38 = sbr.rel (0) target = $region21
    $region20: #{gru_model_forward.1} parent=1 // pred_region
      _
    $region21: #{gru_model_forward.1} parent=1 // pred_fallthru
      _
    // Predicated region
    $region22: #{gru_model_forward.1} parent=1 // pred_check
      _
    $region23: #{gru_model_forward.1} parent=1 // pred_check_branch
      %40 = sbr.rel (0) target = $region25
    $region24: #{gru_model_forward.1} parent=1 // pred_region
      _
    $region25: #{gru_model_forward.1} parent=1 // pred_fallthru
      _
    // Predicated region
    $region26: #{gru_model_forward.1} parent=1 // pred_check
      _
    $region27: #{gru_model_forward.1} parent=1 // pred_check_branch
      %42 = sbr.rel (0) target = $region29
    $region28: #{gru_model_forward.1} parent=1 // pred_region
      %s44 = ssub.s32 512, 512
      %45 = vsyncadd [#allocation6], %s44
      %s46 = sshll.u32 [#allocation5], 4
      %s47 = int_to_ptr.vmem [resolvable:$true] %s46
      %52 = dma.hbm_to_vmem [thread:$0]  %s6, 512, %s47, [#allocation6], 128, 128, 8
    $region29: #{gru_model_forward.1} parent=1 // pred_fallthru
      _
    // Predicated region
    $region30: #{gru_model_forward.1} parent=1 // pred_check
      _
    $region31: #{gru_model_forward.1} parent=1 // pred_check_branch
      %54 = sbr.rel (0) target = $region33
    $region32: #{gru_model_forward.1} parent=1 // pred_region
      _
    $region33: #{gru_model_forward.1} parent=1 // pred_fallthru
      _
    // Predicated region
    $region34: #{gru_model_forward.1} parent=1 // pred_check
      _
    $region35: #{gru_model_forward.1} parent=1 // pred_check_branch
      %56 = sbr.rel (0) target = $region37
    $region36: #{gru_model_forward.1} parent=1 // pred_region
      %s58 = ssub.s32 512, 512
      %59 = vsyncadd [#allocation6], %s58
      %s60 = sshll.u32 [#allocation7], 4
      %s61 = int_to_ptr.vmem [resolvable:$true] %s60
      %66 = dma.hbm_to_vmem [thread:$0]  %s8, 512, %s61, [#allocation6], 128, 128, 8
    $region37: #{gru_model_forward.1} parent=1 // pred_fallthru
      _
    // Predicated region
    $region38: #{gru_model_forward.1} parent=1 // pred_check
      _
    $region39: #{gru_model_forward.1} parent=1 // pred_check_branch
      %68 = sbr.rel (0) target = $region41
    $region40: #{gru_model_forward.1} parent=1 // pred_region
      %s70 = ssub.s32 16, 16
      %71 = vsyncadd [#allocation9], %s70
      %s73 = sshll.u32 [#allocation8], 4
      %s74 = int_to_ptr.vmem [resolvable:$true] %s73
      %76 = dma.hbm_to_vmem [thread:$0]  %s9, 16, %s74, [#allocation9]
    $region41: #{gru_model_forward.1} parent=1 // pred_fallthru
      _
    // Predicated region
    $region42: #{gru_model_forward.1} parent=1 // pred_check
      _
    $region43: #{gru_model_forward.1} parent=1 // pred_check_branch
      %78 = sbr.rel (0) target = $region45
    $region44: #{gru_model_forward.1} parent=1 // pred_region
      %79 = dma.done [#allocation3], 16
    $region45: #{gru_model_forward.1} parent=1 // pred_fallthru
      _
    // Predicated region
    $region46: #{gru_model_forward.1} parent=1 // pred_check
      _
    $region47: #{gru_model_forward.1} parent=1 // pred_check_branch
      %81 = sbr.rel (0) target = $region49
    $region48: #{gru_model_forward.1} parent=1 // pred_region
      %82 = dma.done [#allocation6], 512
    $region49: #{gru_model_forward.1} parent=1 // pred_fallthru
      _
    // Predicated region
    $region50: #{gru_model_forward.1} parent=1 // pred_check
      _
    $region51: #{gru_model_forward.1} parent=1 // pred_check_branch
      %84 = sbr.rel (0) target = $region53
    $region52: #{gru_model_forward.1} parent=1 // pred_region
      %85 = dma.done [#allocation6], 512
    $region53: #{gru_model_forward.1} parent=1 // pred_fallthru
      _
    // Predicated region
    $region54: #{gru_model_forward.1} parent=1 // pred_check
      _
    $region55: #{gru_model_forward.1} parent=1 // pred_check_branch
      %87 = sbr.rel (0) target = $region57
    $region56: #{gru_model_forward.1} parent=1 // pred_region
      %88 = dma.done [#allocation9], 16
    $region57: #{gru_model_forward.1} parent=1 // pred_fallthru
      _
    %v89 = vld [vmem:[%s2] sm:$0xff]
    %v90 = vld [vmem:[%s2 + $0x8] sm:$0xff]
    %v91 = vld [vmem:[%s2 + $0x10] sm:$0xff]
    %v92 = vld [vmem:[%s2 + $0x18] sm:$0xff]
    %v93 = vld [vmem:[#allocation2] sm:$0x1]
    %v94 = vld [vmem:[%s4] sm:$0xff]
    %v95 = vld [vmem:[%s4 + $0x8] sm:$0xff]
    %v96 = vld [vmem:[%s4 + $0x10] sm:$0xff]
    %v97 = vld [vmem:[%s4 + $0x18] sm:$0xff]
    %v98 = vld [vmem:[%s5] sm:$0x1]
    %v99 = vld [vmem:[#allocation5] sm:$0xff]
    %v100 = vld [vmem:[#allocation5 + $0x8] sm:$0xff]
    %v101 = vld [vmem:[#allocation5 + $0x10] sm:$0xff]
    %v102 = vld [vmem:[#allocation5 + $0x18] sm:$0xff]
    %v103 = vld [vmem:[%s7] sm:$0x1]
    %v104 = vld [vmem:[#allocation7] sm:$0xff]
    %v105 = vld [vmem:[#allocation7 + $0x8] sm:$0xff]
    %v106 = vld [vmem:[#allocation7 + $0x10] sm:$0xff]
    %v107 = vld [vmem:[#allocation7 + $0x18] sm:$0xff]
    %v108 = vld [vmem:[#allocation8] sm:$0x1]
    %v109 = vld [vmem:[%s1] sm:$0x3]
    %s110 = scalar_lea.vmem %s1, 2
    %v111 = vld [vmem:[%s110] sm:$0x3]
    %v112 = vld [vmem:[%s0] sm:$0x3]
    %v114 = vlaneseq
    %v115 = vshrl.u32 %v114, 7
    %v116 = vsub.s32 0, %v115
    %v117 = vrot.slane %v93, %v116
    %vm119 = vcmask 261120
    %v121 = vsel %vm119, %v109, 0
    %123 = vmatprep.subr.mxu0 0.0
    %124 = vmatpush1.msra.mxu0 0.0
    %125 = vmatprep.subr.mxu0 0.0
    %126 = vmatpush1.msra.mxu0 0.0
    %127 = vmatprep.subr.mxu0 0.0
    %128 = vmatpush1.msra.mxu0 0.0
    %129 = vmatprep.subr.mxu0 0.0
    %130 = vmatpush1.msra.mxu0 0.0
    %131 = vmatprep.subr.mxu0 0.0
    %132 = vmatpush1.msra.mxu0 0.0
    %133 = vmatprep.subr.mxu0 0.0
    %134 = vmatpush1.msra.mxu0 0.0
    %135 = vmatprep.subr.mxu0 0.0
    %136 = vmatpush1.msra.mxu0 0.0
    %137 = vmatprep.subr.mxu0 0.0
    %138 = vmatpush1.msra.mxu0 0.0
    %139 = vmatprep.subr.mxu0 0.0
    %140 = vmatpush1.msra.mxu0 0.0
    %141 = vmatprep.subr.mxu0 0.0
    %142 = vmatpush1.msra.mxu0 0.0
    %143 = vmatprep.subr.mxu0 0.0
    %144 = vmatpush1.msra.mxu0 0.0
    %145 = vmatprep.subr.mxu0 0.0
    %146 = vmatpush1.msra.mxu0 0.0
    %147 = vmatprep.subr.mxu0 0.0
    %148 = vmatpush1.msra.mxu0 %v92
    %149 = vmatprep.subr.mxu0 0.0
    %150 = vmatpush1.msra.mxu0 %v91
    %151 = vmatprep.subr.mxu0 0.0
    %152 = vmatpush1.msra.mxu0 %v90
    %153 = vmatprep.subr.mxu0 0.0
    %154 = vmatpush1.msra.mxu0 %v89
    %155 = vmatprep.subr.mxu0 0.0
    %156 = vmatpush2.msra.mxu0 0.0
    %157 = vmatprep.subr.mxu0 0.0
    %158 = vmatpush2.msra.mxu0 0.0
    %159 = vmatprep.subr.mxu0 0.0
    %160 = vmatpush2.msra.mxu0 0.0
    %161 = vmatprep.subr.mxu0 0.0
    %162 = vmatpush2.msra.mxu0 0.0
    %163 = vmatprep.subr.mxu0 0.0
    %164 = vmatpush2.msra.mxu0 0.0
    %165 = vmatprep.subr.mxu0 0.0
    %166 = vmatpush2.msra.mxu0 0.0
    %167 = vmatprep.subr.mxu0 0.0
    %168 = vmatpush2.msra.mxu0 0.0
    %169 = vmatprep.subr.mxu0 0.0
    %170 = vmatpush2.msra.mxu0 0.0
    %171 = vmatprep.subr.mxu0 0.0
    %172 = vmatpush2.msra.mxu0 0.0
    %173 = vmatprep.subr.mxu0 0.0
    %174 = vmatpush2.msra.mxu0 0.0
    %175 = vmatprep.subr.mxu0 0.0
    %176 = vmatpush2.msra.mxu0 0.0
    %177 = vmatprep.subr.mxu0 0.0
    %178 = vmatpush2.msra.mxu0 0.0
    %179 = vmatprep.subr.mxu0 0.0
    %180 = vmatpush2.msra.mxu0 0.0
    %181 = vmatprep.subr.mxu0 0.0
    %182 = vmatpush2.msra.mxu0 0.0
    %183 = vmatprep.subr.mxu0 0.0
    %184 = vmatpush2.msra.mxu0 0.0
    %185 = vmatprep.subr.mxu0 0.0
    %186 = vmatpush2.msra.mxu0 0.0
    %187 = vmatprep.mubr.f32.mxu0 0.0
    %188 = vmatmul.mubr.f32.gmra.mxu0 %v121
    %v189 = vpop.f32.mrf.mxu0
    %v190 = vadd.f32 %v117, %v189
    %v191 = vpop.f32.mrf.mxu0
    %192 = vdwg.mxu0
    %v193 = vadd.f32 %v112, %v190
    %v194 = vxor.u32 %v193, 2147483648
    %v195 = vmul.f32 %v194, 1.442695
    %v196 = vpow.pop %v195
    %v197 = vadd.f32 %v196, 1.0
    %v198 = vrcp.pop %v197
    %v199 = vmul.f32 1.0, %v198
    %201 = vrot.lane.b32.xlu0 %v190, 64
    %v202 = vpop.permute.xlu0 %201
    %v204 = vmul.f32 %v199, %v202
    %206 = vrot.lane.b32.xlu0 %v204, 64
    %v207 = vpop.permute.xlu0 %206
    %v209 = vadd.f32 %v112, %v207
    %v210 = vtanh.pop %v209
    %v211 = vsub.f32 1.0, %v199
    %213 = vrot.lane.b32.xlu0 %v210, 96
    %v214 = vpop.permute.xlu0 %213
    %v216 = vmul.f32 %v211, %v214
    %217 = vrot.lane.b32.xlu0 %v109, 32
    %v218 = vpop.permute.xlu0 %217
    %v220 = vmul.f32 %v199, %v218
    %v221 = vadd.f32 %v216, %v220
    %v223 = vlaneseq
    %v224 = vshrl.u32 %v223, 7
    %v225 = vsub.s32 0, %v224
    %v226 = vrot.slane %v98, %v225
    %229 = vrot.lane.b32.xlu0 %v221, 96
    %v230 = vpop.permute.xlu0 %229
    %v231 = vsel %vm119, %v230, 0
    %233 = vmatprep.subr.mxu0 0.0
    %234 = vmatpush1.msra.mxu0 0.0
    %235 = vmatprep.subr.mxu0 0.0
    %236 = vmatpush1.msra.mxu0 0.0
    %237 = vmatprep.subr.mxu0 0.0
    %238 = vmatpush1.msra.mxu0 0.0
    %239 = vmatprep.subr.mxu0 0.0
    %240 = vmatpush1.msra.mxu0 0.0
    %241 = vmatprep.subr.mxu0 0.0
    %242 = vmatpush1.msra.mxu0 0.0
    %243 = vmatprep.subr.mxu0 0.0
    %244 = vmatpush1.msra.mxu0 0.0
    %245 = vmatprep.subr.mxu0 0.0
    %246 = vmatpush1.msra.mxu0 0.0
    %247 = vmatprep.subr.mxu0 0.0
    %248 = vmatpush1.msra.mxu0 0.0
    %249 = vmatprep.subr.mxu0 0.0
    %250 = vmatpush1.msra.mxu0 0.0
    %251 = vmatprep.subr.mxu0 0.0
    %252 = vmatpush1.msra.mxu0 0.0
    %253 = vmatprep.subr.mxu0 0.0
    %254 = vmatpush1.msra.mxu0 0.0
    %255 = vmatprep.subr.mxu0 0.0
    %256 = vmatpush1.msra.mxu0 0.0
    %257 = vmatprep.subr.mxu0 0.0
    %258 = vmatpush1.msra.mxu0 %v97
    %259 = vmatprep.subr.mxu0 0.0
    %260 = vmatpush1.msra.mxu0 %v96
    %261 = vmatprep.subr.mxu0 0.0
    %262 = vmatpush1.msra.mxu0 %v95
    %263 = vmatprep.subr.mxu0 0.0
    %264 = vmatpush1.msra.mxu0 %v94
    %265 = vmatprep.subr.mxu0 0.0
    %266 = vmatpush2.msra.mxu0 0.0
    %267 = vmatprep.subr.mxu0 0.0
    %268 = vmatpush2.msra.mxu0 0.0
    %269 = vmatprep.subr.mxu0 0.0
    %270 = vmatpush2.msra.mxu0 0.0
    %271 = vmatprep.subr.mxu0 0.0
    %272 = vmatpush2.msra.mxu0 0.0
    %273 = vmatprep.subr.mxu0 0.0
    %274 = vmatpush2.msra.mxu0 0.0
    %275 = vmatprep.subr.mxu0 0.0
    %276 = vmatpush2.msra.mxu0 0.0
    %277 = vmatprep.subr.mxu0 0.0
    %278 = vmatpush2.msra.mxu0 0.0
    %279 = vmatprep.subr.mxu0 0.0
    %280 = vmatpush2.msra.mxu0 0.0
    %281 = vmatprep.subr.mxu0 0.0
    %282 = vmatpush2.msra.mxu0 0.0
    %283 = vmatprep.subr.mxu0 0.0
    %284 = vmatpush2.msra.mxu0 0.0
    %285 = vmatprep.subr.mxu0 0.0
    %286 = vmatpush2.msra.mxu0 0.0
    %287 = vmatprep.subr.mxu0 0.0
    %288 = vmatpush2.msra.mxu0 0.0
    %289 = vmatprep.subr.mxu0 0.0
    %290 = vmatpush2.msra.mxu0 0.0
    %291 = vmatprep.subr.mxu0 0.0
    %292 = vmatpush2.msra.mxu0 0.0
    %293 = vmatprep.subr.mxu0 0.0
    %294 = vmatpush2.msra.mxu0 0.0
    %295 = vmatprep.subr.mxu0 0.0
    %296 = vmatpush2.msra.mxu0 0.0
    %297 = vmatprep.mubr.f32.mxu0 0.0
    %298 = vmatmul.mubr.f32.gmra.mxu0 %v231
    %v299 = vpop.f32.mrf.mxu0
    %v300 = vadd.f32 %v226, %v299
    %v301 = vpop.f32.mrf.mxu0
    %302 = vdwg.mxu0
    %v304 = vlaneseq
    %v305 = vshrl.u32 %v304, 7
    %v306 = vsub.s32 0, %v305
    %v307 = vrot.slane %v103, %v306
    %v310 = vsel %vm119, %v111, 0
    %312 = vmatprep.subr.mxu0 0.0
    %313 = vmatpush1.msra.mxu0 0.0
    %314 = vmatprep.subr.mxu0 0.0
    %315 = vmatpush1.msra.mxu0 0.0
    %316 = vmatprep.subr.mxu0 0.0
    %317 = vmatpush1.msra.mxu0 0.0
    %318 = vmatprep.subr.mxu0 0.0
    %319 = vmatpush1.msra.mxu0 0.0
    %320 = vmatprep.subr.mxu0 0.0
    %321 = vmatpush1.msra.mxu0 0.0
    %322 = vmatprep.subr.mxu0 0.0
    %323 = vmatpush1.msra.mxu0 0.0
    %324 = vmatprep.subr.mxu0 0.0
    %325 = vmatpush1.msra.mxu0 0.0
    %326 = vmatprep.subr.mxu0 0.0
    %327 = vmatpush1.msra.mxu0 0.0
    %328 = vmatprep.subr.mxu0 0.0
    %329 = vmatpush1.msra.mxu0 0.0
    %330 = vmatprep.subr.mxu0 0.0
    %331 = vmatpush1.msra.mxu0 0.0
    %332 = vmatprep.subr.mxu0 0.0
    %333 = vmatpush1.msra.mxu0 0.0
    %334 = vmatprep.subr.mxu0 0.0
    %335 = vmatpush1.msra.mxu0 0.0
    %336 = vmatprep.subr.mxu0 0.0
    %337 = vmatpush1.msra.mxu0 %v102
    %338 = vmatprep.subr.mxu0 0.0
    %339 = vmatpush1.msra.mxu0 %v101
    %340 = vmatprep.subr.mxu0 0.0
    %341 = vmatpush1.msra.mxu0 %v100
    %342 = vmatprep.subr.mxu0 0.0
    %343 = vmatpush1.msra.mxu0 %v99
    %344 = vmatprep.subr.mxu0 0.0
    %345 = vmatpush2.msra.mxu0 0.0
    %346 = vmatprep.subr.mxu0 0.0
    %347 = vmatpush2.msra.mxu0 0.0
    %348 = vmatprep.subr.mxu0 0.0
    %349 = vmatpush2.msra.mxu0 0.0
    %350 = vmatprep.subr.mxu0 0.0
    %351 = vmatpush2.msra.mxu0 0.0
    %352 = vmatprep.subr.mxu0 0.0
    %353 = vmatpush2.msra.mxu0 0.0
    %354 = vmatprep.subr.mxu0 0.0
    %355 = vmatpush2.msra.mxu0 0.0
    %356 = vmatprep.subr.mxu0 0.0
    %357 = vmatpush2.msra.mxu0 0.0
    %358 = vmatprep.subr.mxu0 0.0
    %359 = vmatpush2.msra.mxu0 0.0
    %360 = vmatprep.subr.mxu0 0.0
    %361 = vmatpush2.msra.mxu0 0.0
    %362 = vmatprep.subr.mxu0 0.0
    %363 = vmatpush2.msra.mxu0 0.0
    %364 = vmatprep.subr.mxu0 0.0
    %365 = vmatpush2.msra.mxu0 0.0
    %366 = vmatprep.subr.mxu0 0.0
    %367 = vmatpush2.msra.mxu0 0.0
    %368 = vmatprep.subr.mxu0 0.0
    %369 = vmatpush2.msra.mxu0 0.0
    %370 = vmatprep.subr.mxu0 0.0
    %371 = vmatpush2.msra.mxu0 0.0
    %372 = vmatprep.subr.mxu0 0.0
    %373 = vmatpush2.msra.mxu0 0.0
    %374 = vmatprep.subr.mxu0 0.0
    %375 = vmatpush2.msra.mxu0 0.0
    %376 = vmatprep.mubr.f32.mxu0 0.0
    %377 = vmatmul.mubr.f32.gmra.mxu0 %v310
    %v378 = vpop.f32.mrf.mxu0
    %v379 = vadd.f32 %v307, %v378
    %v380 = vpop.f32.mrf.mxu0
    %381 = vdwg.mxu0
    %v382 = vadd.f32 %v300, %v379
    %v383 = vxor.u32 %v382, 2147483648
    %v384 = vmul.f32 %v383, 1.442695
    %v385 = vpow.pop %v384
    %v386 = vadd.f32 %v385, 1.0
    %v387 = vrcp.pop %v386
    %v388 = vmul.f32 1.0, %v387
    %390 = vrot.lane.b32.xlu0 %v379, 64
    %v391 = vpop.permute.xlu0 %390
    %v393 = vmul.f32 %v388, %v391
    %395 = vrot.lane.b32.xlu0 %v393, 64
    %v396 = vpop.permute.xlu0 %395
    %v398 = vadd.f32 %v300, %v396
    %v399 = vtanh.pop %v398
    %v400 = vsub.f32 1.0, %v388
    %402 = vrot.lane.b32.xlu0 %v399, 96
    %v403 = vpop.permute.xlu0 %402
    %v405 = vmul.f32 %v400, %v403
    %406 = vrot.lane.b32.xlu0 %v111, 32
    %v407 = vpop.permute.xlu0 %406
    %v409 = vmul.f32 %v388, %v407
    %v410 = vadd.f32 %v405, %v409
    %v412 = vlaneseq
    %v413 = vshrl.u32 %v412, 7
    %v414 = vsub.s32 0, %v413
    %v415 = vrot.slane %v108, %v414
    %418 = vrot.lane.b32.xlu0 %v410, 96
    %v419 = vpop.permute.xlu0 %418
    %v420 = vsel %vm119, %v419, 0
    %422 = vmatprep.subr.mxu0 0.0
    %423 = vmatpush1.msra.mxu0 0.0
    %424 = vmatprep.subr.mxu0 0.0
    %425 = vmatpush1.msra.mxu0 0.0
    %426 = vmatprep.subr.mxu0 0.0
    %427 = vmatpush1.msra.mxu0 0.0
    %428 = vmatprep.subr.mxu0 0.0
    %429 = vmatpush1.msra.mxu0 0.0
    %430 = vmatprep.subr.mxu0 0.0
    %431 = vmatpush1.msra.mxu0 0.0
    %432 = vmatprep.subr.mxu0 0.0
    %433 = vmatpush1.msra.mxu0 0.0
    %434 = vmatprep.subr.mxu0 0.0
    %435 = vmatpush1.msra.mxu0 0.0
    %436 = vmatprep.subr.mxu0 0.0
    %437 = vmatpush1.msra.mxu0 0.0
    %438 = vmatprep.subr.mxu0 0.0
    %439 = vmatpush1.msra.mxu0 0.0
    %440 = vmatprep.subr.mxu0 0.0
    %441 = vmatpush1.msra.mxu0 0.0
    %442 = vmatprep.subr.mxu0 0.0
    %443 = vmatpush1.msra.mxu0 0.0
    %444 = vmatprep.subr.mxu0 0.0
    %445 = vmatpush1.msra.mxu0 0.0
    %446 = vmatprep.subr.mxu0 0.0
    %447 = vmatpush1.msra.mxu0 %v107
    %448 = vmatprep.subr.mxu0 0.0
    %449 = vmatpush1.msra.mxu0 %v106
    %450 = vmatprep.subr.mxu0 0.0
    %451 = vmatpush1.msra.mxu0 %v105
    %452 = vmatprep.subr.mxu0 0.0
    %453 = vmatpush1.msra.mxu0 %v104
    %454 = vmatprep.subr.mxu0 0.0
    %455 = vmatpush2.msra.mxu0 0.0
    %456 = vmatprep.subr.mxu0 0.0
    %457 = vmatpush2.msra.mxu0 0.0
    %458 = vmatprep.subr.mxu0 0.0
    %459 = vmatpush2.msra.mxu0 0.0
    %460 = vmatprep.subr.mxu0 0.0
    %461 = vmatpush2.msra.mxu0 0.0
    %462 = vmatprep.subr.mxu0 0.0
    %463 = vmatpush2.msra.mxu0 0.0
    %464 = vmatprep.subr.mxu0 0.0
    %465 = vmatpush2.msra.mxu0 0.0
    %466 = vmatprep.subr.mxu0 0.0
    %467 = vmatpush2.msra.mxu0 0.0
    %468 = vmatprep.subr.mxu0 0.0
    %469 = vmatpush2.msra.mxu0 0.0
    %470 = vmatprep.subr.mxu0 0.0
    %471 = vmatpush2.msra.mxu0 0.0
    %472 = vmatprep.subr.mxu0 0.0
    %473 = vmatpush2.msra.mxu0 0.0
    %474 = vmatprep.subr.mxu0 0.0
    %475 = vmatpush2.msra.mxu0 0.0
    %476 = vmatprep.subr.mxu0 0.0
    %477 = vmatpush2.msra.mxu0 0.0
    %478 = vmatprep.subr.mxu0 0.0
    %479 = vmatpush2.msra.mxu0 0.0
    %480 = vmatprep.subr.mxu0 0.0
    %481 = vmatpush2.msra.mxu0 0.0
    %482 = vmatprep.subr.mxu0 0.0
    %483 = vmatpush2.msra.mxu0 0.0
    %484 = vmatprep.subr.mxu0 0.0
    %485 = vmatpush2.msra.mxu0 0.0
    %486 = vmatprep.mubr.f32.mxu0 0.0
    %487 = vmatmul.mubr.f32.gmra.mxu0 %v420
    %v488 = vpop.f32.mrf.mxu0
    %v489 = vadd.f32 %v415, %v488
    %v490 = vpop.f32.mrf.mxu0
    %491 = vdwg.mxu0
    %492 = vst [vmem:[%s10] sm:$0x3] %v489
    %s493 = scalar_lea.vmem %s0, 2
    %v494 = vld [vmem:[%s493] sm:$0x3]
    %495 = vmatprep.subr.mxu0 0.0
    %496 = vmatpush1.msra.mxu0 0.0
    %497 = vmatprep.subr.mxu0 0.0
    %498 = vmatpush1.msra.mxu0 0.0
    %499 = vmatprep.subr.mxu0 0.0
    %500 = vmatpush1.msra.mxu0 0.0
    %501 = vmatprep.subr.mxu0 0.0
    %502 = vmatpush1.msra.mxu0 0.0
    %503 = vmatprep.subr.mxu0 0.0
    %504 = vmatpush1.msra.mxu0 0.0
    %505 = vmatprep.subr.mxu0 0.0
    %506 = vmatpush1.msra.mxu0 0.0
    %507 = vmatprep.subr.mxu0 0.0
    %508 = vmatpush1.msra.mxu0 0.0
    %509 = vmatprep.subr.mxu0 0.0
    %510 = vmatpush1.msra.mxu0 0.0
    %511 = vmatprep.subr.mxu0 0.0
    %512 = vmatpush1.msra.mxu0 0.0
    %513 = vmatprep.subr.mxu0 0.0
    %514 = vmatpush1.msra.mxu0 0.0
    %515 = vmatprep.subr.mxu0 0.0
    %516 = vmatpush1.msra.mxu0 0.0
    %517 = vmatprep.subr.mxu0 0.0
    %518 = vmatpush1.msra.mxu0 0.0
    %519 = vmatprep.subr.mxu0 0.0
    %520 = vmatpush1.msra.mxu0 %v92
    %521 = vmatprep.subr.mxu0 0.0
    %522 = vmatpush1.msra.mxu0 %v91
    %523 = vmatprep.subr.mxu0 0.0
    %524 = vmatpush1.msra.mxu0 %v90
    %525 = vmatprep.subr.mxu0 0.0
    %526 = vmatpush1.msra.mxu0 %v89
    %527 = vmatprep.subr.mxu0 0.0
    %528 = vmatpush2.msra.mxu0 0.0
    %529 = vmatprep.subr.mxu0 0.0
    %530 = vmatpush2.msra.mxu0 0.0
    %531 = vmatprep.subr.mxu0 0.0
    %532 = vmatpush2.msra.mxu0 0.0
    %533 = vmatprep.subr.mxu0 0.0
    %534 = vmatpush2.msra.mxu0 0.0
    %535 = vmatprep.subr.mxu0 0.0
    %536 = vmatpush2.msra.mxu0 0.0
    %537 = vmatprep.subr.mxu0 0.0
    %538 = vmatpush2.msra.mxu0 0.0
    %539 = vmatprep.subr.mxu0 0.0
    %540 = vmatpush2.msra.mxu0 0.0
    %541 = vmatprep.subr.mxu0 0.0
    %542 = vmatpush2.msra.mxu0 0.0
    %543 = vmatprep.subr.mxu0 0.0
    %544 = vmatpush2.msra.mxu0 0.0
    %545 = vmatprep.subr.mxu0 0.0
    %546 = vmatpush2.msra.mxu0 0.0
    %547 = vmatprep.subr.mxu0 0.0
    %548 = vmatpush2.msra.mxu0 0.0
    %549 = vmatprep.subr.mxu0 0.0
    %550 = vmatpush2.msra.mxu0 0.0
    %551 = vmatprep.subr.mxu0 0.0
    %552 = vmatpush2.msra.mxu0 0.0
    %553 = vmatprep.subr.mxu0 0.0
    %554 = vmatpush2.msra.mxu0 0.0
    %555 = vmatprep.subr.mxu0 0.0
    %556 = vmatpush2.msra.mxu0 0.0
    %557 = vmatprep.subr.mxu0 0.0
    %558 = vmatpush2.msra.mxu0 0.0
    %559 = vmatprep.mubr.f32.mxu0 0.0
    %560 = vmatmul.mubr.f32.gmra.mxu0 %v231
    %v561 = vpop.f32.mrf.mxu0
    %v562 = vadd.f32 %v117, %v561
    %v563 = vpop.f32.mrf.mxu0
    %564 = vdwg.mxu0
    %v565 = vadd.f32 %v494, %v562
    %v566 = vxor.u32 %v565, 2147483648
    %v567 = vmul.f32 %v566, 1.442695
    %v568 = vpow.pop %v567
    %v569 = vadd.f32 %v568, 1.0
    %v570 = vrcp.pop %v569
    %v571 = vmul.f32 1.0, %v570
    %573 = vrot.lane.b32.xlu0 %v562, 64
    %v574 = vpop.permute.xlu0 %573
    %v576 = vmul.f32 %v571, %v574
    %578 = vrot.lane.b32.xlu0 %v576, 64
    %v579 = vpop.permute.xlu0 %578
    %v581 = vadd.f32 %v494, %v579
    %v582 = vtanh.pop %v581
    %v583 = vsub.f32 1.0, %v571
    %585 = vrot.lane.b32.xlu0 %v582, 96
    %v586 = vpop.permute.xlu0 %585
    %v588 = vmul.f32 %v583, %v586
    %v589 = vmul.f32 %v571, %v221
    %v590 = vadd.f32 %v588, %v589
    %592 = vrot.lane.b32.xlu0 %v590, 96
    %v593 = vpop.permute.xlu0 %592
    %v594 = vsel %vm119, %v593, 0
    %596 = vmatprep.subr.mxu0 0.0
    %597 = vmatpush1.msra.mxu0 0.0
    %598 = vmatprep.subr.mxu0 0.0
    %599 = vmatpush1.msra.mxu0 0.0
    %600 = vmatprep.subr.mxu0 0.0
    %601 = vmatpush1.msra.mxu0 0.0
    %602 = vmatprep.subr.mxu0 0.0
    %603 = vmatpush1.msra.mxu0 0.0
    %604 = vmatprep.subr.mxu0 0.0
    %605 = vmatpush1.msra.mxu0 0.0
    %606 = vmatprep.subr.mxu0 0.0
    %607 = vmatpush1.msra.mxu0 0.0
    %608 = vmatprep.subr.mxu0 0.0
    %609 = vmatpush1.msra.mxu0 0.0
    %610 = vmatprep.subr.mxu0 0.0
    %611 = vmatpush1.msra.mxu0 0.0
    %612 = vmatprep.subr.mxu0 0.0
    %613 = vmatpush1.msra.mxu0 0.0
    %614 = vmatprep.subr.mxu0 0.0
    %615 = vmatpush1.msra.mxu0 0.0
    %616 = vmatprep.subr.mxu0 0.0
    %617 = vmatpush1.msra.mxu0 0.0
    %618 = vmatprep.subr.mxu0 0.0
    %619 = vmatpush1.msra.mxu0 0.0
    %620 = vmatprep.subr.mxu0 0.0
    %621 = vmatpush1.msra.mxu0 %v97
    %622 = vmatprep.subr.mxu0 0.0
    %623 = vmatpush1.msra.mxu0 %v96
    %624 = vmatprep.subr.mxu0 0.0
    %625 = vmatpush1.msra.mxu0 %v95
    %626 = vmatprep.subr.mxu0 0.0
    %627 = vmatpush1.msra.mxu0 %v94
    %628 = vmatprep.subr.mxu0 0.0
    %629 = vmatpush2.msra.mxu0 0.0
    %630 = vmatprep.subr.mxu0 0.0
    %631 = vmatpush2.msra.mxu0 0.0
    %632 = vmatprep.subr.mxu0 0.0
    %633 = vmatpush2.msra.mxu0 0.0
    %634 = vmatprep.subr.mxu0 0.0
    %635 = vmatpush2.msra.mxu0 0.0
    %636 = vmatprep.subr.mxu0 0.0
    %637 = vmatpush2.msra.mxu0 0.0
    %638 = vmatprep.subr.mxu0 0.0
    %639 = vmatpush2.msra.mxu0 0.0
    %640 = vmatprep.subr.mxu0 0.0
    %641 = vmatpush2.msra.mxu0 0.0
    %642 = vmatprep.subr.mxu0 0.0
    %643 = vmatpush2.msra.mxu0 0.0
    %644 = vmatprep.subr.mxu0 0.0
    %645 = vmatpush2.msra.mxu0 0.0
    %646 = vmatprep.subr.mxu0 0.0
    %647 = vmatpush2.msra.mxu0 0.0
    %648 = vmatprep.subr.mxu0 0.0
    %649 = vmatpush2.msra.mxu0 0.0
    %650 = vmatprep.subr.mxu0 0.0
    %651 = vmatpush2.msra.mxu0 0.0
    %652 = vmatprep.subr.mxu0 0.0
    %653 = vmatpush2.msra.mxu0 0.0
    %654 = vmatprep.subr.mxu0 0.0
    %655 = vmatpush2.msra.mxu0 0.0
    %656 = vmatprep.subr.mxu0 0.0
    %657 = vmatpush2.msra.mxu0 0.0
    %658 = vmatprep.subr.mxu0 0.0
    %659 = vmatpush2.msra.mxu0 0.0
    %660 = vmatprep.mubr.f32.mxu0 0.0
    %661 = vmatmul.mubr.f32.gmra.mxu0 %v594
    %v662 = vpop.f32.mrf.mxu0
    %v663 = vadd.f32 %v226, %v662
    %v664 = vpop.f32.mrf.mxu0
    %665 = vdwg.mxu0
    %666 = vmatprep.subr.mxu0 0.0
    %667 = vmatpush1.msra.mxu0 0.0
    %668 = vmatprep.subr.mxu0 0.0
    %669 = vmatpush1.msra.mxu0 0.0
    %670 = vmatprep.subr.mxu0 0.0
    %671 = vmatpush1.msra.mxu0 0.0
    %672 = vmatprep.subr.mxu0 0.0
    %673 = vmatpush1.msra.mxu0 0.0
    %674 = vmatprep.subr.mxu0 0.0
    %675 = vmatpush1.msra.mxu0 0.0
    %676 = vmatprep.subr.mxu0 0.0
    %677 = vmatpush1.msra.mxu0 0.0
    %678 = vmatprep.subr.mxu0 0.0
    %679 = vmatpush1.msra.mxu0 0.0
    %680 = vmatprep.subr.mxu0 0.0
    %681 = vmatpush1.msra.mxu0 0.0
    %682 = vmatprep.subr.mxu0 0.0
    %683 = vmatpush1.msra.mxu0 0.0
    %684 = vmatprep.subr.mxu0 0.0
    %685 = vmatpush1.msra.mxu0 0.0
    %686 = vmatprep.subr.mxu0 0.0
    %687 = vmatpush1.msra.mxu0 0.0
    %688 = vmatprep.subr.mxu0 0.0
    %689 = vmatpush1.msra.mxu0 0.0
    %690 = vmatprep.subr.mxu0 0.0
    %691 = vmatpush1.msra.mxu0 %v102
    %692 = vmatprep.subr.mxu0 0.0
    %693 = vmatpush1.msra.mxu0 %v101
    %694 = vmatprep.subr.mxu0 0.0
    %695 = vmatpush1.msra.mxu0 %v100
    %696 = vmatprep.subr.mxu0 0.0
    %697 = vmatpush1.msra.mxu0 %v99
    %698 = vmatprep.subr.mxu0 0.0
    %699 = vmatpush2.msra.mxu0 0.0
    %700 = vmatprep.subr.mxu0 0.0
    %701 = vmatpush2.msra.mxu0 0.0
    %702 = vmatprep.subr.mxu0 0.0
    %703 = vmatpush2.msra.mxu0 0.0
    %704 = vmatprep.subr.mxu0 0.0
    %705 = vmatpush2.msra.mxu0 0.0
    %706 = vmatprep.subr.mxu0 0.0
    %707 = vmatpush2.msra.mxu0 0.0
    %708 = vmatprep.subr.mxu0 0.0
    %709 = vmatpush2.msra.mxu0 0.0
    %710 = vmatprep.subr.mxu0 0.0
    %711 = vmatpush2.msra.mxu0 0.0
    %712 = vmatprep.subr.mxu0 0.0
    %713 = vmatpush2.msra.mxu0 0.0
    %714 = vmatprep.subr.mxu0 0.0
    %715 = vmatpush2.msra.mxu0 0.0
    %716 = vmatprep.subr.mxu0 0.0
    %717 = vmatpush2.msra.mxu0 0.0
    %718 = vmatprep.subr.mxu0 0.0
    %719 = vmatpush2.msra.mxu0 0.0
    %720 = vmatprep.subr.mxu0 0.0
    %721 = vmatpush2.msra.mxu0 0.0
    %722 = vmatprep.subr.mxu0 0.0
    %723 = vmatpush2.msra.mxu0 0.0
    %724 = vmatprep.subr.mxu0 0.0
    %725 = vmatpush2.msra.mxu0 0.0
    %726 = vmatprep.subr.mxu0 0.0
    %727 = vmatpush2.msra.mxu0 0.0
    %728 = vmatprep.subr.mxu0 0.0
    %729 = vmatpush2.msra.mxu0 0.0
    %730 = vmatprep.mubr.f32.mxu0 0.0
    %731 = vmatmul.mubr.f32.gmra.mxu0 %v420
    %v732 = vpop.f32.mrf.mxu0
    %v733 = vadd.f32 %v307, %v732
    %v734 = vpop.f32.mrf.mxu0
    %735 = vdwg.mxu0
    %v736 = vadd.f32 %v663, %v733
    %v737 = vxor.u32 %v736, 2147483648
    %v738 = vmul.f32 %v737, 1.442695
    %v739 = vpow.pop %v738
    %v740 = vadd.f32 %v739, 1.0
    %v741 = vrcp.pop %v740
    %v742 = vmul.f32 1.0, %v741
    %744 = vrot.lane.b32.xlu0 %v733, 64
    %v745 = vpop.permute.xlu0 %744
    %v747 = vmul.f32 %v742, %v745
    %749 = vrot.lane.b32.xlu0 %v747, 64
    %v750 = vpop.permute.xlu0 %749
    %v752 = vadd.f32 %v663, %v750
    %v753 = vtanh.pop %v752
    %v754 = vsub.f32 1.0, %v742
    %756 = vrot.lane.b32.xlu0 %v753, 96
    %v757 = vpop.permute.xlu0 %756
    %v759 = vmul.f32 %v754, %v757
    %v760 = vmul.f32 %v742, %v410
    %v761 = vadd.f32 %v759, %v760
    %763 = vrot.lane.b32.xlu0 %v761, 96
    %v764 = vpop.permute.xlu0 %763
    %v765 = vsel %vm119, %v764, 0
    %767 = vmatprep.subr.mxu0 0.0
    %768 = vmatpush1.msra.mxu0 0.0
    %769 = vmatprep.subr.mxu0 0.0
    %770 = vmatpush1.msra.mxu0 0.0
    %771 = vmatprep.subr.mxu0 0.0
    %772 = vmatpush1.msra.mxu0 0.0
    %773 = vmatprep.subr.mxu0 0.0
    %774 = vmatpush1.msra.mxu0 0.0
    %775 = vmatprep.subr.mxu0 0.0
    %776 = vmatpush1.msra.mxu0 0.0
    %777 = vmatprep.subr.mxu0 0.0
    %778 = vmatpush1.msra.mxu0 0.0
    %779 = vmatprep.subr.mxu0 0.0
    %780 = vmatpush1.msra.mxu0 0.0
    %781 = vmatprep.subr.mxu0 0.0
    %782 = vmatpush1.msra.mxu0 0.0
    %783 = vmatprep.subr.mxu0 0.0
    %784 = vmatpush1.msra.mxu0 0.0
    %785 = vmatprep.subr.mxu0 0.0
    %786 = vmatpush1.msra.mxu0 0.0
    %787 = vmatprep.subr.mxu0 0.0
    %788 = vmatpush1.msra.mxu0 0.0
    %789 = vmatprep.subr.mxu0 0.0
    %790 = vmatpush1.msra.mxu0 0.0
    %791 = vmatprep.subr.mxu0 0.0
    %792 = vmatpush1.msra.mxu0 %v107
    %793 = vmatprep.subr.mxu0 0.0
    %794 = vmatpush1.msra.mxu0 %v106
    %795 = vmatprep.subr.mxu0 0.0
    %796 = vmatpush1.msra.mxu0 %v105
    %797 = vmatprep.subr.mxu0 0.0
    %798 = vmatpush1.msra.mxu0 %v104
    %799 = vmatprep.subr.mxu0 0.0
    %800 = vmatpush2.msra.mxu0 0.0
    %801 = vmatprep.subr.mxu0 0.0
    %802 = vmatpush2.msra.mxu0 0.0
    %803 = vmatprep.subr.mxu0 0.0
    %804 = vmatpush2.msra.mxu0 0.0
    %805 = vmatprep.subr.mxu0 0.0
    %806 = vmatpush2.msra.mxu0 0.0
    %807 = vmatprep.subr.mxu0 0.0
    %808 = vmatpush2.msra.mxu0 0.0
    %809 = vmatprep.subr.mxu0 0.0
    %810 = vmatpush2.msra.mxu0 0.0
    %811 = vmatprep.subr.mxu0 0.0
    %812 = vmatpush2.msra.mxu0 0.0
    %813 = vmatprep.subr.mxu0 0.0
    %814 = vmatpush2.msra.mxu0 0.0
    %815 = vmatprep.subr.mxu0 0.0
    %816 = vmatpush2.msra.mxu0 0.0
    %817 = vmatprep.subr.mxu0 0.0
    %818 = vmatpush2.msra.mxu0 0.0
    %819 = vmatprep.subr.mxu0 0.0
    %820 = vmatpush2.msra.mxu0 0.0
    %821 = vmatprep.subr.mxu0 0.0
    %822 = vmatpush2.msra.mxu0 0.0
    %823 = vmatprep.subr.mxu0 0.0
    %824 = vmatpush2.msra.mxu0 0.0
    %825 = vmatprep.subr.mxu0 0.0
    %826 = vmatpush2.msra.mxu0 0.0
    %827 = vmatprep.subr.mxu0 0.0
    %828 = vmatpush2.msra.mxu0 0.0
    %829 = vmatprep.subr.mxu0 0.0
    %830 = vmatpush2.msra.mxu0 0.0
    %831 = vmatprep.mubr.f32.mxu0 0.0
    %832 = vmatmul.mubr.f32.gmra.mxu0 %v765
    %v833 = vpop.f32.mrf.mxu0
    %v834 = vadd.f32 %v415, %v833
    %v835 = vpop.f32.mrf.mxu0
    %836 = vdwg.mxu0
    %s837 = scalar_lea.vmem %s10, 2
    %838 = vst [vmem:[%s837] sm:$0x3] %v834
    %s839 = scalar_lea.vmem %s0, 4
    %v840 = vld [vmem:[%s839] sm:$0x3]
    %841 = vmatprep.subr.mxu0 0.0
    %842 = vmatpush1.msra.mxu0 0.0
    %843 = vmatprep.subr.mxu0 0.0
    %844 = vmatpush1.msra.mxu0 0.0
    %845 = vmatprep.subr.mxu0 0.0
    %846 = vmatpush1.msra.mxu0 0.0
    %847 = vmatprep.subr.mxu0 0.0
    %848 = vmatpush1.msra.mxu0 0.0
    %849 = vmatprep.subr.mxu0 0.0
    %850 = vmatpush1.msra.mxu0 0.0
    %851 = vmatprep.subr.mxu0 0.0
    %852 = vmatpush1.msra.mxu0 0.0
    %853 = vmatprep.subr.mxu0 0.0
    %854 = vmatpush1.msra.mxu0 0.0
    %855 = vmatprep.subr.mxu0 0.0
    %856 = vmatpush1.msra.mxu0 0.0
    %857 = vmatprep.subr.mxu0 0.0
    %858 = vmatpush1.msra.mxu0 0.0
    %859 = vmatprep.subr.mxu0 0.0
    %860 = vmatpush1.msra.mxu0 0.0
    %861 = vmatprep.subr.mxu0 0.0
    %862 = vmatpush1.msra.mxu0 0.0
    %863 = vmatprep.subr.mxu0 0.0
    %864 = vmatpush1.msra.mxu0 0.0
    %865 = vmatprep.subr.mxu0 0.0
    %866 = vmatpush1.msra.mxu0 %v92
    %867 = vmatprep.subr.mxu0 0.0
    %868 = vmatpush1.msra.mxu0 %v91
    %869 = vmatprep.subr.mxu0 0.0
    %870 = vmatpush1.msra.mxu0 %v90
    %871 = vmatprep.subr.mxu0 0.0
    %872 = vmatpush1.msra.mxu0 %v89
    %873 = vmatprep.subr.mxu0 0.0
    %874 = vmatpush2.msra.mxu0 0.0
    %875 = vmatprep.subr.mxu0 0.0
    %876 = vmatpush2.msra.mxu0 0.0
    %877 = vmatprep.subr.mxu0 0.0
    %878 = vmatpush2.msra.mxu0 0.0
    %879 = vmatprep.subr.mxu0 0.0
    %880 = vmatpush2.msra.mxu0 0.0
    %881 = vmatprep.subr.mxu0 0.0
    %882 = vmatpush2.msra.mxu0 0.0
    %883 = vmatprep.subr.mxu0 0.0
    %884 = vmatpush2.msra.mxu0 0.0
    %885 = vmatprep.subr.mxu0 0.0
    %886 = vmatpush2.msra.mxu0 0.0
    %887 = vmatprep.subr.mxu0 0.0
    %888 = vmatpush2.msra.mxu0 0.0
    %889 = vmatprep.subr.mxu0 0.0
    %890 = vmatpush2.msra.mxu0 0.0
    %891 = vmatprep.subr.mxu0 0.0
    %892 = vmatpush2.msra.mxu0 0.0
    %893 = vmatprep.subr.mxu0 0.0
    %894 = vmatpush2.msra.mxu0 0.0
    %895 = vmatprep.subr.mxu0 0.0
    %896 = vmatpush2.msra.mxu0 0.0
    %897 = vmatprep.subr.mxu0 0.0
    %898 = vmatpush2.msra.mxu0 0.0
    %899 = vmatprep.subr.mxu0 0.0
    %900 = vmatpush2.msra.mxu0 0.0
    %901 = vmatprep.subr.mxu0 0.0
    %902 = vmatpush2.msra.mxu0 0.0
    %903 = vmatprep.subr.mxu0 0.0
    %904 = vmatpush2.msra.mxu0 0.0
    %905 = vmatprep.mubr.f32.mxu0 0.0
    %906 = vmatmul.mubr.f32.gmra.mxu0 %v594
    %v907 = vpop.f32.mrf.mxu0
    %v908 = vadd.f32 %v117, %v907
    %v909 = vpop.f32.mrf.mxu0
    %910 = vdwg.mxu0
    %v911 = vadd.f32 %v840, %v908
    %v912 = vxor.u32 %v911, 2147483648
    %v913 = vmul.f32 %v912, 1.442695
    %v914 = vpow.pop %v913
    %v915 = vadd.f32 %v914, 1.0
    %v916 = vrcp.pop %v915
    %v917 = vmul.f32 1.0, %v916
    %919 = vrot.lane.b32.xlu0 %v908, 64
    %v920 = vpop.permute.xlu0 %919
    %v922 = vmul.f32 %v917, %v920
    %924 = vrot.lane.b32.xlu0 %v922, 64
    %v925 = vpop.permute.xlu0 %924
    %v927 = vadd.f32 %v840, %v925
    %v928 = vtanh.pop %v927
    %v929 = vsub.f32 1.0, %v917
    %931 = vrot.lane.b32.xlu0 %v928, 96
    %v932 = vpop.permute.xlu0 %931
    %v934 = vmul.f32 %v929, %v932
    %v935 = vmul.f32 %v917, %v590
    %v936 = vadd.f32 %v934, %v935
    %938 = vrot.lane.b32.xlu0 %v936, 96
    %v939 = vpop.permute.xlu0 %938
    %v940 = vsel %vm119, %v939, 0
    %942 = vmatprep.subr.mxu0 0.0
    %943 = vmatpush1.msra.mxu0 0.0
    %944 = vmatprep.subr.mxu0 0.0
    %945 = vmatpush1.msra.mxu0 0.0
    %946 = vmatprep.subr.mxu0 0.0
    %947 = vmatpush1.msra.mxu0 0.0
    %948 = vmatprep.subr.mxu0 0.0
    %949 = vmatpush1.msra.mxu0 0.0
    %950 = vmatprep.subr.mxu0 0.0
    %951 = vmatpush1.msra.mxu0 0.0
    %952 = vmatprep.subr.mxu0 0.0
    %953 = vmatpush1.msra.mxu0 0.0
    %954 = vmatprep.subr.mxu0 0.0
    %955 = vmatpush1.msra.mxu0 0.0
    %956 = vmatprep.subr.mxu0 0.0
    %957 = vmatpush1.msra.mxu0 0.0
    %958 = vmatprep.subr.mxu0 0.0
    %959 = vmatpush1.msra.mxu0 0.0
    %960 = vmatprep.subr.mxu0 0.0
    %961 = vmatpush1.msra.mxu0 0.0
    %962 = vmatprep.subr.mxu0 0.0
    %963 = vmatpush1.msra.mxu0 0.0
    %964 = vmatprep.subr.mxu0 0.0
    %965 = vmatpush1.msra.mxu0 0.0
    %966 = vmatprep.subr.mxu0 0.0
    %967 = vmatpush1.msra.mxu0 %v97
    %968 = vmatprep.subr.mxu0 0.0
    %969 = vmatpush1.msra.mxu0 %v96
    %970 = vmatprep.subr.mxu0 0.0
    %971 = vmatpush1.msra.mxu0 %v95
    %972 = vmatprep.subr.mxu0 0.0
    %973 = vmatpush1.msra.mxu0 %v94
    %974 = vmatprep.subr.mxu0 0.0
    %975 = vmatpush2.msra.mxu0 0.0
    %976 = vmatprep.subr.mxu0 0.0
    %977 = vmatpush2.msra.mxu0 0.0
    %978 = vmatprep.subr.mxu0 0.0
    %979 = vmatpush2.msra.mxu0 0.0
    %980 = vmatprep.subr.mxu0 0.0
    %981 = vmatpush2.msra.mxu0 0.0
    %982 = vmatprep.subr.mxu0 0.0
    %983 = vmatpush2.msra.mxu0 0.0
    %984 = vmatprep.subr.mxu0 0.0
    %985 = vmatpush2.msra.mxu0 0.0
    %986 = vmatprep.subr.mxu0 0.0
    %987 = vmatpush2.msra.mxu0 0.0
    %988 = vmatprep.subr.mxu0 0.0
    %989 = vmatpush2.msra.mxu0 0.0
    %990 = vmatprep.subr.mxu0 0.0
    %991 = vmatpush2.msra.mxu0 0.0
    %992 = vmatprep.subr.mxu0 0.0
    %993 = vmatpush2.msra.mxu0 0.0
    %994 = vmatprep.subr.mxu0 0.0
    %995 = vmatpush2.msra.mxu0 0.0
    %996 = vmatprep.subr.mxu0 0.0
    %997 = vmatpush2.msra.mxu0 0.0
    %998 = vmatprep.subr.mxu0 0.0
    %999 = vmatpush2.msra.mxu0 0.0
    %1000 = vmatprep.subr.mxu0 0.0
    %1001 = vmatpush2.msra.mxu0 0.0
    %1002 = vmatprep.subr.mxu0 0.0
    %1003 = vmatpush2.msra.mxu0 0.0
    %1004 = vmatprep.subr.mxu0 0.0
    %1005 = vmatpush2.msra.mxu0 0.0
    %1006 = vmatprep.mubr.f32.mxu0 0.0
    %1007 = vmatmul.mubr.f32.gmra.mxu0 %v940
    %v1008 = vpop.f32.mrf.mxu0
    %v1009 = vadd.f32 %v226, %v1008
    %v1010 = vpop.f32.mrf.mxu0
    %1011 = vdwg.mxu0
    %1012 = vmatprep.subr.mxu0 0.0
    %1013 = vmatpush1.msra.mxu0 0.0
    %1014 = vmatprep.subr.mxu0 0.0
    %1015 = vmatpush1.msra.mxu0 0.0
    %1016 = vmatprep.subr.mxu0 0.0
    %1017 = vmatpush1.msra.mxu0 0.0
    %1018 = vmatprep.subr.mxu0 0.0
    %1019 = vmatpush1.msra.mxu0 0.0
    %1020 = vmatprep.subr.mxu0 0.0
    %1021 = vmatpush1.msra.mxu0 0.0
    %1022 = vmatprep.subr.mxu0 0.0
    %1023 = vmatpush1.msra.mxu0 0.0
    %1024 = vmatprep.subr.mxu0 0.0
    %1025 = vmatpush1.msra.mxu0 0.0
    %1026 = vmatprep.subr.mxu0 0.0
    %1027 = vmatpush1.msra.mxu0 0.0
    %1028 = vmatprep.subr.mxu0 0.0
    %1029 = vmatpush1.msra.mxu0 0.0
    %1030 = vmatprep.subr.mxu0 0.0
    %1031 = vmatpush1.msra.mxu0 0.0
    %1032 = vmatprep.subr.mxu0 0.0
    %1033 = vmatpush1.msra.mxu0 0.0
    %1034 = vmatprep.subr.mxu0 0.0
    %1035 = vmatpush1.msra.mxu0 0.0
    %1036 = vmatprep.subr.mxu0 0.0
    %1037 = vmatpush1.msra.mxu0 %v102
    %1038 = vmatprep.subr.mxu0 0.0
    %1039 = vmatpush1.msra.mxu0 %v101
    %1040 = vmatprep.subr.mxu0 0.0
    %1041 = vmatpush1.msra.mxu0 %v100
    %1042 = vmatprep.subr.mxu0 0.0
    %1043 = vmatpush1.msra.mxu0 %v99
    %1044 = vmatprep.subr.mxu0 0.0
    %1045 = vmatpush2.msra.mxu0 0.0
    %1046 = vmatprep.subr.mxu0 0.0
    %1047 = vmatpush2.msra.mxu0 0.0
    %1048 = vmatprep.subr.mxu0 0.0
    %1049 = vmatpush2.msra.mxu0 0.0
    %1050 = vmatprep.subr.mxu0 0.0
    %1051 = vmatpush2.msra.mxu0 0.0
    %1052 = vmatprep.subr.mxu0 0.0
    %1053 = vmatpush2.msra.mxu0 0.0
    %1054 = vmatprep.subr.mxu0 0.0
    %1055 = vmatpush2.msra.mxu0 0.0
    %1056 = vmatprep.subr.mxu0 0.0
    %1057 = vmatpush2.msra.mxu0 0.0
    %1058 = vmatprep.subr.mxu0 0.0
    %1059 = vmatpush2.msra.mxu0 0.0
    %1060 = vmatprep.subr.mxu0 0.0
    %1061 = vmatpush2.msra.mxu0 0.0
    %1062 = vmatprep.subr.mxu0 0.0
    %1063 = vmatpush2.msra.mxu0 0.0
    %1064 = vmatprep.subr.mxu0 0.0
    %1065 = vmatpush2.msra.mxu0 0.0
    %1066 = vmatprep.subr.mxu0 0.0
    %1067 = vmatpush2.msra.mxu0 0.0
    %1068 = vmatprep.subr.mxu0 0.0
    %1069 = vmatpush2.msra.mxu0 0.0
    %1070 = vmatprep.subr.mxu0 0.0
    %1071 = vmatpush2.msra.mxu0 0.0
    %1072 = vmatprep.subr.mxu0 0.0
    %1073 = vmatpush2.msra.mxu0 0.0
    %1074 = vmatprep.subr.mxu0 0.0
    %1075 = vmatpush2.msra.mxu0 0.0
    %1076 = vmatprep.mubr.f32.mxu0 0.0
    %1077 = vmatmul.mubr.f32.gmra.mxu0 %v765
    %v1078 = vpop.f32.mrf.mxu0
    %v1079 = vadd.f32 %v307, %v1078
    %v1080 = vpop.f32.mrf.mxu0
    %1081 = vdwg.mxu0
    %v1082 = vadd.f32 %v1009, %v1079
    %v1083 = vxor.u32 %v1082, 2147483648
    %v1084 = vmul.f32 %v1083, 1.442695
    %v1085 = vpow.pop %v1084
    %v1086 = vadd.f32 %v1085, 1.0
    %v1087 = vrcp.pop %v1086
    %v1088 = vmul.f32 1.0, %v1087
    %1090 = vrot.lane.b32.xlu0 %v1079, 64
    %v1091 = vpop.permute.xlu0 %1090
    %v1093 = vmul.f32 %v1088, %v1091
    %1095 = vrot.lane.b32.xlu0 %v1093, 64
    %v1096 = vpop.permute.xlu0 %1095
    %v1098 = vadd.f32 %v1009, %v1096
    %v1099 = vtanh.pop %v1098
    %v1100 = vsub.f32 1.0, %v1088
    %1102 = vrot.lane.b32.xlu0 %v1099, 96
    %v1103 = vpop.permute.xlu0 %1102
    %v1105 = vmul.f32 %v1100, %v1103
    %v1106 = vmul.f32 %v1088, %v761
    %v1107 = vadd.f32 %v1105, %v1106
    %1109 = vrot.lane.b32.xlu0 %v1107, 96
    %v1110 = vpop.permute.xlu0 %1109
    %v1111 = vsel %vm119, %v1110, 0
    %1113 = vmatprep.subr.mxu0 0.0
    %1114 = vmatpush1.msra.mxu0 0.0
    %1115 = vmatprep.subr.mxu0 0.0
    %1116 = vmatpush1.msra.mxu0 0.0
    %1117 = vmatprep.subr.mxu0 0.0
    %1118 = vmatpush1.msra.mxu0 0.0
    %1119 = vmatprep.subr.mxu0 0.0
    %1120 = vmatpush1.msra.mxu0 0.0
    %1121 = vmatprep.subr.mxu0 0.0
    %1122 = vmatpush1.msra.mxu0 0.0
    %1123 = vmatprep.subr.mxu0 0.0
    %1124 = vmatpush1.msra.mxu0 0.0
    %1125 = vmatprep.subr.mxu0 0.0
    %1126 = vmatpush1.msra.mxu0 0.0
    %1127 = vmatprep.subr.mxu0 0.0
    %1128 = vmatpush1.msra.mxu0 0.0
    %1129 = vmatprep.subr.mxu0 0.0
    %1130 = vmatpush1.msra.mxu0 0.0
    %1131 = vmatprep.subr.mxu0 0.0
    %1132 = vmatpush1.msra.mxu0 0.0
    %1133 = vmatprep.subr.mxu0 0.0
    %1134 = vmatpush1.msra.mxu0 0.0
    %1135 = vmatprep.subr.mxu0 0.0
    %1136 = vmatpush1.msra.mxu0 0.0
    %1137 = vmatprep.subr.mxu0 0.0
    %1138 = vmatpush1.msra.mxu0 %v107
    %1139 = vmatprep.subr.mxu0 0.0
    %1140 = vmatpush1.msra.mxu0 %v106
    %1141 = vmatprep.subr.mxu0 0.0
    %1142 = vmatpush1.msra.mxu0 %v105
    %1143 = vmatprep.subr.mxu0 0.0
    %1144 = vmatpush1.msra.mxu0 %v104
    %1145 = vmatprep.subr.mxu0 0.0
    %1146 = vmatpush2.msra.mxu0 0.0
    %1147 = vmatprep.subr.mxu0 0.0
    %1148 = vmatpush2.msra.mxu0 0.0
    %1149 = vmatprep.subr.mxu0 0.0
    %1150 = vmatpush2.msra.mxu0 0.0
    %1151 = vmatprep.subr.mxu0 0.0
    %1152 = vmatpush2.msra.mxu0 0.0
    %1153 = vmatprep.subr.mxu0 0.0
    %1154 = vmatpush2.msra.mxu0 0.0
    %1155 = vmatprep.subr.mxu0 0.0
    %1156 = vmatpush2.msra.mxu0 0.0
    %1157 = vmatprep.subr.mxu0 0.0
    %1158 = vmatpush2.msra.mxu0 0.0
    %1159 = vmatprep.subr.mxu0 0.0
    %1160 = vmatpush2.msra.mxu0 0.0
    %1161 = vmatprep.subr.mxu0 0.0
    %1162 = vmatpush2.msra.mxu0 0.0
    %1163 = vmatprep.subr.mxu0 0.0
    %1164 = vmatpush2.msra.mxu0 0.0
    %1165 = vmatprep.subr.mxu0 0.0
    %1166 = vmatpush2.msra.mxu0 0.0
    %1167 = vmatprep.subr.mxu0 0.0
    %1168 = vmatpush2.msra.mxu0 0.0
    %1169 = vmatprep.subr.mxu0 0.0
    %1170 = vmatpush2.msra.mxu0 0.0
    %1171 = vmatprep.subr.mxu0 0.0
    %1172 = vmatpush2.msra.mxu0 0.0
    %1173 = vmatprep.subr.mxu0 0.0
    %1174 = vmatpush2.msra.mxu0 0.0
    %1175 = vmatprep.subr.mxu0 0.0
    %1176 = vmatpush2.msra.mxu0 0.0
    %1177 = vmatprep.mubr.f32.mxu0 0.0
    %1178 = vmatmul.mubr.f32.gmra.mxu0 %v1111
    %v1179 = vpop.f32.mrf.mxu0
    %v1180 = vadd.f32 %v415, %v1179
    %v1181 = vpop.f32.mrf.mxu0
    %1182 = vdwg.mxu0
    %s1183 = scalar_lea.vmem %s10, 4
    %1184 = vst [vmem:[%s1183] sm:$0x3] %v1180
    %s1185 = scalar_lea.vmem %s0, 6
    %v1186 = vld [vmem:[%s1185] sm:$0x3]
    %1187 = vmatprep.subr.mxu0 0.0
    %1188 = vmatpush1.msra.mxu0 0.0
    %1189 = vmatprep.subr.mxu0 0.0
    %1190 = vmatpush1.msra.mxu0 0.0
    %1191 = vmatprep.subr.mxu0 0.0
    %1192 = vmatpush1.msra.mxu0 0.0
    %1193 = vmatprep.subr.mxu0 0.0
    %1194 = vmatpush1.msra.mxu0 0.0
    %1195 = vmatprep.subr.mxu0 0.0
    %1196 = vmatpush1.msra.mxu0 0.0
    %1197 = vmatprep.subr.mxu0 0.0
    %1198 = vmatpush1.msra.mxu0 0.0
    %1199 = vmatprep.subr.mxu0 0.0
    %1200 = vmatpush1.msra.mxu0 0.0
    %1201 = vmatprep.subr.mxu0 0.0
    %1202 = vmatpush1.msra.mxu0 0.0
    %1203 = vmatprep.subr.mxu0 0.0
    %1204 = vmatpush1.msra.mxu0 0.0
    %1205 = vmatprep.subr.mxu0 0.0
    %1206 = vmatpush1.msra.mxu0 0.0
    %1207 = vmatprep.subr.mxu0 0.0
    %1208 = vmatpush1.msra.mxu0 0.0
    %1209 = vmatprep.subr.mxu0 0.0
    %1210 = vmatpush1.msra.mxu0 0.0
    %1211 = vmatprep.subr.mxu0 0.0
    %1212 = vmatpush1.msra.mxu0 %v92
    %1213 = vmatprep.subr.mxu0 0.0
    %1214 = vmatpush1.msra.mxu0 %v91
    %1215 = vmatprep.subr.mxu0 0.0
    %1216 = vmatpush1.msra.mxu0 %v90
    %1217 = vmatprep.subr.mxu0 0.0
    %1218 = vmatpush1.msra.mxu0 %v89
    %1219 = vmatprep.subr.mxu0 0.0
    %1220 = vmatpush2.msra.mxu0 0.0
    %1221 = vmatprep.subr.mxu0 0.0
    %1222 = vmatpush2.msra.mxu0 0.0
    %1223 = vmatprep.subr.mxu0 0.0
    %1224 = vmatpush2.msra.mxu0 0.0
    %1225 = vmatprep.subr.mxu0 0.0
    %1226 = vmatpush2.msra.mxu0 0.0
    %1227 = vmatprep.subr.mxu0 0.0
    %1228 = vmatpush2.msra.mxu0 0.0
    %1229 = vmatprep.subr.mxu0 0.0
    %1230 = vmatpush2.msra.mxu0 0.0
    %1231 = vmatprep.subr.mxu0 0.0
    %1232 = vmatpush2.msra.mxu0 0.0
    %1233 = vmatprep.subr.mxu0 0.0
    %1234 = vmatpush2.msra.mxu0 0.0
    %1235 = vmatprep.subr.mxu0 0.0
    %1236 = vmatpush2.msra.mxu0 0.0
    %1237 = vmatprep.subr.mxu0 0.0
    %1238 = vmatpush2.msra.mxu0 0.0
    %1239 = vmatprep.subr.mxu0 0.0
    %1240 = vmatpush2.msra.mxu0 0.0
    %1241 = vmatprep.subr.mxu0 0.0
    %1242 = vmatpush2.msra.mxu0 0.0
    %1243 = vmatprep.subr.mxu0 0.0
    %1244 = vmatpush2.msra.mxu0 0.0
    %1245 = vmatprep.subr.mxu0 0.0
    %1246 = vmatpush2.msra.mxu0 0.0
    %1247 = vmatprep.subr.mxu0 0.0
    %1248 = vmatpush2.msra.mxu0 0.0
    %1249 = vmatprep.subr.mxu0 0.0
    %1250 = vmatpush2.msra.mxu0 0.0
    %1251 = vmatprep.mubr.f32.mxu0 0.0
    %1252 = vmatmul.mubr.f32.gmra.mxu0 %v940
    %v1253 = vpop.f32.mrf.mxu0
    %v1254 = vadd.f32 %v117, %v1253
    %v1255 = vpop.f32.mrf.mxu0
    %1256 = vdwg.mxu0
    %v1257 = vadd.f32 %v1186, %v1254
    %v1258 = vxor.u32 %v1257, 2147483648
    %v1259 = vmul.f32 %v1258, 1.442695
    %v1260 = vpow.pop %v1259
    %v1261 = vadd.f32 %v1260, 1.0
    %v1262 = vrcp.pop %v1261
    %v1263 = vmul.f32 1.0, %v1262
    %1265 = vrot.lane.b32.xlu0 %v1254, 64
    %v1266 = vpop.permute.xlu0 %1265
    %v1268 = vmul.f32 %v1263, %v1266
    %1270 = vrot.lane.b32.xlu0 %v1268, 64
    %v1271 = vpop.permute.xlu0 %1270
    %v1273 = vadd.f32 %v1186, %v1271
    %v1274 = vtanh.pop %v1273
    %v1275 = vsub.f32 1.0, %v1263
    %1277 = vrot.lane.b32.xlu0 %v1274, 96
    %v1278 = vpop.permute.xlu0 %1277
    %v1280 = vmul.f32 %v1275, %v1278
    %v1281 = vmul.f32 %v1263, %v936
    %v1282 = vadd.f32 %v1280, %v1281
    %1284 = vrot.lane.b32.xlu0 %v1282, 96
    %v1285 = vpop.permute.xlu0 %1284
    %v1286 = vsel %vm119, %v1285, 0
    %1288 = vmatprep.subr.mxu0 0.0
    %1289 = vmatpush1.msra.mxu0 0.0
    %1290 = vmatprep.subr.mxu0 0.0
    %1291 = vmatpush1.msra.mxu0 0.0
    %1292 = vmatprep.subr.mxu0 0.0
    %1293 = vmatpush1.msra.mxu0 0.0
    %1294 = vmatprep.subr.mxu0 0.0
    %1295 = vmatpush1.msra.mxu0 0.0
    %1296 = vmatprep.subr.mxu0 0.0
    %1297 = vmatpush1.msra.mxu0 0.0
    %1298 = vmatprep.subr.mxu0 0.0
    %1299 = vmatpush1.msra.mxu0 0.0
    %1300 = vmatprep.subr.mxu0 0.0
    %1301 = vmatpush1.msra.mxu0 0.0
    %1302 = vmatprep.subr.mxu0 0.0
    %1303 = vmatpush1.msra.mxu0 0.0
    %1304 = vmatprep.subr.mxu0 0.0
    %1305 = vmatpush1.msra.mxu0 0.0
    %1306 = vmatprep.subr.mxu0 0.0
    %1307 = vmatpush1.msra.mxu0 0.0
    %1308 = vmatprep.subr.mxu0 0.0
    %1309 = vmatpush1.msra.mxu0 0.0
    %1310 = vmatprep.subr.mxu0 0.0
    %1311 = vmatpush1.msra.mxu0 0.0
    %1312 = vmatprep.subr.mxu0 0.0
    %1313 = vmatpush1.msra.mxu0 %v97
    %1314 = vmatprep.subr.mxu0 0.0
    %1315 = vmatpush1.msra.mxu0 %v96
    %1316 = vmatprep.subr.mxu0 0.0
    %1317 = vmatpush1.msra.mxu0 %v95
    %1318 = vmatprep.subr.mxu0 0.0
    %1319 = vmatpush1.msra.mxu0 %v94
    %1320 = vmatprep.subr.mxu0 0.0
    %1321 = vmatpush2.msra.mxu0 0.0
    %1322 = vmatprep.subr.mxu0 0.0
    %1323 = vmatpush2.msra.mxu0 0.0
    %1324 = vmatprep.subr.mxu0 0.0
    %1325 = vmatpush2.msra.mxu0 0.0
    %1326 = vmatprep.subr.mxu0 0.0
    %1327 = vmatpush2.msra.mxu0 0.0
    %1328 = vmatprep.subr.mxu0 0.0
    %1329 = vmatpush2.msra.mxu0 0.0
    %1330 = vmatprep.subr.mxu0 0.0
    %1331 = vmatpush2.msra.mxu0 0.0
    %1332 = vmatprep.subr.mxu0 0.0
    %1333 = vmatpush2.msra.mxu0 0.0
    %1334 = vmatprep.subr.mxu0 0.0
    %1335 = vmatpush2.msra.mxu0 0.0
    %1336 = vmatprep.subr.mxu0 0.0
    %1337 = vmatpush2.msra.mxu0 0.0
    %1338 = vmatprep.subr.mxu0 0.0
    %1339 = vmatpush2.msra.mxu0 0.0
    %1340 = vmatprep.subr.mxu0 0.0
    %1341 = vmatpush2.msra.mxu0 0.0
    %1342 = vmatprep.subr.mxu0 0.0
    %1343 = vmatpush2.msra.mxu0 0.0
    %1344 = vmatprep.subr.mxu0 0.0
    %1345 = vmatpush2.msra.mxu0 0.0
    %1346 = vmatprep.subr.mxu0 0.0
    %1347 = vmatpush2.msra.mxu0 0.0
    %1348 = vmatprep.subr.mxu0 0.0
    %1349 = vmatpush2.msra.mxu0 0.0
    %1350 = vmatprep.subr.mxu0 0.0
    %1351 = vmatpush2.msra.mxu0 0.0
    %1352 = vmatprep.mubr.f32.mxu0 0.0
    %1353 = vmatmul.mubr.f32.gmra.mxu0 %v1286
    %v1354 = vpop.f32.mrf.mxu0
    %v1355 = vadd.f32 %v226, %v1354
    %v1356 = vpop.f32.mrf.mxu0
    %1357 = vdwg.mxu0
    %1358 = vmatprep.subr.mxu0 0.0
    %1359 = vmatpush1.msra.mxu0 0.0
    %1360 = vmatprep.subr.mxu0 0.0
    %1361 = vmatpush1.msra.mxu0 0.0
    %1362 = vmatprep.subr.mxu0 0.0
    %1363 = vmatpush1.msra.mxu0 0.0
    %1364 = vmatprep.subr.mxu0 0.0
    %1365 = vmatpush1.msra.mxu0 0.0
    %1366 = vmatprep.subr.mxu0 0.0
    %1367 = vmatpush1.msra.mxu0 0.0
    %1368 = vmatprep.subr.mxu0 0.0
    %1369 = vmatpush1.msra.mxu0 0.0
    %1370 = vmatprep.subr.mxu0 0.0
    %1371 = vmatpush1.msra.mxu0 0.0
    %1372 = vmatprep.subr.mxu0 0.0
    %1373 = vmatpush1.msra.mxu0 0.0
    %1374 = vmatprep.subr.mxu0 0.0
    %1375 = vmatpush1.msra.mxu0 0.0
    %1376 = vmatprep.subr.mxu0 0.0
    %1377 = vmatpush1.msra.mxu0 0.0
    %1378 = vmatprep.subr.mxu0 0.0
    %1379 = vmatpush1.msra.mxu0 0.0
    %1380 = vmatprep.subr.mxu0 0.0
    %1381 = vmatpush1.msra.mxu0 0.0
    %1382 = vmatprep.subr.mxu0 0.0
    %1383 = vmatpush1.msra.mxu0 %v102
    %1384 = vmatprep.subr.mxu0 0.0
    %1385 = vmatpush1.msra.mxu0 %v101
    %1386 = vmatprep.subr.mxu0 0.0
    %1387 = vmatpush1.msra.mxu0 %v100
    %1388 = vmatprep.subr.mxu0 0.0
    %1389 = vmatpush1.msra.mxu0 %v99
    %1390 = vmatprep.subr.mxu0 0.0
    %1391 = vmatpush2.msra.mxu0 0.0
    %1392 = vmatprep.subr.mxu0 0.0
    %1393 = vmatpush2.msra.mxu0 0.0
    %1394 = vmatprep.subr.mxu0 0.0
    %1395 = vmatpush2.msra.mxu0 0.0
    %1396 = vmatprep.subr.mxu0 0.0
    %1397 = vmatpush2.msra.mxu0 0.0
    %1398 = vmatprep.subr.mxu0 0.0
    %1399 = vmatpush2.msra.mxu0 0.0
    %1400 = vmatprep.subr.mxu0 0.0
    %1401 = vmatpush2.msra.mxu0 0.0
    %1402 = vmatprep.subr.mxu0 0.0
    %1403 = vmatpush2.msra.mxu0 0.0
    %1404 = vmatprep.subr.mxu0 0.0
    %1405 = vmatpush2.msra.mxu0 0.0
    %1406 = vmatprep.subr.mxu0 0.0
    %1407 = vmatpush2.msra.mxu0 0.0
    %1408 = vmatprep.subr.mxu0 0.0
    %1409 = vmatpush2.msra.mxu0 0.0
    %1410 = vmatprep.subr.mxu0 0.0
    %1411 = vmatpush2.msra.mxu0 0.0
    %1412 = vmatprep.subr.mxu0 0.0
    %1413 = vmatpush2.msra.mxu0 0.0
    %1414 = vmatprep.subr.mxu0 0.0
    %1415 = vmatpush2.msra.mxu0 0.0
    %1416 = vmatprep.subr.mxu0 0.0
    %1417 = vmatpush2.msra.mxu0 0.0
    %1418 = vmatprep.subr.mxu0 0.0
    %1419 = vmatpush2.msra.mxu0 0.0
    %1420 = vmatprep.subr.mxu0 0.0
    %1421 = vmatpush2.msra.mxu0 0.0
    %1422 = vmatprep.mubr.f32.mxu0 0.0
    %1423 = vmatmul.mubr.f32.gmra.mxu0 %v1111
    %v1424 = vpop.f32.mrf.mxu0
    %v1425 = vadd.f32 %v307, %v1424
    %v1426 = vpop.f32.mrf.mxu0
    %1427 = vdwg.mxu0
    %v1428 = vadd.f32 %v1355, %v1425
    %v1429 = vxor.u32 %v1428, 2147483648
    %v1430 = vmul.f32 %v1429, 1.442695
    %v1431 = vpow.pop %v1430
    %v1432 = vadd.f32 %v1431, 1.0
    %v1433 = vrcp.pop %v1432
    %v1434 = vmul.f32 1.0, %v1433
    %1436 = vrot.lane.b32.xlu0 %v1425, 64
    %v1437 = vpop.permute.xlu0 %1436
    %v1439 = vmul.f32 %v1434, %v1437
    %1441 = vrot.lane.b32.xlu0 %v1439, 64
    %v1442 = vpop.permute.xlu0 %1441
    %v1444 = vadd.f32 %v1355, %v1442
    %v1445 = vtanh.pop %v1444
    %v1446 = vsub.f32 1.0, %v1434
    %1448 = vrot.lane.b32.xlu0 %v1445, 96
    %v1449 = vpop.permute.xlu0 %1448
    %v1451 = vmul.f32 %v1446, %v1449
    %v1452 = vmul.f32 %v1434, %v1107
    %v1453 = vadd.f32 %v1451, %v1452
    %1455 = vrot.lane.b32.xlu0 %v1453, 96
    %v1456 = vpop.permute.xlu0 %1455
    %v1457 = vsel %vm119, %v1456, 0
    %1459 = vmatprep.subr.mxu0 0.0
    %1460 = vmatpush1.msra.mxu0 0.0
    %1461 = vmatprep.subr.mxu0 0.0
    %1462 = vmatpush1.msra.mxu0 0.0
    %1463 = vmatprep.subr.mxu0 0.0
    %1464 = vmatpush1.msra.mxu0 0.0
    %1465 = vmatprep.subr.mxu0 0.0
    %1466 = vmatpush1.msra.mxu0 0.0
    %1467 = vmatprep.subr.mxu0 0.0
    %1468 = vmatpush1.msra.mxu0 0.0
    %1469 = vmatprep.subr.mxu0 0.0
    %1470 = vmatpush1.msra.mxu0 0.0
    %1471 = vmatprep.subr.mxu0 0.0
    %1472 = vmatpush1.msra.mxu0 0.0
    %1473 = vmatprep.subr.mxu0 0.0
    %1474 = vmatpush1.msra.mxu0 0.0
    %1475 = vmatprep.subr.mxu0 0.0
    %1476 = vmatpush1.msra.mxu0 0.0
    %1477 = vmatprep.subr.mxu0 0.0
    %1478 = vmatpush1.msra.mxu0 0.0
    %1479 = vmatprep.subr.mxu0 0.0
    %1480 = vmatpush1.msra.mxu0 0.0
    %1481 = vmatprep.subr.mxu0 0.0
    %1482 = vmatpush1.msra.mxu0 0.0
    %1483 = vmatprep.subr.mxu0 0.0
    %1484 = vmatpush1.msra.mxu0 %v107
    %1485 = vmatprep.subr.mxu0 0.0
    %1486 = vmatpush1.msra.mxu0 %v106
    %1487 = vmatprep.subr.mxu0 0.0
    %1488 = vmatpush1.msra.mxu0 %v105
    %1489 = vmatprep.subr.mxu0 0.0
    %1490 = vmatpush1.msra.mxu0 %v104
    %1491 = vmatprep.subr.mxu0 0.0
    %1492 = vmatpush2.msra.mxu0 0.0
    %1493 = vmatprep.subr.mxu0 0.0
    %1494 = vmatpush2.msra.mxu0 0.0
    %1495 = vmatprep.subr.mxu0 0.0
    %1496 = vmatpush2.msra.mxu0 0.0
    %1497 = vmatprep.subr.mxu0 0.0
    %1498 = vmatpush2.msra.mxu0 0.0
    %1499 = vmatprep.subr.mxu0 0.0
    %1500 = vmatpush2.msra.mxu0 0.0
    %1501 = vmatprep.subr.mxu0 0.0
    %1502 = vmatpush2.msra.mxu0 0.0
    %1503 = vmatprep.subr.mxu0 0.0
    %1504 = vmatpush2.msra.mxu0 0.0
    %1505 = vmatprep.subr.mxu0 0.0
    %1506 = vmatpush2.msra.mxu0 0.0
    %1507 = vmatprep.subr.mxu0 0.0
    %1508 = vmatpush2.msra.mxu0 0.0
    %1509 = vmatprep.subr.mxu0 0.0
    %1510 = vmatpush2.msra.mxu0 0.0
    %1511 = vmatprep.subr.mxu0 0.0
    %1512 = vmatpush2.msra.mxu0 0.0
    %1513 = vmatprep.subr.mxu0 0.0
    %1514 = vmatpush2.msra.mxu0 0.0
    %1515 = vmatprep.subr.mxu0 0.0
    %1516 = vmatpush2.msra.mxu0 0.0
    %1517 = vmatprep.subr.mxu0 0.0
    %1518 = vmatpush2.msra.mxu0 0.0
    %1519 = vmatprep.subr.mxu0 0.0
    %1520 = vmatpush2.msra.mxu0 0.0
    %1521 = vmatprep.subr.mxu0 0.0
    %1522 = vmatpush2.msra.mxu0 0.0
    %1523 = vmatprep.mubr.f32.mxu0 0.0
    %1524 = vmatmul.mubr.f32.gmra.mxu0 %v1457
    %v1525 = vpop.f32.mrf.mxu0
    %v1526 = vadd.f32 %v415, %v1525
    %v1527 = vpop.f32.mrf.mxu0
    %1528 = vdwg.mxu0
    %s1529 = scalar_lea.vmem %s10, 6
    %1530 = vst [vmem:[%s1529] sm:$0x3] %v1526
    %s1531 = scalar_lea.vmem %s0, 8
    %v1532 = vld [vmem:[%s1531] sm:$0x3]
    %1533 = vmatprep.subr.mxu0 0.0
    %1534 = vmatpush1.msra.mxu0 0.0
    %1535 = vmatprep.subr.mxu0 0.0
    %1536 = vmatpush1.msra.mxu0 0.0
    %1537 = vmatprep.subr.mxu0 0.0
    %1538 = vmatpush1.msra.mxu0 0.0
    %1539 = vmatprep.subr.mxu0 0.0
    %1540 = vmatpush1.msra.mxu0 0.0
    %1541 = vmatprep.subr.mxu0 0.0
    %1542 = vmatpush1.msra.mxu0 0.0
    %1543 = vmatprep.subr.mxu0 0.0
    %1544 = vmatpush1.msra.mxu0 0.0
    %1545 = vmatprep.subr.mxu0 0.0
    %1546 = vmatpush1.msra.mxu0 0.0
    %1547 = vmatprep.subr.mxu0 0.0
    %1548 = vmatpush1.msra.mxu0 0.0
    %1549 = vmatprep.subr.mxu0 0.0
    %1550 = vmatpush1.msra.mxu0 0.0
    %1551 = vmatprep.subr.mxu0 0.0
    %1552 = vmatpush1.msra.mxu0 0.0
    %1553 = vmatprep.subr.mxu0 0.0
    %1554 = vmatpush1.msra.mxu0 0.0
    %1555 = vmatprep.subr.mxu0 0.0
    %1556 = vmatpush1.msra.mxu0 0.0
    %1557 = vmatprep.subr.mxu0 0.0
    %1558 = vmatpush1.msra.mxu0 %v92
    %1559 = vmatprep.subr.mxu0 0.0
    %1560 = vmatpush1.msra.mxu0 %v91
    %1561 = vmatprep.subr.mxu0 0.0
    %1562 = vmatpush1.msra.mxu0 %v90
    %1563 = vmatprep.subr.mxu0 0.0
    %1564 = vmatpush1.msra.mxu0 %v89
    %1565 = vmatprep.subr.mxu0 0.0
    %1566 = vmatpush2.msra.mxu0 0.0
    %1567 = vmatprep.subr.mxu0 0.0
    %1568 = vmatpush2.msra.mxu0 0.0
    %1569 = vmatprep.subr.mxu0 0.0
    %1570 = vmatpush2.msra.mxu0 0.0
    %1571 = vmatprep.subr.mxu0 0.0
    %1572 = vmatpush2.msra.mxu0 0.0
    %1573 = vmatprep.subr.mxu0 0.0
    %1574 = vmatpush2.msra.mxu0 0.0
    %1575 = vmatprep.subr.mxu0 0.0
    %1576 = vmatpush2.msra.mxu0 0.0
    %1577 = vmatprep.subr.mxu0 0.0
    %1578 = vmatpush2.msra.mxu0 0.0
    %1579 = vmatprep.subr.mxu0 0.0
    %1580 = vmatpush2.msra.mxu0 0.0
    %1581 = vmatprep.subr.mxu0 0.0
    %1582 = vmatpush2.msra.mxu0 0.0
    %1583 = vmatprep.subr.mxu0 0.0
    %1584 = vmatpush2.msra.mxu0 0.0
    %1585 = vmatprep.subr.mxu0 0.0
    %1586 = vmatpush2.msra.mxu0 0.0
    %1587 = vmatprep.subr.mxu0 0.0
    %1588 = vmatpush2.msra.mxu0 0.0
    %1589 = vmatprep.subr.mxu0 0.0
    %1590 = vmatpush2.msra.mxu0 0.0
    %1591 = vmatprep.subr.mxu0 0.0
    %1592 = vmatpush2.msra.mxu0 0.0
    %1593 = vmatprep.subr.mxu0 0.0
    %1594 = vmatpush2.msra.mxu0 0.0
    %1595 = vmatprep.subr.mxu0 0.0
    %1596 = vmatpush2.msra.mxu0 0.0
    %1597 = vmatprep.mubr.f32.mxu0 0.0
    %1598 = vmatmul.mubr.f32.gmra.mxu0 %v1286
    %v1599 = vpop.f32.mrf.mxu0
    %v1600 = vadd.f32 %v117, %v1599
    %v1601 = vpop.f32.mrf.mxu0
    %1602 = vdwg.mxu0
    %v1603 = vadd.f32 %v1532, %v1600
    %v1604 = vxor.u32 %v1603, 2147483648
    %v1605 = vmul.f32 %v1604, 1.442695
    %v1606 = vpow.pop %v1605
    %v1607 = vadd.f32 %v1606, 1.0
    %v1608 = vrcp.pop %v1607
    %v1609 = vmul.f32 1.0, %v1608
    %1611 = vrot.lane.b32.xlu0 %v1600, 64
    %v1612 = vpop.permute.xlu0 %1611
    %v1614 = vmul.f32 %v1609, %v1612
    %1616 = vrot.lane.b32.xlu0 %v1614, 64
    %v1617 = vpop.permute.xlu0 %1616
    %v1619 = vadd.f32 %v1532, %v1617
    %v1620 = vtanh.pop %v1619
    %v1621 = vsub.f32 1.0, %v1609
    %1623 = vrot.lane.b32.xlu0 %v1620, 96
    %v1624 = vpop.permute.xlu0 %1623
    %v1626 = vmul.f32 %v1621, %v1624
    %v1627 = vmul.f32 %v1609, %v1282
    %v1628 = vadd.f32 %v1626, %v1627
    %1630 = vrot.lane.b32.xlu0 %v1628, 96
    %v1631 = vpop.permute.xlu0 %1630
    %v1632 = vsel %vm119, %v1631, 0
    %1634 = vmatprep.subr.mxu0 0.0
    %1635 = vmatpush1.msra.mxu0 0.0
    %1636 = vmatprep.subr.mxu0 0.0
    %1637 = vmatpush1.msra.mxu0 0.0
    %1638 = vmatprep.subr.mxu0 0.0
    %1639 = vmatpush1.msra.mxu0 0.0
    %1640 = vmatprep.subr.mxu0 0.0
    %1641 = vmatpush1.msra.mxu0 0.0
    %1642 = vmatprep.subr.mxu0 0.0
    %1643 = vmatpush1.msra.mxu0 0.0
    %1644 = vmatprep.subr.mxu0 0.0
    %1645 = vmatpush1.msra.mxu0 0.0
    %1646 = vmatprep.subr.mxu0 0.0
    %1647 = vmatpush1.msra.mxu0 0.0
    %1648 = vmatprep.subr.mxu0 0.0
    %1649 = vmatpush1.msra.mxu0 0.0
    %1650 = vmatprep.subr.mxu0 0.0
    %1651 = vmatpush1.msra.mxu0 0.0
    %1652 = vmatprep.subr.mxu0 0.0
    %1653 = vmatpush1.msra.mxu0 0.0
    %1654 = vmatprep.subr.mxu0 0.0
    %1655 = vmatpush1.msra.mxu0 0.0
    %1656 = vmatprep.subr.mxu0 0.0
    %1657 = vmatpush1.msra.mxu0 0.0
    %1658 = vmatprep.subr.mxu0 0.0
    %1659 = vmatpush1.msra.mxu0 %v97
    %1660 = vmatprep.subr.mxu0 0.0
    %1661 = vmatpush1.msra.mxu0 %v96
    %1662 = vmatprep.subr.mxu0 0.0
    %1663 = vmatpush1.msra.mxu0 %v95
    %1664 = vmatprep.subr.mxu0 0.0
    %1665 = vmatpush1.msra.mxu0 %v94
    %1666 = vmatprep.subr.mxu0 0.0
    %1667 = vmatpush2.msra.mxu0 0.0
    %1668 = vmatprep.subr.mxu0 0.0
    %1669 = vmatpush2.msra.mxu0 0.0
    %1670 = vmatprep.subr.mxu0 0.0
    %1671 = vmatpush2.msra.mxu0 0.0
    %1672 = vmatprep.subr.mxu0 0.0
    %1673 = vmatpush2.msra.mxu0 0.0
    %1674 = vmatprep.subr.mxu0 0.0
    %1675 = vmatpush2.msra.mxu0 0.0
    %1676 = vmatprep.subr.mxu0 0.0
    %1677 = vmatpush2.msra.mxu0 0.0
    %1678 = vmatprep.subr.mxu0 0.0
    %1679 = vmatpush2.msra.mxu0 0.0
    %1680 = vmatprep.subr.mxu0 0.0
    %1681 = vmatpush2.msra.mxu0 0.0
    %1682 = vmatprep.subr.mxu0 0.0
    %1683 = vmatpush2.msra.mxu0 0.0
    %1684 = vmatprep.subr.mxu0 0.0
    %1685 = vmatpush2.msra.mxu0 0.0
    %1686 = vmatprep.subr.mxu0 0.0
    %1687 = vmatpush2.msra.mxu0 0.0
    %1688 = vmatprep.subr.mxu0 0.0
    %1689 = vmatpush2.msra.mxu0 0.0
    %1690 = vmatprep.subr.mxu0 0.0
    %1691 = vmatpush2.msra.mxu0 0.0
    %1692 = vmatprep.subr.mxu0 0.0
    %1693 = vmatpush2.msra.mxu0 0.0
    %1694 = vmatprep.subr.mxu0 0.0
    %1695 = vmatpush2.msra.mxu0 0.0
    %1696 = vmatprep.subr.mxu0 0.0
    %1697 = vmatpush2.msra.mxu0 0.0
    %1698 = vmatprep.mubr.f32.mxu0 0.0
    %1699 = vmatmul.mubr.f32.gmra.mxu0 %v1632
    %v1700 = vpop.f32.mrf.mxu0
    %v1701 = vadd.f32 %v226, %v1700
    %v1702 = vpop.f32.mrf.mxu0
    %1703 = vdwg.mxu0
    %1704 = vmatprep.subr.mxu0 0.0
    %1705 = vmatpush1.msra.mxu0 0.0
    %1706 = vmatprep.subr.mxu0 0.0
    %1707 = vmatpush1.msra.mxu0 0.0
    %1708 = vmatprep.subr.mxu0 0.0
    %1709 = vmatpush1.msra.mxu0 0.0
    %1710 = vmatprep.subr.mxu0 0.0
    %1711 = vmatpush1.msra.mxu0 0.0
    %1712 = vmatprep.subr.mxu0 0.0
    %1713 = vmatpush1.msra.mxu0 0.0
    %1714 = vmatprep.subr.mxu0 0.0
    %1715 = vmatpush1.msra.mxu0 0.0
    %1716 = vmatprep.subr.mxu0 0.0
    %1717 = vmatpush1.msra.mxu0 0.0
    %1718 = vmatprep.subr.mxu0 0.0
    %1719 = vmatpush1.msra.mxu0 0.0
    %1720 = vmatprep.subr.mxu0 0.0
    %1721 = vmatpush1.msra.mxu0 0.0
    %1722 = vmatprep.subr.mxu0 0.0
    %1723 = vmatpush1.msra.mxu0 0.0
    %1724 = vmatprep.subr.mxu0 0.0
    %1725 = vmatpush1.msra.mxu0 0.0
    %1726 = vmatprep.subr.mxu0 0.0
    %1727 = vmatpush1.msra.mxu0 0.0
    %1728 = vmatprep.subr.mxu0 0.0
    %1729 = vmatpush1.msra.mxu0 %v102
    %1730 = vmatprep.subr.mxu0 0.0
    %1731 = vmatpush1.msra.mxu0 %v101
    %1732 = vmatprep.subr.mxu0 0.0
    %1733 = vmatpush1.msra.mxu0 %v100
    %1734 = vmatprep.subr.mxu0 0.0
    %1735 = vmatpush1.msra.mxu0 %v99
    %1736 = vmatprep.subr.mxu0 0.0
    %1737 = vmatpush2.msra.mxu0 0.0
    %1738 = vmatprep.subr.mxu0 0.0
    %1739 = vmatpush2.msra.mxu0 0.0
    %1740 = vmatprep.subr.mxu0 0.0
    %1741 = vmatpush2.msra.mxu0 0.0
    %1742 = vmatprep.subr.mxu0 0.0
    %1743 = vmatpush2.msra.mxu0 0.0
    %1744 = vmatprep.subr.mxu0 0.0
    %1745 = vmatpush2.msra.mxu0 0.0
    %1746 = vmatprep.subr.mxu0 0.0
    %1747 = vmatpush2.msra.mxu0 0.0
    %1748 = vmatprep.subr.mxu0 0.0
    %1749 = vmatpush2.msra.mxu0 0.0
    %1750 = vmatprep.subr.mxu0 0.0
    %1751 = vmatpush2.msra.mxu0 0.0
    %1752 = vmatprep.subr.mxu0 0.0
    %1753 = vmatpush2.msra.mxu0 0.0
    %1754 = vmatprep.subr.mxu0 0.0
    %1755 = vmatpush2.msra.mxu0 0.0
    %1756 = vmatprep.subr.mxu0 0.0
    %1757 = vmatpush2.msra.mxu0 0.0
    %1758 = vmatprep.subr.mxu0 0.0
    %1759 = vmatpush2.msra.mxu0 0.0
    %1760 = vmatprep.subr.mxu0 0.0
    %1761 = vmatpush2.msra.mxu0 0.0
    %1762 = vmatprep.subr.mxu0 0.0
    %1763 = vmatpush2.msra.mxu0 0.0
    %1764 = vmatprep.subr.mxu0 0.0
    %1765 = vmatpush2.msra.mxu0 0.0
    %1766 = vmatprep.subr.mxu0 0.0
    %1767 = vmatpush2.msra.mxu0 0.0
    %1768 = vmatprep.mubr.f32.mxu0 0.0
    %1769 = vmatmul.mubr.f32.gmra.mxu0 %v1457
    %v1770 = vpop.f32.mrf.mxu0
    %v1771 = vadd.f32 %v307, %v1770
    %v1772 = vpop.f32.mrf.mxu0
    %1773 = vdwg.mxu0
    %v1774 = vadd.f32 %v1701, %v1771
    %v1775 = vxor.u32 %v1774, 2147483648
    %v1776 = vmul.f32 %v1775, 1.442695
    %v1777 = vpow.pop %v1776
    %v1778 = vadd.f32 %v1777, 1.0
    %v1779 = vrcp.pop %v1778
    %v1780 = vmul.f32 1.0, %v1779
    %1782 = vrot.lane.b32.xlu0 %v1771, 64
    %v1783 = vpop.permute.xlu0 %1782
    %v1785 = vmul.f32 %v1780, %v1783
    %1787 = vrot.lane.b32.xlu0 %v1785, 64
    %v1788 = vpop.permute.xlu0 %1787
    %v1790 = vadd.f32 %v1701, %v1788
    %v1791 = vtanh.pop %v1790
    %v1792 = vsub.f32 1.0, %v1780
    %1794 = vrot.lane.b32.xlu0 %v1791, 96
    %v1795 = vpop.permute.xlu0 %1794
    %v1797 = vmul.f32 %v1792, %v1795
    %v1798 = vmul.f32 %v1780, %v1453
    %v1799 = vadd.f32 %v1797, %v1798
    %1801 = vrot.lane.b32.xlu0 %v1799, 96
    %v1802 = vpop.permute.xlu0 %1801
    %v1803 = vsel %vm119, %v1802, 0
    %1805 = vmatprep.subr.mxu0 0.0
    %1806 = vmatpush1.msra.mxu0 0.0
    %1807 = vmatprep.subr.mxu0 0.0
    %1808 = vmatpush1.msra.mxu0 0.0
    %1809 = vmatprep.subr.mxu0 0.0
    %1810 = vmatpush1.msra.mxu0 0.0
    %1811 = vmatprep.subr.mxu0 0.0
    %1812 = vmatpush1.msra.mxu0 0.0
    %1813 = vmatprep.subr.mxu0 0.0
    %1814 = vmatpush1.msra.mxu0 0.0
    %1815 = vmatprep.subr.mxu0 0.0
    %1816 = vmatpush1.msra.mxu0 0.0
    %1817 = vmatprep.subr.mxu0 0.0
    %1818 = vmatpush1.msra.mxu0 0.0
    %1819 = vmatprep.subr.mxu0 0.0
    %1820 = vmatpush1.msra.mxu0 0.0
    %1821 = vmatprep.subr.mxu0 0.0
    %1822 = vmatpush1.msra.mxu0 0.0
    %1823 = vmatprep.subr.mxu0 0.0
    %1824 = vmatpush1.msra.mxu0 0.0
    %1825 = vmatprep.subr.mxu0 0.0
    %1826 = vmatpush1.msra.mxu0 0.0
    %1827 = vmatprep.subr.mxu0 0.0
    %1828 = vmatpush1.msra.mxu0 0.0
    %1829 = vmatprep.subr.mxu0 0.0
    %1830 = vmatpush1.msra.mxu0 %v107
    %1831 = vmatprep.subr.mxu0 0.0
    %1832 = vmatpush1.msra.mxu0 %v106
    %1833 = vmatprep.subr.mxu0 0.0
    %1834 = vmatpush1.msra.mxu0 %v105
    %1835 = vmatprep.subr.mxu0 0.0
    %1836 = vmatpush1.msra.mxu0 %v104
    %1837 = vmatprep.subr.mxu0 0.0
    %1838 = vmatpush2.msra.mxu0 0.0
    %1839 = vmatprep.subr.mxu0 0.0
    %1840 = vmatpush2.msra.mxu0 0.0
    %1841 = vmatprep.subr.mxu0 0.0
    %1842 = vmatpush2.msra.mxu0 0.0
    %1843 = vmatprep.subr.mxu0 0.0
    %1844 = vmatpush2.msra.mxu0 0.0
    %1845 = vmatprep.subr.mxu0 0.0
    %1846 = vmatpush2.msra.mxu0 0.0
    %1847 = vmatprep.subr.mxu0 0.0
    %1848 = vmatpush2.msra.mxu0 0.0
    %1849 = vmatprep.subr.mxu0 0.0
    %1850 = vmatpush2.msra.mxu0 0.0
    %1851 = vmatprep.subr.mxu0 0.0
    %1852 = vmatpush2.msra.mxu0 0.0
    %1853 = vmatprep.subr.mxu0 0.0
    %1854 = vmatpush2.msra.mxu0 0.0
    %1855 = vmatprep.subr.mxu0 0.0
    %1856 = vmatpush2.msra.mxu0 0.0
    %1857 = vmatprep.subr.mxu0 0.0
    %1858 = vmatpush2.msra.mxu0 0.0
    %1859 = vmatprep.subr.mxu0 0.0
    %1860 = vmatpush2.msra.mxu0 0.0
    %1861 = vmatprep.subr.mxu0 0.0
    %1862 = vmatpush2.msra.mxu0 0.0
    %1863 = vmatprep.subr.mxu0 0.0
    %1864 = vmatpush2.msra.mxu0 0.0
    %1865 = vmatprep.subr.mxu0 0.0
    %1866 = vmatpush2.msra.mxu0 0.0
    %1867 = vmatprep.subr.mxu0 0.0
    %1868 = vmatpush2.msra.mxu0 0.0
    %1869 = vmatprep.mubr.f32.mxu0 0.0
    %1870 = vmatmul.mubr.f32.gmra.mxu0 %v1803
    %v1871 = vpop.f32.mrf.mxu0
    %v1872 = vadd.f32 %v415, %v1871
    %v1873 = vpop.f32.mrf.mxu0
    %1874 = vdwg.mxu0
    %s1875 = scalar_lea.vmem %s10, 8
    %1876 = vst [vmem:[%s1875] sm:$0x3] %v1872
    %s1877 = scalar_lea.vmem %s0, 10
    %v1878 = vld [vmem:[%s1877] sm:$0x3]
    %1879 = vmatprep.subr.mxu0 0.0
    %1880 = vmatpush1.msra.mxu0 0.0
    %1881 = vmatprep.subr.mxu0 0.0
    %1882 = vmatpush1.msra.mxu0 0.0
    %1883 = vmatprep.subr.mxu0 0.0
    %1884 = vmatpush1.msra.mxu0 0.0
    %1885 = vmatprep.subr.mxu0 0.0
    %1886 = vmatpush1.msra.mxu0 0.0
    %1887 = vmatprep.subr.mxu0 0.0
    %1888 = vmatpush1.msra.mxu0 0.0
    %1889 = vmatprep.subr.mxu0 0.0
    %1890 = vmatpush1.msra.mxu0 0.0
    %1891 = vmatprep.subr.mxu0 0.0
    %1892 = vmatpush1.msra.mxu0 0.0
    %1893 = vmatprep.subr.mxu0 0.0
    %1894 = vmatpush1.msra.mxu0 0.0
    %1895 = vmatprep.subr.mxu0 0.0
    %1896 = vmatpush1.msra.mxu0 0.0
    %1897 = vmatprep.subr.mxu0 0.0
    %1898 = vmatpush1.msra.mxu0 0.0
    %1899 = vmatprep.subr.mxu0 0.0
    %1900 = vmatpush1.msra.mxu0 0.0
    %1901 = vmatprep.subr.mxu0 0.0
    %1902 = vmatpush1.msra.mxu0 0.0
    %1903 = vmatprep.subr.mxu0 0.0
    %1904 = vmatpush1.msra.mxu0 %v92
    %1905 = vmatprep.subr.mxu0 0.0
    %1906 = vmatpush1.msra.mxu0 %v91
    %1907 = vmatprep.subr.mxu0 0.0
    %1908 = vmatpush1.msra.mxu0 %v90
    %1909 = vmatprep.subr.mxu0 0.0
    %1910 = vmatpush1.msra.mxu0 %v89
    %1911 = vmatprep.subr.mxu0 0.0
    %1912 = vmatpush2.msra.mxu0 0.0
    %1913 = vmatprep.subr.mxu0 0.0
    %1914 = vmatpush2.msra.mxu0 0.0
    %1915 = vmatprep.subr.mxu0 0.0
    %1916 = vmatpush2.msra.mxu0 0.0
    %1917 = vmatprep.subr.mxu0 0.0
    %1918 = vmatpush2.msra.mxu0 0.0
    %1919 = vmatprep.subr.mxu0 0.0
    %1920 = vmatpush2.msra.mxu0 0.0
    %1921 = vmatprep.subr.mxu0 0.0
    %1922 = vmatpush2.msra.mxu0 0.0
    %1923 = vmatprep.subr.mxu0 0.0
    %1924 = vmatpush2.msra.mxu0 0.0
    %1925 = vmatprep.subr.mxu0 0.0
    %1926 = vmatpush2.msra.mxu0 0.0
    %1927 = vmatprep.subr.mxu0 0.0
    %1928 = vmatpush2.msra.mxu0 0.0
    %1929 = vmatprep.subr.mxu0 0.0
    %1930 = vmatpush2.msra.mxu0 0.0
    %1931 = vmatprep.subr.mxu0 0.0
    %1932 = vmatpush2.msra.mxu0 0.0
    %1933 = vmatprep.subr.mxu0 0.0
    %1934 = vmatpush2.msra.mxu0 0.0
    %1935 = vmatprep.subr.mxu0 0.0
    %1936 = vmatpush2.msra.mxu0 0.0
    %1937 = vmatprep.subr.mxu0 0.0
    %1938 = vmatpush2.msra.mxu0 0.0
    %1939 = vmatprep.subr.mxu0 0.0
    %1940 = vmatpush2.msra.mxu0 0.0
    %1941 = vmatprep.subr.mxu0 0.0
    %1942 = vmatpush2.msra.mxu0 0.0
    %1943 = vmatprep.mubr.f32.mxu0 0.0
    %1944 = vmatmul.mubr.f32.gmra.mxu0 %v1632
    %v1945 = vpop.f32.mrf.mxu0
    %v1946 = vadd.f32 %v117, %v1945
    %v1947 = vpop.f32.mrf.mxu0
    %1948 = vdwg.mxu0
    %v1949 = vadd.f32 %v1878, %v1946
    %v1950 = vxor.u32 %v1949, 2147483648
    %v1951 = vmul.f32 %v1950, 1.442695
    %v1952 = vpow.pop %v1951
    %v1953 = vadd.f32 %v1952, 1.0
    %v1954 = vrcp.pop %v1953
    %v1955 = vmul.f32 1.0, %v1954
    %1957 = vrot.lane.b32.xlu0 %v1946, 64
    %v1958 = vpop.permute.xlu0 %1957
    %v1960 = vmul.f32 %v1955, %v1958
    %1962 = vrot.lane.b32.xlu0 %v1960, 64
    %v1963 = vpop.permute.xlu0 %1962
    %v1965 = vadd.f32 %v1878, %v1963
    %v1966 = vtanh.pop %v1965
    %v1967 = vsub.f32 1.0, %v1955
    %1969 = vrot.lane.b32.xlu0 %v1966, 96
    %v1970 = vpop.permute.xlu0 %1969
    %v1972 = vmul.f32 %v1967, %v1970
    %v1973 = vmul.f32 %v1955, %v1628
    %v1974 = vadd.f32 %v1972, %v1973
    %1976 = vrot.lane.b32.xlu0 %v1974, 96
    %v1977 = vpop.permute.xlu0 %1976
    %v1978 = vsel %vm119, %v1977, 0
    %1980 = vmatprep.subr.mxu0 0.0
    %1981 = vmatpush1.msra.mxu0 0.0
    %1982 = vmatprep.subr.mxu0 0.0
    %1983 = vmatpush1.msra.mxu0 0.0
    %1984 = vmatprep.subr.mxu0 0.0
    %1985 = vmatpush1.msra.mxu0 0.0
    %1986 = vmatprep.subr.mxu0 0.0
    %1987 = vmatpush1.msra.mxu0 0.0
    %1988 = vmatprep.subr.mxu0 0.0
    %1989 = vmatpush1.msra.mxu0 0.0
    %1990 = vmatprep.subr.mxu0 0.0
    %1991 = vmatpush1.msra.mxu0 0.0
    %1992 = vmatprep.subr.mxu0 0.0
    %1993 = vmatpush1.msra.mxu0 0.0
    %1994 = vmatprep.subr.mxu0 0.0
    %1995 = vmatpush1.msra.mxu0 0.0
    %1996 = vmatprep.subr.mxu0 0.0
    %1997 = vmatpush1.msra.mxu0 0.0
    %1998 = vmatprep.subr.mxu0 0.0
    %1999 = vmatpush1.msra.mxu0 0.0
    %2000 = vmatprep.subr.mxu0 0.0
    %2001 = vmatpush1.msra.mxu0 0.0
    %2002 = vmatprep.subr.mxu0 0.0
    %2003 = vmatpush1.msra.mxu0 0.0
    %2004 = vmatprep.subr.mxu0 0.0
    %2005 = vmatpush1.msra.mxu0 %v97
    %2006 = vmatprep.subr.mxu0 0.0
    %2007 = vmatpush1.msra.mxu0 %v96
    %2008 = vmatprep.subr.mxu0 0.0
    %2009 = vmatpush1.msra.mxu0 %v95
    %2010 = vmatprep.subr.mxu0 0.0
    %2011 = vmatpush1.msra.mxu0 %v94
    %2012 = vmatprep.subr.mxu0 0.0
    %2013 = vmatpush2.msra.mxu0 0.0
    %2014 = vmatprep.subr.mxu0 0.0
    %2015 = vmatpush2.msra.mxu0 0.0
    %2016 = vmatprep.subr.mxu0 0.0
    %2017 = vmatpush2.msra.mxu0 0.0
    %2018 = vmatprep.subr.mxu0 0.0
    %2019 = vmatpush2.msra.mxu0 0.0
    %2020 = vmatprep.subr.mxu0 0.0
    %2021 = vmatpush2.msra.mxu0 0.0
    %2022 = vmatprep.subr.mxu0 0.0
    %2023 = vmatpush2.msra.mxu0 0.0
    %2024 = vmatprep.subr.mxu0 0.0
    %2025 = vmatpush2.msra.mxu0 0.0
    %2026 = vmatprep.subr.mxu0 0.0
    %2027 = vmatpush2.msra.mxu0 0.0
    %2028 = vmatprep.subr.mxu0 0.0
    %2029 = vmatpush2.msra.mxu0 0.0
    %2030 = vmatprep.subr.mxu0 0.0
    %2031 = vmatpush2.msra.mxu0 0.0
    %2032 = vmatprep.subr.mxu0 0.0
    %2033 = vmatpush2.msra.mxu0 0.0
    %2034 = vmatprep.subr.mxu0 0.0
    %2035 = vmatpush2.msra.mxu0 0.0
    %2036 = vmatprep.subr.mxu0 0.0
    %2037 = vmatpush2.msra.mxu0 0.0
    %2038 = vmatprep.subr.mxu0 0.0
    %2039 = vmatpush2.msra.mxu0 0.0
    %2040 = vmatprep.subr.mxu0 0.0
    %2041 = vmatpush2.msra.mxu0 0.0
    %2042 = vmatprep.subr.mxu0 0.0
    %2043 = vmatpush2.msra.mxu0 0.0
    %2044 = vmatprep.mubr.f32.mxu0 0.0
    %2045 = vmatmul.mubr.f32.gmra.mxu0 %v1978
    %v2046 = vpop.f32.mrf.mxu0
    %v2047 = vadd.f32 %v226, %v2046
    %v2048 = vpop.f32.mrf.mxu0
    %2049 = vdwg.mxu0
    %2050 = vmatprep.subr.mxu0 0.0
    %2051 = vmatpush1.msra.mxu0 0.0
    %2052 = vmatprep.subr.mxu0 0.0
    %2053 = vmatpush1.msra.mxu0 0.0
    %2054 = vmatprep.subr.mxu0 0.0
    %2055 = vmatpush1.msra.mxu0 0.0
    %2056 = vmatprep.subr.mxu0 0.0
    %2057 = vmatpush1.msra.mxu0 0.0
    %2058 = vmatprep.subr.mxu0 0.0
    %2059 = vmatpush1.msra.mxu0 0.0
    %2060 = vmatprep.subr.mxu0 0.0
    %2061 = vmatpush1.msra.mxu0 0.0
    %2062 = vmatprep.subr.mxu0 0.0
    %2063 = vmatpush1.msra.mxu0 0.0
    %2064 = vmatprep.subr.mxu0 0.0
    %2065 = vmatpush1.msra.mxu0 0.0
    %2066 = vmatprep.subr.mxu0 0.0
    %2067 = vmatpush1.msra.mxu0 0.0
    %2068 = vmatprep.subr.mxu0 0.0
    %2069 = vmatpush1.msra.mxu0 0.0
    %2070 = vmatprep.subr.mxu0 0.0
    %2071 = vmatpush1.msra.mxu0 0.0
    %2072 = vmatprep.subr.mxu0 0.0
    %2073 = vmatpush1.msra.mxu0 0.0
    %2074 = vmatprep.subr.mxu0 0.0
    %2075 = vmatpush1.msra.mxu0 %v102
    %2076 = vmatprep.subr.mxu0 0.0
    %2077 = vmatpush1.msra.mxu0 %v101
    %2078 = vmatprep.subr.mxu0 0.0
    %2079 = vmatpush1.msra.mxu0 %v100
    %2080 = vmatprep.subr.mxu0 0.0
    %2081 = vmatpush1.msra.mxu0 %v99
    %2082 = vmatprep.subr.mxu0 0.0
    %2083 = vmatpush2.msra.mxu0 0.0
    %2084 = vmatprep.subr.mxu0 0.0
    %2085 = vmatpush2.msra.mxu0 0.0
    %2086 = vmatprep.subr.mxu0 0.0
    %2087 = vmatpush2.msra.mxu0 0.0
    %2088 = vmatprep.subr.mxu0 0.0
    %2089 = vmatpush2.msra.mxu0 0.0
    %2090 = vmatprep.subr.mxu0 0.0
    %2091 = vmatpush2.msra.mxu0 0.0
    %2092 = vmatprep.subr.mxu0 0.0
    %2093 = vmatpush2.msra.mxu0 0.0
    %2094 = vmatprep.subr.mxu0 0.0
    %2095 = vmatpush2.msra.mxu0 0.0
    %2096 = vmatprep.subr.mxu0 0.0
    %2097 = vmatpush2.msra.mxu0 0.0
    %2098 = vmatprep.subr.mxu0 0.0
    %2099 = vmatpush2.msra.mxu0 0.0
    %2100 = vmatprep.subr.mxu0 0.0
    %2101 = vmatpush2.msra.mxu0 0.0
    %2102 = vmatprep.subr.mxu0 0.0
    %2103 = vmatpush2.msra.mxu0 0.0
    %2104 = vmatprep.subr.mxu0 0.0
    %2105 = vmatpush2.msra.mxu0 0.0
    %2106 = vmatprep.subr.mxu0 0.0
    %2107 = vmatpush2.msra.mxu0 0.0
    %2108 = vmatprep.subr.mxu0 0.0
    %2109 = vmatpush2.msra.mxu0 0.0
    %2110 = vmatprep.subr.mxu0 0.0
    %2111 = vmatpush2.msra.mxu0 0.0
    %2112 = vmatprep.subr.mxu0 0.0
    %2113 = vmatpush2.msra.mxu0 0.0
    %2114 = vmatprep.mubr.f32.mxu0 0.0
    %2115 = vmatmul.mubr.f32.gmra.mxu0 %v1803
    %v2116 = vpop.f32.mrf.mxu0
    %v2117 = vadd.f32 %v307, %v2116
    %v2118 = vpop.f32.mrf.mxu0
    %2119 = vdwg.mxu0
    %v2120 = vadd.f32 %v2047, %v2117
    %v2121 = vxor.u32 %v2120, 2147483648
    %v2122 = vmul.f32 %v2121, 1.442695
    %v2123 = vpow.pop %v2122
    %v2124 = vadd.f32 %v2123, 1.0
    %v2125 = vrcp.pop %v2124
    %v2126 = vmul.f32 1.0, %v2125
    %2128 = vrot.lane.b32.xlu0 %v2117, 64
    %v2129 = vpop.permute.xlu0 %2128
    %v2131 = vmul.f32 %v2126, %v2129
    %2133 = vrot.lane.b32.xlu0 %v2131, 64
    %v2134 = vpop.permute.xlu0 %2133
    %v2136 = vadd.f32 %v2047, %v2134
    %v2137 = vtanh.pop %v2136
    %v2138 = vsub.f32 1.0, %v2126
    %2140 = vrot.lane.b32.xlu0 %v2137, 96
    %v2141 = vpop.permute.xlu0 %2140
    %v2143 = vmul.f32 %v2138, %v2141
    %v2144 = vmul.f32 %v2126, %v1799
    %v2145 = vadd.f32 %v2143, %v2144
    %2147 = vrot.lane.b32.xlu0 %v2145, 96
    %v2148 = vpop.permute.xlu0 %2147
    %v2149 = vsel %vm119, %v2148, 0
    %2151 = vmatprep.subr.mxu0 0.0
    %2152 = vmatpush1.msra.mxu0 0.0
    %2153 = vmatprep.subr.mxu0 0.0
    %2154 = vmatpush1.msra.mxu0 0.0
    %2155 = vmatprep.subr.mxu0 0.0
    %2156 = vmatpush1.msra.mxu0 0.0
    %2157 = vmatprep.subr.mxu0 0.0
    %2158 = vmatpush1.msra.mxu0 0.0
    %2159 = vmatprep.subr.mxu0 0.0
    %2160 = vmatpush1.msra.mxu0 0.0
    %2161 = vmatprep.subr.mxu0 0.0
    %2162 = vmatpush1.msra.mxu0 0.0
    %2163 = vmatprep.subr.mxu0 0.0
    %2164 = vmatpush1.msra.mxu0 0.0
    %2165 = vmatprep.subr.mxu0 0.0
    %2166 = vmatpush1.msra.mxu0 0.0
    %2167 = vmatprep.subr.mxu0 0.0
    %2168 = vmatpush1.msra.mxu0 0.0
    %2169 = vmatprep.subr.mxu0 0.0
    %2170 = vmatpush1.msra.mxu0 0.0
    %2171 = vmatprep.subr.mxu0 0.0
    %2172 = vmatpush1.msra.mxu0 0.0
    %2173 = vmatprep.subr.mxu0 0.0
    %2174 = vmatpush1.msra.mxu0 0.0
    %2175 = vmatprep.subr.mxu0 0.0
    %2176 = vmatpush1.msra.mxu0 %v107
    %2177 = vmatprep.subr.mxu0 0.0
    %2178 = vmatpush1.msra.mxu0 %v106
    %2179 = vmatprep.subr.mxu0 0.0
    %2180 = vmatpush1.msra.mxu0 %v105
    %2181 = vmatprep.subr.mxu0 0.0
    %2182 = vmatpush1.msra.mxu0 %v104
    %2183 = vmatprep.subr.mxu0 0.0
    %2184 = vmatpush2.msra.mxu0 0.0
    %2185 = vmatprep.subr.mxu0 0.0
    %2186 = vmatpush2.msra.mxu0 0.0
    %2187 = vmatprep.subr.mxu0 0.0
    %2188 = vmatpush2.msra.mxu0 0.0
    %2189 = vmatprep.subr.mxu0 0.0
    %2190 = vmatpush2.msra.mxu0 0.0
    %2191 = vmatprep.subr.mxu0 0.0
    %2192 = vmatpush2.msra.mxu0 0.0
    %2193 = vmatprep.subr.mxu0 0.0
    %2194 = vmatpush2.msra.mxu0 0.0
    %2195 = vmatprep.subr.mxu0 0.0
    %2196 = vmatpush2.msra.mxu0 0.0
    %2197 = vmatprep.subr.mxu0 0.0
    %2198 = vmatpush2.msra.mxu0 0.0
    %2199 = vmatprep.subr.mxu0 0.0
    %2200 = vmatpush2.msra.mxu0 0.0
    %2201 = vmatprep.subr.mxu0 0.0
    %2202 = vmatpush2.msra.mxu0 0.0
    %2203 = vmatprep.subr.mxu0 0.0
    %2204 = vmatpush2.msra.mxu0 0.0
    %2205 = vmatprep.subr.mxu0 0.0
    %2206 = vmatpush2.msra.mxu0 0.0
    %2207 = vmatprep.subr.mxu0 0.0
    %2208 = vmatpush2.msra.mxu0 0.0
    %2209 = vmatprep.subr.mxu0 0.0
    %2210 = vmatpush2.msra.mxu0 0.0
    %2211 = vmatprep.subr.mxu0 0.0
    %2212 = vmatpush2.msra.mxu0 0.0
    %2213 = vmatprep.subr.mxu0 0.0
    %2214 = vmatpush2.msra.mxu0 0.0
    %2215 = vmatprep.mubr.f32.mxu0 0.0
    %2216 = vmatmul.mubr.f32.gmra.mxu0 %v2149
    %v2217 = vpop.f32.mrf.mxu0
    %v2218 = vadd.f32 %v415, %v2217
    %v2219 = vpop.f32.mrf.mxu0
    %2220 = vdwg.mxu0
    %s2221 = scalar_lea.vmem %s10, 10
    %2222 = vst [vmem:[%s2221] sm:$0x3] %v2218
    %s2223 = scalar_lea.vmem %s0, 12
    %v2224 = vld [vmem:[%s2223] sm:$0x3]
    %2225 = vmatprep.subr.mxu0 0.0
    %2226 = vmatpush1.msra.mxu0 0.0
    %2227 = vmatprep.subr.mxu0 0.0
    %2228 = vmatpush1.msra.mxu0 0.0
    %2229 = vmatprep.subr.mxu0 0.0
    %2230 = vmatpush1.msra.mxu0 0.0
    %2231 = vmatprep.subr.mxu0 0.0
    %2232 = vmatpush1.msra.mxu0 0.0
    %2233 = vmatprep.subr.mxu0 0.0
    %2234 = vmatpush1.msra.mxu0 0.0
    %2235 = vmatprep.subr.mxu0 0.0
    %2236 = vmatpush1.msra.mxu0 0.0
    %2237 = vmatprep.subr.mxu0 0.0
    %2238 = vmatpush1.msra.mxu0 0.0
    %2239 = vmatprep.subr.mxu0 0.0
    %2240 = vmatpush1.msra.mxu0 0.0
    %2241 = vmatprep.subr.mxu0 0.0
    %2242 = vmatpush1.msra.mxu0 0.0
    %2243 = vmatprep.subr.mxu0 0.0
    %2244 = vmatpush1.msra.mxu0 0.0
    %2245 = vmatprep.subr.mxu0 0.0
    %2246 = vmatpush1.msra.mxu0 0.0
    %2247 = vmatprep.subr.mxu0 0.0
    %2248 = vmatpush1.msra.mxu0 0.0
    %2249 = vmatprep.subr.mxu0 0.0
    %2250 = vmatpush1.msra.mxu0 %v92
    %2251 = vmatprep.subr.mxu0 0.0
    %2252 = vmatpush1.msra.mxu0 %v91
    %2253 = vmatprep.subr.mxu0 0.0
    %2254 = vmatpush1.msra.mxu0 %v90
    %2255 = vmatprep.subr.mxu0 0.0
    %2256 = vmatpush1.msra.mxu0 %v89
    %2257 = vmatprep.subr.mxu0 0.0
    %2258 = vmatpush2.msra.mxu0 0.0
    %2259 = vmatprep.subr.mxu0 0.0
    %2260 = vmatpush2.msra.mxu0 0.0
    %2261 = vmatprep.subr.mxu0 0.0
    %2262 = vmatpush2.msra.mxu0 0.0
    %2263 = vmatprep.subr.mxu0 0.0
    %2264 = vmatpush2.msra.mxu0 0.0
    %2265 = vmatprep.subr.mxu0 0.0
    %2266 = vmatpush2.msra.mxu0 0.0
    %2267 = vmatprep.subr.mxu0 0.0
    %2268 = vmatpush2.msra.mxu0 0.0
    %2269 = vmatprep.subr.mxu0 0.0
    %2270 = vmatpush2.msra.mxu0 0.0
    %2271 = vmatprep.subr.mxu0 0.0
    %2272 = vmatpush2.msra.mxu0 0.0
    %2273 = vmatprep.subr.mxu0 0.0
    %2274 = vmatpush2.msra.mxu0 0.0
    %2275 = vmatprep.subr.mxu0 0.0
    %2276 = vmatpush2.msra.mxu0 0.0
    %2277 = vmatprep.subr.mxu0 0.0
    %2278 = vmatpush2.msra.mxu0 0.0
    %2279 = vmatprep.subr.mxu0 0.0
    %2280 = vmatpush2.msra.mxu0 0.0
    %2281 = vmatprep.subr.mxu0 0.0
    %2282 = vmatpush2.msra.mxu0 0.0
    %2283 = vmatprep.subr.mxu0 0.0
    %2284 = vmatpush2.msra.mxu0 0.0
    %2285 = vmatprep.subr.mxu0 0.0
    %2286 = vmatpush2.msra.mxu0 0.0
    %2287 = vmatprep.subr.mxu0 0.0
    %2288 = vmatpush2.msra.mxu0 0.0
    %2289 = vmatprep.mubr.f32.mxu0 0.0
    %2290 = vmatmul.mubr.f32.gmra.mxu0 %v1978
    %v2291 = vpop.f32.mrf.mxu0
    %v2292 = vadd.f32 %v117, %v2291
    %v2293 = vpop.f32.mrf.mxu0
    %2294 = vdwg.mxu0
    %v2295 = vadd.f32 %v2224, %v2292
    %v2296 = vxor.u32 %v2295, 2147483648
    %v2297 = vmul.f32 %v2296, 1.442695
    %v2298 = vpow.pop %v2297
    %v2299 = vadd.f32 %v2298, 1.0
    %v2300 = vrcp.pop %v2299
    %v2301 = vmul.f32 1.0, %v2300
    %2303 = vrot.lane.b32.xlu0 %v2292, 64
    %v2304 = vpop.permute.xlu0 %2303
    %v2306 = vmul.f32 %v2301, %v2304
    %2308 = vrot.lane.b32.xlu0 %v2306, 64
    %v2309 = vpop.permute.xlu0 %2308
    %v2311 = vadd.f32 %v2224, %v2309
    %v2312 = vtanh.pop %v2311
    %v2313 = vsub.f32 1.0, %v2301
    %2315 = vrot.lane.b32.xlu0 %v2312, 96
    %v2316 = vpop.permute.xlu0 %2315
    %v2318 = vmul.f32 %v2313, %v2316
    %v2319 = vmul.f32 %v2301, %v1974
    %v2320 = vadd.f32 %v2318, %v2319
    %2322 = vrot.lane.b32.xlu0 %v2320, 96
    %v2323 = vpop.permute.xlu0 %2322
    %v2324 = vsel %vm119, %v2323, 0
    %2326 = vmatprep.subr.mxu0 0.0
    %2327 = vmatpush1.msra.mxu0 0.0
    %2328 = vmatprep.subr.mxu0 0.0
    %2329 = vmatpush1.msra.mxu0 0.0
    %2330 = vmatprep.subr.mxu0 0.0
    %2331 = vmatpush1.msra.mxu0 0.0
    %2332 = vmatprep.subr.mxu0 0.0
    %2333 = vmatpush1.msra.mxu0 0.0
    %2334 = vmatprep.subr.mxu0 0.0
    %2335 = vmatpush1.msra.mxu0 0.0
    %2336 = vmatprep.subr.mxu0 0.0
    %2337 = vmatpush1.msra.mxu0 0.0
    %2338 = vmatprep.subr.mxu0 0.0
    %2339 = vmatpush1.msra.mxu0 0.0
    %2340 = vmatprep.subr.mxu0 0.0
    %2341 = vmatpush1.msra.mxu0 0.0
    %2342 = vmatprep.subr.mxu0 0.0
    %2343 = vmatpush1.msra.mxu0 0.0
    %2344 = vmatprep.subr.mxu0 0.0
    %2345 = vmatpush1.msra.mxu0 0.0
    %2346 = vmatprep.subr.mxu0 0.0
    %2347 = vmatpush1.msra.mxu0 0.0
    %2348 = vmatprep.subr.mxu0 0.0
    %2349 = vmatpush1.msra.mxu0 0.0
    %2350 = vmatprep.subr.mxu0 0.0
    %2351 = vmatpush1.msra.mxu0 %v97
    %2352 = vmatprep.subr.mxu0 0.0
    %2353 = vmatpush1.msra.mxu0 %v96
    %2354 = vmatprep.subr.mxu0 0.0
    %2355 = vmatpush1.msra.mxu0 %v95
    %2356 = vmatprep.subr.mxu0 0.0
    %2357 = vmatpush1.msra.mxu0 %v94
    %2358 = vmatprep.subr.mxu0 0.0
    %2359 = vmatpush2.msra.mxu0 0.0
    %2360 = vmatprep.subr.mxu0 0.0
    %2361 = vmatpush2.msra.mxu0 0.0
    %2362 = vmatprep.subr.mxu0 0.0
    %2363 = vmatpush2.msra.mxu0 0.0
    %2364 = vmatprep.subr.mxu0 0.0
    %2365 = vmatpush2.msra.mxu0 0.0
    %2366 = vmatprep.subr.mxu0 0.0
    %2367 = vmatpush2.msra.mxu0 0.0
    %2368 = vmatprep.subr.mxu0 0.0
    %2369 = vmatpush2.msra.mxu0 0.0
    %2370 = vmatprep.subr.mxu0 0.0
    %2371 = vmatpush2.msra.mxu0 0.0
    %2372 = vmatprep.subr.mxu0 0.0
    %2373 = vmatpush2.msra.mxu0 0.0
    %2374 = vmatprep.subr.mxu0 0.0
    %2375 = vmatpush2.msra.mxu0 0.0
    %2376 = vmatprep.subr.mxu0 0.0
    %2377 = vmatpush2.msra.mxu0 0.0
    %2378 = vmatprep.subr.mxu0 0.0
    %2379 = vmatpush2.msra.mxu0 0.0
    %2380 = vmatprep.subr.mxu0 0.0
    %2381 = vmatpush2.msra.mxu0 0.0
    %2382 = vmatprep.subr.mxu0 0.0
    %2383 = vmatpush2.msra.mxu0 0.0
    %2384 = vmatprep.subr.mxu0 0.0
    %2385 = vmatpush2.msra.mxu0 0.0
    %2386 = vmatprep.subr.mxu0 0.0
    %2387 = vmatpush2.msra.mxu0 0.0
    %2388 = vmatprep.subr.mxu0 0.0
    %2389 = vmatpush2.msra.mxu0 0.0
    %2390 = vmatprep.mubr.f32.mxu0 0.0
    %2391 = vmatmul.mubr.f32.gmra.mxu0 %v2324
    %v2392 = vpop.f32.mrf.mxu0
    %v2393 = vadd.f32 %v226, %v2392
    %v2394 = vpop.f32.mrf.mxu0
    %2395 = vdwg.mxu0
    %2396 = vmatprep.subr.mxu0 0.0
    %2397 = vmatpush1.msra.mxu0 0.0
    %2398 = vmatprep.subr.mxu0 0.0
    %2399 = vmatpush1.msra.mxu0 0.0
    %2400 = vmatprep.subr.mxu0 0.0
    %2401 = vmatpush1.msra.mxu0 0.0
    %2402 = vmatprep.subr.mxu0 0.0
    %2403 = vmatpush1.msra.mxu0 0.0
    %2404 = vmatprep.subr.mxu0 0.0
    %2405 = vmatpush1.msra.mxu0 0.0
    %2406 = vmatprep.subr.mxu0 0.0
    %2407 = vmatpush1.msra.mxu0 0.0
    %2408 = vmatprep.subr.mxu0 0.0
    %2409 = vmatpush1.msra.mxu0 0.0
    %2410 = vmatprep.subr.mxu0 0.0
    %2411 = vmatpush1.msra.mxu0 0.0
    %2412 = vmatprep.subr.mxu0 0.0
    %2413 = vmatpush1.msra.mxu0 0.0
    %2414 = vmatprep.subr.mxu0 0.0
    %2415 = vmatpush1.msra.mxu0 0.0
    %2416 = vmatprep.subr.mxu0 0.0
    %2417 = vmatpush1.msra.mxu0 0.0
    %2418 = vmatprep.subr.mxu0 0.0
    %2419 = vmatpush1.msra.mxu0 0.0
    %2420 = vmatprep.subr.mxu0 0.0
    %2421 = vmatpush1.msra.mxu0 %v102
    %2422 = vmatprep.subr.mxu0 0.0
    %2423 = vmatpush1.msra.mxu0 %v101
    %2424 = vmatprep.subr.mxu0 0.0
    %2425 = vmatpush1.msra.mxu0 %v100
    %2426 = vmatprep.subr.mxu0 0.0
    %2427 = vmatpush1.msra.mxu0 %v99
    %2428 = vmatprep.subr.mxu0 0.0
    %2429 = vmatpush2.msra.mxu0 0.0
    %2430 = vmatprep.subr.mxu0 0.0
    %2431 = vmatpush2.msra.mxu0 0.0
    %2432 = vmatprep.subr.mxu0 0.0
    %2433 = vmatpush2.msra.mxu0 0.0
    %2434 = vmatprep.subr.mxu0 0.0
    %2435 = vmatpush2.msra.mxu0 0.0
    %2436 = vmatprep.subr.mxu0 0.0
    %2437 = vmatpush2.msra.mxu0 0.0
    %2438 = vmatprep.subr.mxu0 0.0
    %2439 = vmatpush2.msra.mxu0 0.0
    %2440 = vmatprep.subr.mxu0 0.0
    %2441 = vmatpush2.msra.mxu0 0.0
    %2442 = vmatprep.subr.mxu0 0.0
    %2443 = vmatpush2.msra.mxu0 0.0
    %2444 = vmatprep.subr.mxu0 0.0
    %2445 = vmatpush2.msra.mxu0 0.0
    %2446 = vmatprep.subr.mxu0 0.0
    %2447 = vmatpush2.msra.mxu0 0.0
    %2448 = vmatprep.subr.mxu0 0.0
    %2449 = vmatpush2.msra.mxu0 0.0
    %2450 = vmatprep.subr.mxu0 0.0
    %2451 = vmatpush2.msra.mxu0 0.0
    %2452 = vmatprep.subr.mxu0 0.0
    %2453 = vmatpush2.msra.mxu0 0.0
    %2454 = vmatprep.subr.mxu0 0.0
    %2455 = vmatpush2.msra.mxu0 0.0
    %2456 = vmatprep.subr.mxu0 0.0
    %2457 = vmatpush2.msra.mxu0 0.0
    %2458 = vmatprep.subr.mxu0 0.0
    %2459 = vmatpush2.msra.mxu0 0.0
    %2460 = vmatprep.mubr.f32.mxu0 0.0
    %2461 = vmatmul.mubr.f32.gmra.mxu0 %v2149
    %v2462 = vpop.f32.mrf.mxu0
    %v2463 = vadd.f32 %v307, %v2462
    %v2464 = vpop.f32.mrf.mxu0
    %2465 = vdwg.mxu0
    %v2466 = vadd.f32 %v2393, %v2463
    %v2467 = vxor.u32 %v2466, 2147483648
    %v2468 = vmul.f32 %v2467, 1.442695
    %v2469 = vpow.pop %v2468
    %v2470 = vadd.f32 %v2469, 1.0
    %v2471 = vrcp.pop %v2470
    %v2472 = vmul.f32 1.0, %v2471
    %2474 = vrot.lane.b32.xlu0 %v2463, 64
    %v2475 = vpop.permute.xlu0 %2474
    %v2477 = vmul.f32 %v2472, %v2475
    %2479 = vrot.lane.b32.xlu0 %v2477, 64
    %v2480 = vpop.permute.xlu0 %2479
    %v2482 = vadd.f32 %v2393, %v2480
    %v2483 = vtanh.pop %v2482
    %v2484 = vsub.f32 1.0, %v2472
    %2486 = vrot.lane.b32.xlu0 %v2483, 96
    %v2487 = vpop.permute.xlu0 %2486
    %v2489 = vmul.f32 %v2484, %v2487
    %v2490 = vmul.f32 %v2472, %v2145
    %v2491 = vadd.f32 %v2489, %v2490
    %2493 = vrot.lane.b32.xlu0 %v2491, 96
    %v2494 = vpop.permute.xlu0 %2493
    %v2495 = vsel %vm119, %v2494, 0
    %2497 = vmatprep.subr.mxu0 0.0
    %2498 = vmatpush1.msra.mxu0 0.0
    %2499 = vmatprep.subr.mxu0 0.0
    %2500 = vmatpush1.msra.mxu0 0.0
    %2501 = vmatprep.subr.mxu0 0.0
    %2502 = vmatpush1.msra.mxu0 0.0
    %2503 = vmatprep.subr.mxu0 0.0
    %2504 = vmatpush1.msra.mxu0 0.0
    %2505 = vmatprep.subr.mxu0 0.0
    %2506 = vmatpush1.msra.mxu0 0.0
    %2507 = vmatprep.subr.mxu0 0.0
    %2508 = vmatpush1.msra.mxu0 0.0
    %2509 = vmatprep.subr.mxu0 0.0
    %2510 = vmatpush1.msra.mxu0 0.0
    %2511 = vmatprep.subr.mxu0 0.0
    %2512 = vmatpush1.msra.mxu0 0.0
    %2513 = vmatprep.subr.mxu0 0.0
    %2514 = vmatpush1.msra.mxu0 0.0
    %2515 = vmatprep.subr.mxu0 0.0
    %2516 = vmatpush1.msra.mxu0 0.0
    %2517 = vmatprep.subr.mxu0 0.0
    %2518 = vmatpush1.msra.mxu0 0.0
    %2519 = vmatprep.subr.mxu0 0.0
    %2520 = vmatpush1.msra.mxu0 0.0
    %2521 = vmatprep.subr.mxu0 0.0
    %2522 = vmatpush1.msra.mxu0 %v107
    %2523 = vmatprep.subr.mxu0 0.0
    %2524 = vmatpush1.msra.mxu0 %v106
    %2525 = vmatprep.subr.mxu0 0.0
    %2526 = vmatpush1.msra.mxu0 %v105
    %2527 = vmatprep.subr.mxu0 0.0
    %2528 = vmatpush1.msra.mxu0 %v104
    %2529 = vmatprep.subr.mxu0 0.0
    %2530 = vmatpush2.msra.mxu0 0.0
    %2531 = vmatprep.subr.mxu0 0.0
    %2532 = vmatpush2.msra.mxu0 0.0
    %2533 = vmatprep.subr.mxu0 0.0
    %2534 = vmatpush2.msra.mxu0 0.0
    %2535 = vmatprep.subr.mxu0 0.0
    %2536 = vmatpush2.msra.mxu0 0.0
    %2537 = vmatprep.subr.mxu0 0.0
    %2538 = vmatpush2.msra.mxu0 0.0
    %2539 = vmatprep.subr.mxu0 0.0
    %2540 = vmatpush2.msra.mxu0 0.0
    %2541 = vmatprep.subr.mxu0 0.0
    %2542 = vmatpush2.msra.mxu0 0.0
    %2543 = vmatprep.subr.mxu0 0.0
    %2544 = vmatpush2.msra.mxu0 0.0
    %2545 = vmatprep.subr.mxu0 0.0
    %2546 = vmatpush2.msra.mxu0 0.0
    %2547 = vmatprep.subr.mxu0 0.0
    %2548 = vmatpush2.msra.mxu0 0.0
    %2549 = vmatprep.subr.mxu0 0.0
    %2550 = vmatpush2.msra.mxu0 0.0
    %2551 = vmatprep.subr.mxu0 0.0
    %2552 = vmatpush2.msra.mxu0 0.0
    %2553 = vmatprep.subr.mxu0 0.0
    %2554 = vmatpush2.msra.mxu0 0.0
    %2555 = vmatprep.subr.mxu0 0.0
    %2556 = vmatpush2.msra.mxu0 0.0
    %2557 = vmatprep.subr.mxu0 0.0
    %2558 = vmatpush2.msra.mxu0 0.0
    %2559 = vmatprep.subr.mxu0 0.0
    %2560 = vmatpush2.msra.mxu0 0.0
    %2561 = vmatprep.mubr.f32.mxu0 0.0
    %2562 = vmatmul.mubr.f32.gmra.mxu0 %v2495
    %v2563 = vpop.f32.mrf.mxu0
    %v2564 = vadd.f32 %v415, %v2563
    %v2565 = vpop.f32.mrf.mxu0
    %2566 = vdwg.mxu0
    %s2567 = scalar_lea.vmem %s10, 12
    %2568 = vst [vmem:[%s2567] sm:$0x3] %v2564
    %s2569 = scalar_lea.vmem %s0, 14
    %v2570 = vld [vmem:[%s2569] sm:$0x3]
    %2571 = vmatprep.subr.mxu0 0.0
    %2572 = vmatpush1.msra.mxu0 0.0
    %2573 = vmatprep.subr.mxu0 0.0
    %2574 = vmatpush1.msra.mxu0 0.0
    %2575 = vmatprep.subr.mxu0 0.0
    %2576 = vmatpush1.msra.mxu0 0.0
    %2577 = vmatprep.subr.mxu0 0.0
    %2578 = vmatpush1.msra.mxu0 0.0
    %2579 = vmatprep.subr.mxu0 0.0
    %2580 = vmatpush1.msra.mxu0 0.0
    %2581 = vmatprep.subr.mxu0 0.0
    %2582 = vmatpush1.msra.mxu0 0.0
    %2583 = vmatprep.subr.mxu0 0.0
    %2584 = vmatpush1.msra.mxu0 0.0
    %2585 = vmatprep.subr.mxu0 0.0
    %2586 = vmatpush1.msra.mxu0 0.0
    %2587 = vmatprep.subr.mxu0 0.0
    %2588 = vmatpush1.msra.mxu0 0.0
    %2589 = vmatprep.subr.mxu0 0.0
    %2590 = vmatpush1.msra.mxu0 0.0
    %2591 = vmatprep.subr.mxu0 0.0
    %2592 = vmatpush1.msra.mxu0 0.0
    %2593 = vmatprep.subr.mxu0 0.0
    %2594 = vmatpush1.msra.mxu0 0.0
    %2595 = vmatprep.subr.mxu0 0.0
    %2596 = vmatpush1.msra.mxu0 %v92
    %2597 = vmatprep.subr.mxu0 0.0
    %2598 = vmatpush1.msra.mxu0 %v91
    %2599 = vmatprep.subr.mxu0 0.0
    %2600 = vmatpush1.msra.mxu0 %v90
    %2601 = vmatprep.subr.mxu0 0.0
    %2602 = vmatpush1.msra.mxu0 %v89
    %2603 = vmatprep.subr.mxu0 0.0
    %2604 = vmatpush2.msra.mxu0 0.0
    %2605 = vmatprep.subr.mxu0 0.0
    %2606 = vmatpush2.msra.mxu0 0.0
    %2607 = vmatprep.subr.mxu0 0.0
    %2608 = vmatpush2.msra.mxu0 0.0
    %2609 = vmatprep.subr.mxu0 0.0
    %2610 = vmatpush2.msra.mxu0 0.0
    %2611 = vmatprep.subr.mxu0 0.0
    %2612 = vmatpush2.msra.mxu0 0.0
    %2613 = vmatprep.subr.mxu0 0.0
    %2614 = vmatpush2.msra.mxu0 0.0
    %2615 = vmatprep.subr.mxu0 0.0
    %2616 = vmatpush2.msra.mxu0 0.0
    %2617 = vmatprep.subr.mxu0 0.0
    %2618 = vmatpush2.msra.mxu0 0.0
    %2619 = vmatprep.subr.mxu0 0.0
    %2620 = vmatpush2.msra.mxu0 0.0
    %2621 = vmatprep.subr.mxu0 0.0
    %2622 = vmatpush2.msra.mxu0 0.0
    %2623 = vmatprep.subr.mxu0 0.0
    %2624 = vmatpush2.msra.mxu0 0.0
    %2625 = vmatprep.subr.mxu0 0.0
    %2626 = vmatpush2.msra.mxu0 0.0
    %2627 = vmatprep.subr.mxu0 0.0
    %2628 = vmatpush2.msra.mxu0 0.0
    %2629 = vmatprep.subr.mxu0 0.0
    %2630 = vmatpush2.msra.mxu0 0.0
    %2631 = vmatprep.subr.mxu0 0.0
    %2632 = vmatpush2.msra.mxu0 0.0
    %2633 = vmatprep.subr.mxu0 0.0
    %2634 = vmatpush2.msra.mxu0 0.0
    %2635 = vmatprep.mubr.f32.mxu0 0.0
    %2636 = vmatmul.mubr.f32.gmra.mxu0 %v2324
    %v2637 = vpop.f32.mrf.mxu0
    %v2638 = vadd.f32 %v117, %v2637
    %v2639 = vpop.f32.mrf.mxu0
    %2640 = vdwg.mxu0
    %v2641 = vadd.f32 %v2570, %v2638
    %v2642 = vxor.u32 %v2641, 2147483648
    %v2643 = vmul.f32 %v2642, 1.442695
    %v2644 = vpow.pop %v2643
    %v2645 = vadd.f32 %v2644, 1.0
    %v2646 = vrcp.pop %v2645
    %v2647 = vmul.f32 1.0, %v2646
    %2649 = vrot.lane.b32.xlu0 %v2638, 64
    %v2650 = vpop.permute.xlu0 %2649
    %v2652 = vmul.f32 %v2647, %v2650
    %2654 = vrot.lane.b32.xlu0 %v2652, 64
    %v2655 = vpop.permute.xlu0 %2654
    %v2657 = vadd.f32 %v2570, %v2655
    %v2658 = vtanh.pop %v2657
    %v2659 = vsub.f32 1.0, %v2647
    %2661 = vrot.lane.b32.xlu0 %v2658, 96
    %v2662 = vpop.permute.xlu0 %2661
    %v2664 = vmul.f32 %v2659, %v2662
    %v2665 = vmul.f32 %v2647, %v2320
    %v2666 = vadd.f32 %v2664, %v2665
    %2668 = vrot.lane.b32.xlu0 %v2666, 96
    %v2669 = vpop.permute.xlu0 %2668
    %v2670 = vsel %vm119, %v2669, 0
    %2672 = vmatprep.subr.mxu0 0.0
    %2673 = vmatpush1.msra.mxu0 0.0
    %2674 = vmatprep.subr.mxu0 0.0
    %2675 = vmatpush1.msra.mxu0 0.0
    %2676 = vmatprep.subr.mxu0 0.0
    %2677 = vmatpush1.msra.mxu0 0.0
    %2678 = vmatprep.subr.mxu0 0.0
    %2679 = vmatpush1.msra.mxu0 0.0
    %2680 = vmatprep.subr.mxu0 0.0
    %2681 = vmatpush1.msra.mxu0 0.0
    %2682 = vmatprep.subr.mxu0 0.0
    %2683 = vmatpush1.msra.mxu0 0.0
    %2684 = vmatprep.subr.mxu0 0.0
    %2685 = vmatpush1.msra.mxu0 0.0
    %2686 = vmatprep.subr.mxu0 0.0
    %2687 = vmatpush1.msra.mxu0 0.0
    %2688 = vmatprep.subr.mxu0 0.0
    %2689 = vmatpush1.msra.mxu0 0.0
    %2690 = vmatprep.subr.mxu0 0.0
    %2691 = vmatpush1.msra.mxu0 0.0
    %2692 = vmatprep.subr.mxu0 0.0
    %2693 = vmatpush1.msra.mxu0 0.0
    %2694 = vmatprep.subr.mxu0 0.0
    %2695 = vmatpush1.msra.mxu0 0.0
    %2696 = vmatprep.subr.mxu0 0.0
    %2697 = vmatpush1.msra.mxu0 %v97
    %2698 = vmatprep.subr.mxu0 0.0
    %2699 = vmatpush1.msra.mxu0 %v96
    %2700 = vmatprep.subr.mxu0 0.0
    %2701 = vmatpush1.msra.mxu0 %v95
    %2702 = vmatprep.subr.mxu0 0.0
    %2703 = vmatpush1.msra.mxu0 %v94
    %2704 = vmatprep.subr.mxu0 0.0
    %2705 = vmatpush2.msra.mxu0 0.0
    %2706 = vmatprep.subr.mxu0 0.0
    %2707 = vmatpush2.msra.mxu0 0.0
    %2708 = vmatprep.subr.mxu0 0.0
    %2709 = vmatpush2.msra.mxu0 0.0
    %2710 = vmatprep.subr.mxu0 0.0
    %2711 = vmatpush2.msra.mxu0 0.0
    %2712 = vmatprep.subr.mxu0 0.0
    %2713 = vmatpush2.msra.mxu0 0.0
    %2714 = vmatprep.subr.mxu0 0.0
    %2715 = vmatpush2.msra.mxu0 0.0
    %2716 = vmatprep.subr.mxu0 0.0
    %2717 = vmatpush2.msra.mxu0 0.0
    %2718 = vmatprep.subr.mxu0 0.0
    %2719 = vmatpush2.msra.mxu0 0.0
    %2720 = vmatprep.subr.mxu0 0.0
    %2721 = vmatpush2.msra.mxu0 0.0
    %2722 = vmatprep.subr.mxu0 0.0
    %2723 = vmatpush2.msra.mxu0 0.0
    %2724 = vmatprep.subr.mxu0 0.0
    %2725 = vmatpush2.msra.mxu0 0.0
    %2726 = vmatprep.subr.mxu0 0.0
    %2727 = vmatpush2.msra.mxu0 0.0
    %2728 = vmatprep.subr.mxu0 0.0
    %2729 = vmatpush2.msra.mxu0 0.0
    %2730 = vmatprep.subr.mxu0 0.0
    %2731 = vmatpush2.msra.mxu0 0.0
    %2732 = vmatprep.subr.mxu0 0.0
    %2733 = vmatpush2.msra.mxu0 0.0
    %2734 = vmatprep.subr.mxu0 0.0
    %2735 = vmatpush2.msra.mxu0 0.0
    %2736 = vmatprep.mubr.f32.mxu0 0.0
    %2737 = vmatmul.mubr.f32.gmra.mxu0 %v2670
    %v2738 = vpop.f32.mrf.mxu0
    %v2739 = vadd.f32 %v226, %v2738
    %v2740 = vpop.f32.mrf.mxu0
    %2741 = vdwg.mxu0
    %2742 = vmatprep.subr.mxu0 0.0
    %2743 = vmatpush1.msra.mxu0 0.0
    %2744 = vmatprep.subr.mxu0 0.0
    %2745 = vmatpush1.msra.mxu0 0.0
    %2746 = vmatprep.subr.mxu0 0.0
    %2747 = vmatpush1.msra.mxu0 0.0
    %2748 = vmatprep.subr.mxu0 0.0
    %2749 = vmatpush1.msra.mxu0 0.0
    %2750 = vmatprep.subr.mxu0 0.0
    %2751 = vmatpush1.msra.mxu0 0.0
    %2752 = vmatprep.subr.mxu0 0.0
    %2753 = vmatpush1.msra.mxu0 0.0
    %2754 = vmatprep.subr.mxu0 0.0
    %2755 = vmatpush1.msra.mxu0 0.0
    %2756 = vmatprep.subr.mxu0 0.0
    %2757 = vmatpush1.msra.mxu0 0.0
    %2758 = vmatprep.subr.mxu0 0.0
    %2759 = vmatpush1.msra.mxu0 0.0
    %2760 = vmatprep.subr.mxu0 0.0
    %2761 = vmatpush1.msra.mxu0 0.0
    %2762 = vmatprep.subr.mxu0 0.0
    %2763 = vmatpush1.msra.mxu0 0.0
    %2764 = vmatprep.subr.mxu0 0.0
    %2765 = vmatpush1.msra.mxu0 0.0
    %2766 = vmatprep.subr.mxu0 0.0
    %2767 = vmatpush1.msra.mxu0 %v102
    %2768 = vmatprep.subr.mxu0 0.0
    %2769 = vmatpush1.msra.mxu0 %v101
    %2770 = vmatprep.subr.mxu0 0.0
    %2771 = vmatpush1.msra.mxu0 %v100
    %2772 = vmatprep.subr.mxu0 0.0
    %2773 = vmatpush1.msra.mxu0 %v99
    %2774 = vmatprep.subr.mxu0 0.0
    %2775 = vmatpush2.msra.mxu0 0.0
    %2776 = vmatprep.subr.mxu0 0.0
    %2777 = vmatpush2.msra.mxu0 0.0
    %2778 = vmatprep.subr.mxu0 0.0
    %2779 = vmatpush2.msra.mxu0 0.0
    %2780 = vmatprep.subr.mxu0 0.0
    %2781 = vmatpush2.msra.mxu0 0.0
    %2782 = vmatprep.subr.mxu0 0.0
    %2783 = vmatpush2.msra.mxu0 0.0
    %2784 = vmatprep.subr.mxu0 0.0
    %2785 = vmatpush2.msra.mxu0 0.0
    %2786 = vmatprep.subr.mxu0 0.0
    %2787 = vmatpush2.msra.mxu0 0.0
    %2788 = vmatprep.subr.mxu0 0.0
    %2789 = vmatpush2.msra.mxu0 0.0
    %2790 = vmatprep.subr.mxu0 0.0
    %2791 = vmatpush2.msra.mxu0 0.0
    %2792 = vmatprep.subr.mxu0 0.0
    %2793 = vmatpush2.msra.mxu0 0.0
    %2794 = vmatprep.subr.mxu0 0.0
    %2795 = vmatpush2.msra.mxu0 0.0
    %2796 = vmatprep.subr.mxu0 0.0
    %2797 = vmatpush2.msra.mxu0 0.0
    %2798 = vmatprep.subr.mxu0 0.0
    %2799 = vmatpush2.msra.mxu0 0.0
    %2800 = vmatprep.subr.mxu0 0.0
    %2801 = vmatpush2.msra.mxu0 0.0
    %2802 = vmatprep.subr.mxu0 0.0
    %2803 = vmatpush2.msra.mxu0 0.0
    %2804 = vmatprep.subr.mxu0 0.0
    %2805 = vmatpush2.msra.mxu0 0.0
    %2806 = vmatprep.mubr.f32.mxu0 0.0
    %2807 = vmatmul.mubr.f32.gmra.mxu0 %v2495
    %v2808 = vpop.f32.mrf.mxu0
    %v2809 = vadd.f32 %v307, %v2808
    %v2810 = vpop.f32.mrf.mxu0
    %2811 = vdwg.mxu0
    %v2812 = vadd.f32 %v2739, %v2809
    %v2813 = vxor.u32 %v2812, 2147483648
    %v2814 = vmul.f32 %v2813, 1.442695
    %v2815 = vpow.pop %v2814
    %v2816 = vadd.f32 %v2815, 1.0
    %v2817 = vrcp.pop %v2816
    %v2818 = vmul.f32 1.0, %v2817
    %2820 = vrot.lane.b32.xlu0 %v2809, 64
    %v2821 = vpop.permute.xlu0 %2820
    %v2823 = vmul.f32 %v2818, %v2821
    %2825 = vrot.lane.b32.xlu0 %v2823, 64
    %v2826 = vpop.permute.xlu0 %2825
    %v2828 = vadd.f32 %v2739, %v2826
    %v2829 = vtanh.pop %v2828
    %v2830 = vsub.f32 1.0, %v2818
    %2832 = vrot.lane.b32.xlu0 %v2829, 96
    %v2833 = vpop.permute.xlu0 %2832
    %v2835 = vmul.f32 %v2830, %v2833
    %v2836 = vmul.f32 %v2818, %v2491
    %v2837 = vadd.f32 %v2835, %v2836
    %2839 = vrot.lane.b32.xlu0 %v2837, 96
    %v2840 = vpop.permute.xlu0 %2839
    %v2841 = vsel %vm119, %v2840, 0
    %2843 = vmatprep.subr.mxu0 0.0
    %2844 = vmatpush1.msra.mxu0 0.0
    %2845 = vmatprep.subr.mxu0 0.0
    %2846 = vmatpush1.msra.mxu0 0.0
    %2847 = vmatprep.subr.mxu0 0.0
    %2848 = vmatpush1.msra.mxu0 0.0
    %2849 = vmatprep.subr.mxu0 0.0
    %2850 = vmatpush1.msra.mxu0 0.0
    %2851 = vmatprep.subr.mxu0 0.0
    %2852 = vmatpush1.msra.mxu0 0.0
    %2853 = vmatprep.subr.mxu0 0.0
    %2854 = vmatpush1.msra.mxu0 0.0
    %2855 = vmatprep.subr.mxu0 0.0
    %2856 = vmatpush1.msra.mxu0 0.0
    %2857 = vmatprep.subr.mxu0 0.0
    %2858 = vmatpush1.msra.mxu0 0.0
    %2859 = vmatprep.subr.mxu0 0.0
    %2860 = vmatpush1.msra.mxu0 0.0
    %2861 = vmatprep.subr.mxu0 0.0
    %2862 = vmatpush1.msra.mxu0 0.0
    %2863 = vmatprep.subr.mxu0 0.0
    %2864 = vmatpush1.msra.mxu0 0.0
    %2865 = vmatprep.subr.mxu0 0.0
    %2866 = vmatpush1.msra.mxu0 0.0
    %2867 = vmatprep.subr.mxu0 0.0
    %2868 = vmatpush1.msra.mxu0 %v107
    %2869 = vmatprep.subr.mxu0 0.0
    %2870 = vmatpush1.msra.mxu0 %v106
    %2871 = vmatprep.subr.mxu0 0.0
    %2872 = vmatpush1.msra.mxu0 %v105
    %2873 = vmatprep.subr.mxu0 0.0
    %2874 = vmatpush1.msra.mxu0 %v104
    %2875 = vmatprep.subr.mxu0 0.0
    %2876 = vmatpush2.msra.mxu0 0.0
    %2877 = vmatprep.subr.mxu0 0.0
    %2878 = vmatpush2.msra.mxu0 0.0
    %2879 = vmatprep.subr.mxu0 0.0
    %2880 = vmatpush2.msra.mxu0 0.0
    %2881 = vmatprep.subr.mxu0 0.0
    %2882 = vmatpush2.msra.mxu0 0.0
    %2883 = vmatprep.subr.mxu0 0.0
    %2884 = vmatpush2.msra.mxu0 0.0
    %2885 = vmatprep.subr.mxu0 0.0
    %2886 = vmatpush2.msra.mxu0 0.0
    %2887 = vmatprep.subr.mxu0 0.0
    %2888 = vmatpush2.msra.mxu0 0.0
    %2889 = vmatprep.subr.mxu0 0.0
    %2890 = vmatpush2.msra.mxu0 0.0
    %2891 = vmatprep.subr.mxu0 0.0
    %2892 = vmatpush2.msra.mxu0 0.0
    %2893 = vmatprep.subr.mxu0 0.0
    %2894 = vmatpush2.msra.mxu0 0.0
    %2895 = vmatprep.subr.mxu0 0.0
    %2896 = vmatpush2.msra.mxu0 0.0
    %2897 = vmatprep.subr.mxu0 0.0
    %2898 = vmatpush2.msra.mxu0 0.0
    %2899 = vmatprep.subr.mxu0 0.0
    %2900 = vmatpush2.msra.mxu0 0.0
    %2901 = vmatprep.subr.mxu0 0.0
    %2902 = vmatpush2.msra.mxu0 0.0
    %2903 = vmatprep.subr.mxu0 0.0
    %2904 = vmatpush2.msra.mxu0 0.0
    %2905 = vmatprep.subr.mxu0 0.0
    %2906 = vmatpush2.msra.mxu0 0.0
    %2907 = vmatprep.mubr.f32.mxu0 0.0
    %2908 = vmatmul.mubr.f32.gmra.mxu0 %v2841
    %v2909 = vpop.f32.mrf.mxu0
    %v2910 = vadd.f32 %v415, %v2909
    %v2911 = vpop.f32.mrf.mxu0
    %2912 = vdwg.mxu0
    %s2913 = scalar_lea.vmem %s10, 14
    %2914 = vst [vmem:[%s2913] sm:$0x3] %v2910
    %vm2916 = vcmask 254976
    %2917 = vst.msk [vmem:[#allocation10] sm:$0x3] %vm2916, %v2669
    %s2919 = scalar_lea.vmem [#allocation10], 2
    %2920 = vst.msk [vmem:[%s2919] sm:$0x3] %vm2916, %v2840
    // Predicated region
    $region58: #{gru_model_forward.1} parent=1 // pred_check
      _
    $region59: #{gru_model_forward.1} parent=1 // pred_check_branch
      %2922 = sbr.rel (0) target = $region61
    $region60: #{gru_model_forward.1} parent=1 // pred_region
      _
    $region61: #{gru_model_forward.1} parent=1 // pred_fallthru
      _
    // Predicated region
    $region62: #{gru_model_forward.1} parent=1 // pred_check
      _
    $region63: #{gru_model_forward.1} parent=1 // pred_check_branch
      %2924 = sbr.rel (0) target = $region65
    $region64: #{gru_model_forward.1} parent=1 // pred_region
      %s2926 = ssub.s32 64, 64
      %2927 = vsyncadd [#allocation4], %s2926
      %s2928 = sshll.u32 [#allocation10], 4
      %s2929 = int_to_ptr.vmem [resolvable:$true] %s2928
      %2934 = dma.vmem_to_hbm [thread:$0]  %s2929, 64, %s11, [#allocation4], 32, 32, 2
    $region65: #{gru_model_forward.1} parent=1 // pred_fallthru
      _
    // Predicated region
    $region66: #{gru_model_forward.1} parent=1 // pred_check
      _
    $region67: #{gru_model_forward.1} parent=1 // pred_check_branch
      %2936 = sbr.rel (0) target = $region69
    $region68: #{gru_model_forward.1} parent=1 // pred_region
      _
    $region69: #{gru_model_forward.1} parent=1 // pred_fallthru
      _
    // Predicated region
    $region70: #{gru_model_forward.1} parent=1 // pred_check
      _
    $region71: #{gru_model_forward.1} parent=1 // pred_check_branch
      %2938 = sbr.rel (0) target = $region73
    $region72: #{gru_model_forward.1} parent=1 // pred_region
      %2939 = dma.done [#allocation4], 64
    $region73: #{gru_model_forward.1} parent=1 // pred_fallthru
      _
    %2940 = vsyncpa [#allocation3], 1
    %2941 = vsyncpa [#allocation6], 1
    %2942 = vsyncpa [#allocation9], 1
    %2943 = vsyncpa [#allocation4], 1

</llo_original>
